<compile_context>
chip_gen: v5e
topology: v5e:2x2
jax: 0.10.0
libtpu: 0.0.40
codegen_flags: <defaults>
</compile_context>

<pallas_src>
import functools

import jax
import jax.numpy as jnp
from jax import lax
from jax.experimental import pallas as pl
from jax.experimental.pallas import tpu as pltpu

BN_EPS = 1e-5
VMEM_LIMIT_BYTES = 32 * 1024 * 1024   # safe scoped-VMEM budget on v5e/v6e/v7x


def _softplus(x):
    # numerically-stable softplus, same math as torch.nn.functional.softplus
    return jnp.maximum(x, 0.0) + jnp.log1p(jnp.exp(-jnp.abs(x)))


def _bn_train(h, eps=BN_EPS):
    # PyTorch BatchNorm1d training-mode forward (default affine: gamma=1, beta=0)
    mean = jnp.mean(h, axis=0, keepdims=True)
    var = jnp.mean((h - mean) ** 2, axis=0, keepdims=True)   # biased variance
    return (h - mean) * lax.rsqrt(var + eps)


# ---------------------------------------------------------------------------
# Kernel A: encoder (streamed over the input-vocab axis) + reparam + RBF + mu-net
# ---------------------------------------------------------------------------
def encoder_rbf_kernel(x_ref, w1_ref, b1_ref, w2_ref, b2_ref,
                       wm_ref, bm_ref, wl_ref, bl_ref,
                       eps_ref, cen_ref,
                       wmu1_ref, bmu1_ref, wmu2_ref, bmu2_ref, wmu_ref, bmu_ref,
                       z_ref, zx_ref, zc_ref, phi_ref, muz_ref,
                       acc_ref, *, isbn_x, isbn_phi):
    k = pl.program_id(0)

    @pl.when(k == 0)
    def _():
        acc_ref[...] = jnp.zeros_like(acc_ref)

    # streamed first matmul: x_tile (N, vt) @ w1_tile (vt, en1), bf16 operands,
    # f32 accumulation in VMEM scratch.
    x_blk = x_ref[...].astype(w1_ref.dtype)
    acc_ref[...] += jnp.dot(x_blk, w1_ref[...], preferred_element_type=jnp.float32)

    @pl.when(k == pl.num_programs(0) - 1)
    def _():
        en1 = _softplus(acc_ref[...] + b1_ref[...])
        en2 = _softplus(
            jnp.dot(en1, w2_ref[...], preferred_element_type=jnp.float32) + b2_ref[...])
        # TODO(synk): nn.Dropout(en2) treated as identity (deterministic forward).

        pmean = _bn_train(
            jnp.dot(en2, wm_ref[...], preferred_element_type=jnp.float32) + bm_ref[...])
        plogvar = _bn_train(
            jnp.dot(en2, wl_ref[...], preferred_element_type=jnp.float32) + bl_ref[...])
        pvar = jnp.exp(plogvar)

        # fused take_sample: z = mean + sqrt(var) * eps  (eps supplied deterministically)
        z = pmean + jnp.sqrt(pvar) * eps_ref[...]
        z_ref[...] = z

        zx = _bn_train(z) if isbn_x else z
        centres = cen_ref[...]
        zc = _bn_train(centres) if isbn_phi else centres
        zx_ref[...] = zx
        zc_ref[...] = zc

        # squared euclidean distance via the Gram trick (no (N, T, C) broadcast temp)
        ct = (((1,), (1,)), ((), ()))
        xc = lax.dot_general(zx, zc, ct, preferred_element_type=jnp.float32)      # (N, T)
        c2 = lax.dot_general(jnp.ones_like(zx), zc * zc, ct,
                             preferred_element_type=jnp.float32)                  # (N, T)
        x2 = jnp.sum(zx * zx, axis=-1, keepdims=True)                             # (N, 1)
        d = jnp.maximum(x2 + c2 - 2.0 * xc, 0.0)

        # gaussian basis + logsumexp normalisation == softmax(-0.5 * d)
        dist = -0.5 * d
        m = jnp.max(dist, axis=-1, keepdims=True)
        e = jnp.exp(dist - m)
        phi_ref[...] = e / jnp.sum(e, axis=-1, keepdims=True)

        # mu network on the (optionally batch-normed) centres: (T, C) -> (T, emb)
        mu1 = _softplus(
            jnp.dot(zc, wmu1_ref[...], preferred_element_type=jnp.float32) + bmu1_ref[...])
        # TODO(synk): dropout on mu2 treated as identity (deterministic forward).
        mu2 = _softplus(
            jnp.dot(mu1, wmu2_ref[...], preferred_element_type=jnp.float32) + bmu2_ref[...])
        mu_z = jnp.dot(mu2, wmu_ref[...], preferred_element_type=jnp.float32) + bmu_ref[...]
        muz_ref[...] = mu_z.astype(muz_ref.dtype)


# ---------------------------------------------------------------------------
# Kernel B: vocab-tiled beta softmax (+ optional per-topic BN over V) and recon.
#   pass 0: per-topic sum / sumsq / max of logits over the vocab
#   pass 1: softmax denominator of the BN-normalised logits
#   pass 2: emit recon tile = zx_phi @ beta_tile
# ---------------------------------------------------------------------------
def beta_recon_kernel(phi_ref, muz_ref, embt_ref, recon_ref,
                      s_sum, s_sumsq, s_max, s_denom,
                      *, isbn_muz, v_total):
    p = pl.program_id(0)
    v = pl.program_id(1)

    # (T, vt) logits tile — bf16 operands, f32 accumulation.
    logits = jnp.dot(muz_ref[...], embt_ref[...], preferred_element_type=jnp.float32)

    # -------- pass 0: accumulate per-topic statistics ------------------------
    @pl.when((p == 0) & (v == 0))
    def _():
        s_sum[...] = jnp.zeros_like(s_sum)
        s_sumsq[...] = jnp.zeros_like(s_sumsq)
        s_max[...] = jnp.full_like(s_max, -jnp.inf)

    @pl.when(p == 0)
    def _():
        s_sum[...] += jnp.sum(logits, axis=-1, keepdims=True)
        s_sumsq[...] += jnp.sum(logits * logits, axis=-1, keepdims=True)
        s_max[...] = jnp.maximum(s_max[...], jnp.max(logits, axis=-1, keepdims=True))

    def _exp_norm_logits():
        # decoder_bn(logits.T).T : per-topic normalisation over the vocab axis
        if isbn_muz:
            mean = s_sum[...] * (1.0 / v_total)
            var = s_sumsq[...] * (1.0 / v_total) - mean * mean
            istd = lax.rsqrt(var + BN_EPS)
        else:
            mean = jnp.zeros_like(s_sum[...])
            istd = jnp.ones_like(s_sum[...])
        nmax = (s_max[...] - mean) * istd
        return jnp.exp((logits - mean) * istd - nmax)            # (T, vt)

    # -------- pass 1: softmax denominator -------------------------------------
    @pl.when((p == 1) & (v == 0))
    def _():
        s_denom[...] = jnp.zeros_like(s_denom)

    @pl.when(p == 1)
    def _():
        s_denom[...] += jnp.sum(_exp_norm_logits(), axis=-1, keepdims=True)

    # -------- pass 2: beta tile + recon tile -----------------------------------
    @pl.when(p == 2)
    def _():
        beta = _exp_norm_logits() * (1.0 / s_denom[...])         # (T, vt), f32
        recon_ref[...] = jnp.dot(phi_ref[...], beta, preferred_element_type=jnp.float32)


# ------------------------------ wrappers -------------------------------------
def _pick_tile(dim, target=512):
    """Largest lane-aligned (multiple of 128) tile <= target that divides dim."""
    if dim <= target:
        return dim
    t = (min(target, dim) // 128) * 128
    while t >= 128:
        if dim % t == 0:
            return t
        t -= 128
    return dim


def _full_spec(shape, grid_ndim):
    zeros = (0,) * len(shape)
    if grid_ndim == 1:
        return pl.BlockSpec(shape, lambda i, _z=zeros: _z)
    return pl.BlockSpec(shape, lambda i, j, _z=zeros: _z)


def encode_rbf(params, x, eps, *, isbn_x=True, isbn_phi=True, v_in_tile=512):
    N, V = x.shape
    en1 = params["w1_t"].shape[1]
    C = params["wm_t"].shape[1]
    T = params["centres"].shape[0]
    E = params["wmu_t"].shape[1]
    vt = _pick_tile(V, v_in_tile)
    nk = V // vt

    ins = (x, params["w1_t"], params["b1"], params["w2_t"], params["b2"],
           params["wm_t"], params["bm"], params["wl_t"], params["bl"],
           eps, params["centres"],
           params["wmu1_t"], params["bmu1"], params["wmu2_t"], params["bmu2"],
           params["wmu_t"], params["bmu"])

    in_specs = [pl.BlockSpec((N, vt), lambda k: (0, k)),        # x streamed over vocab
                pl.BlockSpec((vt, en1), lambda k: (k, 0))]      # w1_t streamed over vocab
    in_specs += [_full_spec(a.shape, 1) for a in ins[2:]]

    out_shape = (jax.ShapeDtypeStruct((N, C), jnp.float32),             # z
                 jax.ShapeDtypeStruct((N, C), jnp.float32),             # zx
                 jax.ShapeDtypeStruct((T, C), jnp.float32),             # zc
                 jax.ShapeDtypeStruct((N, T), jnp.float32),             # zx_phi
                 jax.ShapeDtypeStruct((T, E), params["emb_t"].dtype))   # mu_z (MXU dtype)
    out_specs = tuple(_full_spec(s.shape, 1) for s in out_shape)

    kernel = functools.partial(encoder_rbf_kernel, isbn_x=isbn_x, isbn_phi=isbn_phi)
    return pl.pallas_call(
        kernel,
        out_shape=out_shape,
        grid=(nk,),
        in_specs=in_specs,
        out_specs=out_specs,
        scratch_shapes=[pltpu.VMEM((N, en1), jnp.float32)],
        compiler_params=pltpu.CompilerParams(
            dimension_semantics=("arbitrary",),           # vocab axis is a reduction
            vmem_limit_bytes=VMEM_LIMIT_BYTES),
    )(*ins)


def decode_beta_recon(params, zx_phi, mu_z, *, isbn_muz=True, v_tile=512):
    N, T = zx_phi.shape
    E, V = params["emb_t"].shape
    vt = _pick_tile(V, v_tile)
    nv = V // vt

    in_specs = [
        pl.BlockSpec((N, T), lambda p, v: (0, 0)),          # zx_phi (resident)
        pl.BlockSpec((T, E), lambda p, v: (0, 0)),          # mu_z   (resident)
        pl.BlockSpec((E, vt), lambda p, v: (0, v)),         # emb.T streamed in V-tiles
    ]
    # Only pass 2 walks the output blocks; passes 0/1 stay parked on block 0 so no
    # garbage tiles are written back.
    out_specs = pl.BlockSpec((N, vt), lambda p, v: (0, jnp.where(p == 2, v, 0)))

    kernel = functools.partial(beta_recon_kernel, isbn_muz=isbn_muz, v_total=float(V))
    return pl.pallas_call(
        kernel,
        out_shape=jax.ShapeDtypeStruct((N, V), jnp.float32),
        grid=(3, nv),
        in_specs=in_specs,
        out_specs=out_specs,
        scratch_shapes=[pltpu.VMEM((T, 1), jnp.float32) for _ in range(4)],
        compiler_params=pltpu.CompilerParams(
            dimension_semantics=("arbitrary", "arbitrary"),
            vmem_limit_bytes=VMEM_LIMIT_BYTES),
    )(zx_phi, mu_z.astype(params["emb_t"].dtype), params["emb_t"])


def model_forward(params, input_, normalized_input_, eps,
                  *, isbn_x=True, isbn_phi=True, isbn_muz=True):
    # normalized_input_ is accepted for API parity but unused (as in the torch module).
    del normalized_input_
    z, zx, zc, zx_phi, mu_z = encode_rbf(params, input_, eps,
                                         isbn_x=isbn_x, isbn_phi=isbn_phi)
    # Note: passes 0/1 of the decoder kernel depend only on params; if params are
    # frozen (pure inference) beta could be cached separately to shrink the hot path.
    recon_v = decode_beta_recon(params, zx_phi, mu_z, isbn_muz=isbn_muz)
    return z, recon_v, zx, zc, zx_phi


# ------------------------------ parameters ------------------------------------
def init_params(key, num_input, en1_units, en2_units, num_coordinate,
                num_topic, emb_size):
    ks = jax.random.split(key, 10)

    def linear(k, out_f, in_f):
        kw, kb = jax.random.split(k)
        s = 1.0 / jnp.sqrt(float(in_f))
        W = jax.random.uniform(kw, (out_f, in_f), jnp.float32, -s, s)
        b = jax.random.uniform(kb, (out_f,), jnp.float32, -s, s)
        return W, b

    p = {}
    p["w1"], p["b1"] = linear(ks[0], en1_units, num_input)       # en1_fc
    p["w2"], p["b2"] = linear(ks[1], en2_units, en1_units)       # en2_fc
    p["wm"], p["bm"] = linear(ks[2], num_coordinate, en2_units)  # mean_fc
    p["wl"], p["bl"] = linear(ks[3], num_coordinate, en2_units)  # logvar_fc
    p["wmu1"], p["bmu1"] = linear(ks[4], 100, 2)                 # mu1_fc
    p["wmu2"], p["bmu2"] = linear(ks[5], 100, 100)               # mu2_fc
    p["wmu"], p["bmu"] = linear(ks[6], 300, 100)                 # mu_fc
    p["centres"] = 0.1 * jax.random.normal(ks[7], (num_topic, num_coordinate),
                                           jnp.float32)          # nn.init.normal_(0, 0.1)
    p["emb"] = jax.random.normal(ks[8], (num_input, emb_size), jnp.float32)
    return p


def prepare_params(raw, compute_dtype=jnp.bfloat16):
    """One-time kernel layout prep: transpose Linear weights to (in, out), reshape
    biases to (1, out), and cast the V-scaling MXU operands (en1_fc weight and the
    word embedding) to bf16.  Done once, outside the per-step forward."""
    f32 = jnp.float32
    return {
        "w1_t": raw["w1"].T.astype(compute_dtype),
        "b1": raw["b1"].reshape(1, -1).astype(f32),
        "w2_t": raw["w2"].T.astype(f32),
        "b2": raw["b2"].reshape(1, -1).astype(f32),
        "wm_t": raw["wm"].T.astype(f32),
        "bm": raw["bm"].reshape(1, -1).astype(f32),
        "wl_t": raw["wl"].T.astype(f32),
        "bl": raw["bl"].reshape(1, -1).astype(f32),
        "wmu1_t": raw["wmu1"].T.astype(f32),
        "bmu1": raw["bmu1"].reshape(1, -1).astype(f32),
        "wmu2_t": raw["wmu2"].T.astype(f32),
        "bmu2": raw["bmu2"].reshape(1, -1).astype(f32),
        "wmu_t": raw["wmu"].T.astype(f32),
        "bmu": raw["bmu"].reshape(1, -1).astype(f32),
        "centres": raw["centres"].astype(f32),
        "emb_t": raw["emb"].T.astype(compute_dtype),
    }


# ------------------------------ pure-JAX reference -----------------------------
def reference_forward(prep, x, eps, *, isbn_x, isbn_phi, isbn_muz):
    f32 = jnp.float32
    en1 = _softplus(jnp.dot(x.astype(prep["w1_t"].dtype), prep["w1_t"],
                            preferred_element_type=f32) + prep["b1"])
    en2 = _softplus(jnp.dot(en1, prep["w2_t"]) + prep["b2"])
    pmean = _bn_train(jnp.dot(en2, prep["wm_t"]) + prep["bm"])
    plogvar = _bn_train(jnp.dot(en2, prep["wl_t"]) + prep["bl"])
    z = pmean + jnp.sqrt(jnp.exp(plogvar)) * eps
    zx = _bn_train(z) if isbn_x else z
    zc = _bn_train(prep["centres"]) if isbn_phi else prep["centres"]
    d = jnp.sum((zx[:, None, :] - zc[None, :, :]) ** 2, axis=-1)
    zx_phi = jax.nn.softmax(-0.5 * d, axis=-1)
    mu1 = _softplus(jnp.dot(zc, prep["wmu1_t"]) + prep["bmu1"])
    mu2 = _softplus(jnp.dot(mu1, prep["wmu2_t"]) + prep["bmu2"])
    mu_z = jnp.dot(mu2, prep["wmu_t"]) + prep["bmu"]
    logits = jnp.dot(mu_z.astype(prep["emb_t"].dtype), prep["emb_t"],
                     preferred_element_type=f32)
    if isbn_muz:
        lm = jnp.mean(logits, axis=1, keepdims=True)
        lv = jnp.mean((logits - lm) ** 2, axis=1, keepdims=True)
        logits = (logits - lm) * lax.rsqrt(lv + BN_EPS)
    beta = jax.nn.softmax(logits, axis=-1)
    recon = jnp.dot(zx_phi, beta)
    return z, recon, zx, zc, zx_phi


if __name__ == "__main__":
    # mu1_fc: Linear(2, 100) -> num_coordinate = 2 ; mu_fc: Linear(100, 300) -> emb_size = 300
    N, NUM_INPUT = 8, 1536          # vocab chosen as a multiple of 512 -> 3 V-tiles
    EN1, EN2 = 64, 64
    NUM_COORD, NUM_TOPIC, EMB_SIZE = 2, 8, 300

    key = jax.random.PRNGKey(0)
    kp, kx, ke = jax.random.split(key, 3)

    raw_params = init_params(kp, NUM_INPUT, EN1, EN2, NUM_COORD, NUM_TOPIC, EMB_SIZE)
    params = prepare_params(raw_params)   # one-time transposes / casts (not per forward)

    x = jax.random.uniform(kx, (N, NUM_INPUT), jnp.float32)      # bag-of-words counts
    normalized_x = x / jnp.sum(x, axis=-1, keepdims=True)        # unused by forward
    eps = jax.random.normal(ke, (N, NUM_COORD), jnp.float32)     # reparam noise

    fwd = jax.jit(functools.partial(model_forward,
                                    isbn_x=True, isbn_phi=True, isbn_muz=True))
    z, recon_v, zx, zc, zx_phi = fwd(params, x, normalized_x, eps)
    jax.block_until_ready((z, recon_v, zx, zc, zx_phi))

    # shapes
    assert z.shape == (N, NUM_COORD)
    assert recon_v.shape == (N, NUM_INPUT)
    assert zx.shape == (N, NUM_COORD)
    assert zc.shape == (NUM_TOPIC, NUM_COORD)
    assert zx_phi.shape == (N, NUM_TOPIC)

    # both softmax outputs must sum to 1 along the last axis
    assert bool(jnp.allclose(jnp.sum(zx_phi, axis=-1), 1.0, atol=1e-4))
    assert bool(jnp.allclose(jnp.sum(recon_v, axis=-1), 1.0, atol=1e-4))

    # cross-check against a pure-JAX reference using the same bf16 operand casts
    with jax.default_matmul_precision("float32"):
        rz, rrecon, rzx, rzc, rphi = reference_forward(
            params, x, eps, isbn_x=True, isbn_phi=True, isbn_muz=True)
    assert bool(jnp.allclose(z, rz, atol=5e-2, rtol=5e-2))
    assert bool(jnp.allclose(zx, rzx, atol=5e-2, rtol=5e-2))
    assert bool(jnp.allclose(zc, rzc, atol=5e-2, rtol=5e-2))
    assert bool(jnp.allclose(zx_phi, rphi, atol=5e-2))
    assert bool(jnp.allclose(recon_v, rrecon, rtol=5e-2, atol=1e-5))

    print("KERNEL_OK")
</pallas_src>

<mosaic_0001>
module attributes {stable_mosaic.version = 11 : i64} {
  func.func @beta_recon_kernel(%arg0: i32, %arg1: i32, %arg2: memref<8x8xf32, #tpu.memory_space<vmem>>, %arg3: memref<8x300xbf16, #tpu.memory_space<vmem>>, %arg4: memref<300x512xbf16, #tpu.memory_space<vmem>>, %arg5: memref<8x512xf32, #tpu.memory_space<vmem>>, %arg6: memref<8x1xf32, #tpu.memory_space<vmem>>, %arg7: memref<8x1xf32, #tpu.memory_space<vmem>>, %arg8: memref<8x1xf32, #tpu.memory_space<vmem>>, %arg9: memref<8x1xf32, #tpu.memory_space<vmem>>) attributes {dimension_semantics = [#tpu.dimension_semantics<arbitrary>, #tpu.dimension_semantics<arbitrary>], iteration_bounds = array<i64: 3, 3>, scalar_prefetch = 0 : i64, scratch_operands = 4 : i64, tpu.core_type = #tpu.core_type<tc>, window_params = [{pipeline_mode = #tpu.pipeline_mode<synchronous>, transform_indices = @transform_0, window_bounds = array<i64: 8, 8>}, {pipeline_mode = #tpu.pipeline_mode<synchronous>, transform_indices = @transform_1, window_bounds = array<i64: 8, 300>}, {transform_indices = @transform_2, window_bounds = array<i64: 300, 512>}, {transform_indices = @transform_3, window_bounds = array<i64: 8, 512>}]} {
    %c0 = arith.constant 0 : index
    %c0_0 = arith.constant 0 : index
    %0 = vector.load %arg3[%c0, %c0_0] : memref<8x300xbf16, #tpu.memory_space<vmem>>, vector<8x300xbf16>
    %c0_1 = arith.constant 0 : index
    %c0_2 = arith.constant 0 : index
    %1 = vector.load %arg4[%c0_1, %c0_2] : memref<300x512xbf16, #tpu.memory_space<vmem>>, vector<300x512xbf16>
    %cst = arith.constant dense<0.000000e+00> : vector<8x512xf32>
    %2 = tpu.matmul %0, %1, %cst {dimension_numbers = #tpu.dot_dimension_numbers<[1], [0], [0], [1], [0, 0, 1, 1], [], []>} : vector<8x300xbf16>, vector<300x512xbf16>, vector<8x512xf32> -> vector<8x512xf32>
    %c0_i32 = arith.constant 0 : i32
    %3 = arith.cmpi eq, %arg0, %c0_i32 : i32
    %c0_i32_3 = arith.constant 0 : i32
    %4 = arith.cmpi eq, %arg1, %c0_i32_3 : i32
    %5 = arith.andi %3, %4 : i1
    %6 = arith.extui %5 : i1 to i32
    %c0_i32_4 = arith.constant 0 : i32
    %7 = arith.cmpi ne, %6, %c0_i32_4 : i32
    scf.if %7 {
      %cst_12 = arith.constant 0.000000e+00 : f32
      %22 = vector.broadcast %cst_12 : f32 to vector<8x1xf32>
      %c0_13 = arith.constant 0 : index
      %c0_14 = arith.constant 0 : index
      %23 = vector.load %arg6[%c0_13, %c0_14] : memref<8x1xf32, #tpu.memory_space<vmem>>, vector<8x1xf32>
      tpu.vector_store %arg6[%c0_13, %c0_14], %22 {strides = array<i32>} : memref<8x1xf32, #tpu.memory_space<vmem>>, vector<8x1xf32>,
      %cst_15 = arith.constant 0.000000e+00 : f32
      %24 = vector.broadcast %cst_15 : f32 to vector<8x1xf32>
      %c0_16 = arith.constant 0 : index
      %c0_17 = arith.constant 0 : index
      %25 = vector.load %arg7[%c0_16, %c0_17] : memref<8x1xf32, #tpu.memory_space<vmem>>, vector<8x1xf32>
      tpu.vector_store %arg7[%c0_16, %c0_17], %24 {strides = array<i32>} : memref<8x1xf32, #tpu.memory_space<vmem>>, vector<8x1xf32>,
      %cst_18 = arith.constant 0xFF800000 : f32
      %26 = vector.broadcast %cst_18 : f32 to vector<8x1xf32>
      %c0_19 = arith.constant 0 : index
      %c0_20 = arith.constant 0 : index
      %27 = vector.load %arg8[%c0_19, %c0_20] : memref<8x1xf32, #tpu.memory_space<vmem>>, vector<8x1xf32>
      tpu.vector_store %arg8[%c0_19, %c0_20], %26 {strides = array<i32>} : memref<8x1xf32, #tpu.memory_space<vmem>>, vector<8x1xf32>,
    } else {
    }
    %c0_i32_5 = arith.constant 0 : i32
    %8 = arith.cmpi eq, %arg0, %c0_i32_5 : i32
    %9 = arith.extui %8 : i1 to i32
    %c0_i32_6 = arith.constant 0 : i32
    %10 = arith.cmpi ne, %9, %c0_i32_6 : i32
    scf.if %10 {
      %c0_12 = arith.constant 0 : index
      %c0_13 = arith.constant 0 : index
      %22 = vector.load %arg6[%c0_12, %c0_13] : memref<8x1xf32, #tpu.memory_space<vmem>>, vector<8x1xf32>
      %cst_14 = arith.constant dense<0.000000e+00> : vector<8xf32>
      %23 = vector.multi_reduction <add>, %2, %cst_14 [1] : vector<8x512xf32> to vector<8xf32>
      %24 = vector.shape_cast %23 : vector<8xf32> to vector<8x1xf32>
      %25 = arith.addf %22, %24 : vector<8x1xf32>
      %c0_15 = arith.constant 0 : index
      %c0_16 = arith.constant 0 : index
      %26 = vector.load %arg6[%c0_15, %c0_16] : memref<8x1xf32, #tpu.memory_space<vmem>>, vector<8x1xf32>
      tpu.vector_store %arg6[%c0_15, %c0_16], %25 {strides = array<i32>} : memref<8x1xf32, #tpu.memory_space<vmem>>, vector<8x1xf32>,
      %c0_17 = arith.constant 0 : index
      %c0_18 = arith.constant 0 : index
      %27 = vector.load %arg7[%c0_17, %c0_18] : memref<8x1xf32, #tpu.memory_space<vmem>>, vector<8x1xf32>
      %28 = arith.mulf %2, %2 : vector<8x512xf32>
      %cst_19 = arith.constant dense<0.000000e+00> : vector<8xf32>
      %29 = vector.multi_reduction <add>, %28, %cst_19 [1] : vector<8x512xf32> to vector<8xf32>
      %30 = vector.shape_cast %29 : vector<8xf32> to vector<8x1xf32>
      %31 = arith.addf %27, %30 : vector<8x1xf32>
      %c0_20 = arith.constant 0 : index
      %c0_21 = arith.constant 0 : index
      %32 = vector.load %arg7[%c0_20, %c0_21] : memref<8x1xf32, #tpu.memory_space<vmem>>, vector<8x1xf32>
      tpu.vector_store %arg7[%c0_20, %c0_21], %31 {strides = array<i32>} : memref<8x1xf32, #tpu.memory_space<vmem>>, vector<8x1xf32>,
      %c0_22 = arith.constant 0 : index
      %c0_23 = arith.constant 0 : index
      %33 = vector.load %arg8[%c0_22, %c0_23] : memref<8x1xf32, #tpu.memory_space<vmem>>, vector<8x1xf32>
      %cst_24 = arith.constant dense<0xFF800000> : vector<8xf32>
      %34 = vector.multi_reduction <maximumf>, %2, %cst_24 [1] : vector<8x512xf32> to vector<8xf32>
      %35 = vector.shape_cast %34 : vector<8xf32> to vector<8x1xf32>
      %36 = arith.maximumf %33, %35 : vector<8x1xf32>
      %c0_25 = arith.constant 0 : index
      %c0_26 = arith.constant 0 : index
      %37 = vector.load %arg8[%c0_25, %c0_26] : memref<8x1xf32, #tpu.memory_space<vmem>>, vector<8x1xf32>
      tpu.vector_store %arg8[%c0_25, %c0_26], %36 {strides = array<i32>} : memref<8x1xf32, #tpu.memory_space<vmem>>, vector<8x1xf32>,
    } else {
    }
    %c1_i32 = arith.constant 1 : i32
    %11 = arith.cmpi eq, %arg0, %c1_i32 : i32
    %c0_i32_7 = arith.constant 0 : i32
    %12 = arith.cmpi eq, %arg1, %c0_i32_7 : i32
    %13 = arith.andi %11, %12 : i1
    %14 = arith.extui %13 : i1 to i32
    %c0_i32_8 = arith.constant 0 : i32
    %15 = arith.cmpi ne, %14, %c0_i32_8 : i32
    scf.if %15 {
      %cst_12 = arith.constant 0.000000e+00 : f32
      %22 = vector.broadcast %cst_12 : f32 to vector<8x1xf32>
      %c0_13 = arith.constant 0 : index
      %c0_14 = arith.constant 0 : index
      %23 = vector.load %arg9[%c0_13, %c0_14] : memref<8x1xf32, #tpu.memory_space<vmem>>, vector<8x1xf32>
      tpu.vector_store %arg9[%c0_13, %c0_14], %22 {strides = array<i32>} : memref<8x1xf32, #tpu.memory_space<vmem>>, vector<8x1xf32>,
    } else {
    }
    %c1_i32_9 = arith.constant 1 : i32
    %16 = arith.cmpi eq, %arg0, %c1_i32_9 : i32
    %17 = arith.extui %16 : i1 to i32
    %c0_i32_10 = arith.constant 0 : i32
    %18 = arith.cmpi ne, %17, %c0_i32_10 : i32
    scf.if %18 {
      %c0_12 = arith.constant 0 : index
      %c0_13 = arith.constant 0 : index
      %22 = vector.load %arg9[%c0_12, %c0_13] : memref<8x1xf32, #tpu.memory_space<vmem>>, vector<8x1xf32>
      %c0_14 = arith.constant 0 : index
      %c0_15 = arith.constant 0 : index
      %23 = vector.load %arg6[%c0_14, %c0_15] : memref<8x1xf32, #tpu.memory_space<vmem>>, vector<8x1xf32>
      %cst_16 = arith.constant 6.51041686E-4 : f32
      %24 = vector.broadcast %cst_16 : f32 to vector<8x1xf32>
      %25 = arith.mulf %23, %24 : vector<8x1xf32>
      %c0_17 = arith.constant 0 : index
      %c0_18 = arith.constant 0 : index
      %26 = vector.load %arg7[%c0_17, %c0_18] : memref<8x1xf32, #tpu.memory_space<vmem>>, vector<8x1xf32>
      %cst_19 = arith.constant 6.51041686E-4 : f32
      %27 = vector.broadcast %cst_19 : f32 to vector<8x1xf32>
      %28 = arith.mulf %26, %27 : vector<8x1xf32>
      %29 = arith.mulf %25, %25 : vector<8x1xf32>
      %30 = arith.subf %28, %29 : vector<8x1xf32>
      %cst_20 = arith.constant 9.99999974E-6 : f32
      %31 = vector.broadcast %cst_20 : f32 to vector<8x1xf32>
      %32 = arith.addf %30, %31 : vector<8x1xf32>
      %33 = math.rsqrt %32 : vector<8x1xf32>
      %c0_21 = arith.constant 0 : index
      %c0_22 = arith.constant 0 : index
      %34 = vector.load %arg8[%c0_21, %c0_22] : memref<8x1xf32, #tpu.memory_space<vmem>>, vector<8x1xf32>
      %35 = arith.subf %34, %25 : vector<8x1xf32>
      %36 = arith.mulf %35, %33 : vector<8x1xf32>
      %37 = vector.broadcast %25 : vector<8x1xf32> to vector<8x512xf32>
      %38 = arith.subf %2, %37 : vector<8x512xf32>
      %39 = vector.broadcast %33 : vector<8x1xf32> to vector<8x512xf32>
      %40 = arith.mulf %38, %39 : vector<8x512xf32>
      %41 = vector.broadcast %36 : vector<8x1xf32> to vector<8x512xf32>
      %42 = arith.subf %40, %41 : vector<8x512xf32>
      %43 = math.exp %42 : vector<8x512xf32>
      %cst_23 = arith.constant dense<0.000000e+00> : vector<8xf32>
      %44 = vector.multi_reduction <add>, %43, %cst_23 [1] : vector<8x512xf32> to vector<8xf32>
      %45 = vector.shape_cast %44 : vector<8xf32> to vector<8x1xf32>
      %46 = arith.addf %22, %45 : vector<8x1xf32>
      %c0_24 = arith.constant 0 : index
      %c0_25 = arith.constant 0 : index
      %47 = vector.load %arg9[%c0_24, %c0_25] : memref<8x1xf32, #tpu.memory_space<vmem>>, vector<8x1xf32>
      tpu.vector_store %arg9[%c0_24, %c0_25], %46 {strides = array<i32>} : memref<8x1xf32, #tpu.memory_space<vmem>>, vector<8x1xf32>,
    } else {
    }
    %c2_i32 = arith.constant 2 : i32
    %19 = arith.cmpi eq, %arg0, %c2_i32 : i32
    %20 = arith.extui %19 : i1 to i32
    %c0_i32_11 = arith.constant 0 : i32
    %21 = arith.cmpi ne, %20, %c0_i32_11 : i32
    scf.if %21 {
      %c0_12 = arith.constant 0 : index
      %c0_13 = arith.constant 0 : index
      %22 = vector.load %arg6[%c0_12, %c0_13] : memref<8x1xf32, #tpu.memory_space<vmem>>, vector<8x1xf32>
      %cst_14 = arith.constant 6.51041686E-4 : f32
      %23 = vector.broadcast %cst_14 : f32 to vector<8x1xf32>
      %24 = arith.mulf %22, %23 : vector<8x1xf32>
      %c0_15 = arith.constant 0 : index
      %c0_16 = arith.constant 0 : index
      %25 = vector.load %arg7[%c0_15, %c0_16] : memref<8x1xf32, #tpu.memory_space<vmem>>, vector<8x1xf32>
      %cst_17 = arith.constant 6.51041686E-4 : f32
      %26 = vector.broadcast %cst_17 : f32 to vector<8x1xf32>
      %27 = arith.mulf %25, %26 : vector<8x1xf32>
      %28 = arith.mulf %24, %24 : vector<8x1xf32>
      %29 = arith.subf %27, %28 : vector<8x1xf32>
      %cst_18 = arith.constant 9.99999974E-6 : f32
      %30 = vector.broadcast %cst_18 : f32 to vector<8x1xf32>
      %31 = arith.addf %29, %30 : vector<8x1xf32>
      %32 = math.rsqrt %31 : vector<8x1xf32>
      %c0_19 = arith.constant 0 : index
      %c0_20 = arith.constant 0 : index
      %33 = vector.load %arg8[%c0_19, %c0_20] : memref<8x1xf32, #tpu.memory_space<vmem>>, vector<8x1xf32>
      %34 = arith.subf %33, %24 : vector<8x1xf32>
      %35 = arith.mulf %34, %32 : vector<8x1xf32>
      %36 = vector.broadcast %24 : vector<8x1xf32> to vector<8x512xf32>
      %37 = arith.subf %2, %36 : vector<8x512xf32>
      %38 = vector.broadcast %32 : vector<8x1xf32> to vector<8x512xf32>
      %39 = arith.mulf %37, %38 : vector<8x512xf32>
      %40 = vector.broadcast %35 : vector<8x1xf32> to vector<8x512xf32>
      %41 = arith.subf %39, %40 : vector<8x512xf32>
      %42 = math.exp %41 : vector<8x512xf32>
      %c0_21 = arith.constant 0 : index
      %c0_22 = arith.constant 0 : index
      %43 = vector.load %arg9[%c0_21, %c0_22] : memref<8x1xf32, #tpu.memory_space<vmem>>, vector<8x1xf32>
      %cst_23 = arith.constant 1.000000e+00 : f32
      %44 = vector.broadcast %cst_23 : f32 to vector<8x1xf32>
      %45 = arith.divf %44, %43 : vector<8x1xf32>
      %46 = vector.broadcast %45 : vector<8x1xf32> to vector<8x512xf32>
      %47 = arith.mulf %42, %46 : vector<8x512xf32>
      %c0_24 = arith.constant 0 : index
      %c0_25 = arith.constant 0 : index
      %48 = vector.load %arg2[%c0_24, %c0_25] : memref<8x8xf32, #tpu.memory_space<vmem>>, vector<8x8xf32>
      %cst_26 = arith.constant dense<0.000000e+00> : vector<8x512xf32>
      %49 = tpu.matmul %48, %47, %cst_26 {dimension_numbers = #tpu.dot_dimension_numbers<[1], [0], [0], [1], [0, 0, 1, 1], [], []>} : vector<8x8xf32>, vector<8x512xf32>, vector<8x512xf32> -> vector<8x512xf32>
      %c0_27 = arith.constant 0 : index
      %c0_28 = arith.constant 0 : index
      %50 = vector.load %arg5[%c0_27, %c0_28] : memref<8x512xf32, #tpu.memory_space<vmem>>, vector<8x512xf32>
      tpu.vector_store %arg5[%c0_27, %c0_28], %49 {strides = array<i32>} : memref<8x512xf32, #tpu.memory_space<vmem>>, vector<8x512xf32>,
    } else {
    }
    return
  }
  func.func @transform_0(%arg0: i32, %arg1: i32) -> (i32, i32) {
    %c0_i32 = arith.constant 0 : i32
    %c0_i32_0 = arith.constant 0 : i32
    %c0_i32_1 = arith.constant 0 : i32
    return %c0_i32, %c0_i32_0 : i32, i32
  }
  func.func @transform_1(%arg0: i32, %arg1: i32) -> (i32, i32) {
    %c0_i32 = arith.constant 0 : i32
    %c0_i32_0 = arith.constant 0 : i32
    %c0_i32_1 = arith.constant 0 : i32
    return %c0_i32, %c0_i32_0 : i32, i32
  }
  func.func @transform_2(%arg0: i32, %arg1: i32) -> (i32, i32) {
    %c0_i32 = arith.constant 0 : i32
    %c0_i32_0 = arith.constant 0 : i32
    return %c0_i32, %arg1 : i32, i32
  }
  func.func @transform_3(%arg0: i32, %arg1: i32) -> (i32, i32) {
    %c2_i32 = arith.constant 2 : i32
    %0 = arith.cmpi eq, %arg0, %c2_i32 : i32
    %c0_i32 = arith.constant 0 : i32
    %1 = arith.select %0, %arg1, %c0_i32 : i32
    %c0_i32_0 = arith.constant 0 : i32
    %c0_i32_1 = arith.constant 0 : i32
    return %c0_i32_0, %1 : i32, i32
  }
}

module attributes {stable_mosaic.version = 11 : i64} {
  func.func @encoder_rbf_kernel(%arg0: i32, %arg1: memref<8x512xf32, #tpu.memory_space<vmem>>, %arg2: memref<512x64xbf16, #tpu.memory_space<vmem>>, %arg3: memref<1x64xf32, #tpu.memory_space<vmem>>, %arg4: memref<64x64xf32, #tpu.memory_space<vmem>>, %arg5: memref<1x64xf32, #tpu.memory_space<vmem>>, %arg6: memref<64x2xf32, #tpu.memory_space<vmem>>, %arg7: memref<1x2xf32, #tpu.memory_space<vmem>>, %arg8: memref<64x2xf32, #tpu.memory_space<vmem>>, %arg9: memref<1x2xf32, #tpu.memory_space<vmem>>, %arg10: memref<8x2xf32, #tpu.memory_space<vmem>>, %arg11: memref<8x2xf32, #tpu.memory_space<vmem>>, %arg12: memref<2x100xf32, #tpu.memory_space<vmem>>, %arg13: memref<1x100xf32, #tpu.memory_space<vmem>>, %arg14: memref<100x100xf32, #tpu.memory_space<vmem>>, %arg15: memref<1x100xf32, #tpu.memory_space<vmem>>, %arg16: memref<100x300xf32, #tpu.memory_space<vmem>>, %arg17: memref<1x300xf32, #tpu.memory_space<vmem>>, %arg18: memref<8x2xf32, #tpu.memory_space<vmem>>, %arg19: memref<8x2xf32, #tpu.memory_space<vmem>>, %arg20: memref<8x2xf32, #tpu.memory_space<vmem>>, %arg21: memref<8x8xf32, #tpu.memory_space<vmem>>, %arg22: memref<8x300xbf16, #tpu.memory_space<vmem>>, %arg23: memref<8x64xf32, #tpu.memory_space<vmem>>) attributes {dimension_semantics = [#tpu.dimension_semantics<arbitrary>], iteration_bounds = array<i64: 3>, scalar_prefetch = 0 : i64, scratch_operands = 1 : i64, tpu.core_type = #tpu.core_type<tc>, window_params = [{transform_indices = @transform_0, window_bounds = array<i64: 8, 512>}, {transform_indices = @transform_1, window_bounds = array<i64: 512, 64>}, {pipeline_mode = #tpu.pipeline_mode<synchronous>, transform_indices = @transform_2, window_bounds = array<i64: 1, 64>}, {pipeline_mode = #tpu.pipeline_mode<synchronous>, transform_indices = @transform_3, window_bounds = array<i64: 64, 64>}, {pipeline_mode = #tpu.pipeline_mode<synchronous>, transform_indices = @transform_4, window_bounds = array<i64: 1, 64>}, {pipeline_mode = #tpu.pipeline_mode<synchronous>, transform_indices = @transform_5, window_bounds = array<i64: 64, 2>}, {pipeline_mode = #tpu.pipeline_mode<synchronous>, transform_indices = @transform_6, window_bounds = array<i64: 1, 2>}, {pipeline_mode = #tpu.pipeline_mode<synchronous>, transform_indices = @transform_7, window_bounds = array<i64: 64, 2>}, {pipeline_mode = #tpu.pipeline_mode<synchronous>, transform_indices = @transform_8, window_bounds = array<i64: 1, 2>}, {pipeline_mode = #tpu.pipeline_mode<synchronous>, transform_indices = @transform_9, window_bounds = array<i64: 8, 2>}, {pipeline_mode = #tpu.pipeline_mode<synchronous>, transform_indices = @transform_10, window_bounds = array<i64: 8, 2>}, {pipeline_mode = #tpu.pipeline_mode<synchronous>, transform_indices = @transform_11, window_bounds = array<i64: 2, 100>}, {pipeline_mode = #tpu.pipeline_mode<synchronous>, transform_indices = @transform_12, window_bounds = array<i64: 1, 100>}, {pipeline_mode = #tpu.pipeline_mode<synchronous>, transform_indices = @transform_13, window_bounds = array<i64: 100, 100>}, {pipeline_mode = #tpu.pipeline_mode<synchronous>, transform_indices = @transform_14, window_bounds = array<i64: 1, 100>}, {pipeline_mode = #tpu.pipeline_mode<synchronous>, transform_indices = @transform_15, window_bounds = array<i64: 100, 300>}, {pipeline_mode = #tpu.pipeline_mode<synchronous>, transform_indices = @transform_16, window_bounds = array<i64: 1, 300>}, {pipeline_mode = #tpu.pipeline_mode<synchronous>, transform_indices = @transform_17, window_bounds = array<i64: 8, 2>}, {pipeline_mode = #tpu.pipeline_mode<synchronous>, transform_indices = @transform_18, window_bounds = array<i64: 8, 2>}, {pipeline_mode = #tpu.pipeline_mode<synchronous>, transform_indices = @transform_19, window_bounds = array<i64: 8, 2>}, {pipeline_mode = #tpu.pipeline_mode<synchronous>, transform_indices = @transform_20, window_bounds = array<i64: 8, 8>}, {pipeline_mode = #tpu.pipeline_mode<synchronous>, transform_indices = @transform_21, window_bounds = array<i64: 8, 300>}]} {
    %c0_i32 = arith.constant 0 : i32
    %0 = arith.cmpi eq, %arg0, %c0_i32 : i32
    %1 = arith.extui %0 : i1 to i32
    %c0_i32_0 = arith.constant 0 : i32
    %2 = arith.cmpi ne, %1, %c0_i32_0 : i32
    scf.if %2 {
      %cst_9 = arith.constant 0.000000e+00 : f32
      %13 = vector.broadcast %cst_9 : f32 to vector<8x64xf32>
      %c0_10 = arith.constant 0 : index
      %c0_11 = arith.constant 0 : index
      %14 = vector.load %arg23[%c0_10, %c0_11] : memref<8x64xf32, #tpu.memory_space<vmem>>, vector<8x64xf32>
      tpu.vector_store %arg23[%c0_10, %c0_11], %13 {strides = array<i32>} : memref<8x64xf32, #tpu.memory_space<vmem>>, vector<8x64xf32>,
    } else {
    }
    %c0 = arith.constant 0 : index
    %c0_1 = arith.constant 0 : index
    %3 = vector.load %arg1[%c0, %c0_1] : memref<8x512xf32, #tpu.memory_space<vmem>>, vector<8x512xf32>
    %4 = arith.truncf %3 : vector<8x512xf32> to vector<8x512xbf16>
    %c0_2 = arith.constant 0 : index
    %c0_3 = arith.constant 0 : index
    %5 = vector.load %arg23[%c0_2, %c0_3] : memref<8x64xf32, #tpu.memory_space<vmem>>, vector<8x64xf32>
    %c0_4 = arith.constant 0 : index
    %c0_5 = arith.constant 0 : index
    %6 = vector.load %arg2[%c0_4, %c0_5] : memref<512x64xbf16, #tpu.memory_space<vmem>>, vector<512x64xbf16>
    %cst = arith.constant dense<0.000000e+00> : vector<8x64xf32>
    %7 = tpu.matmul %4, %6, %cst {dimension_numbers = #tpu.dot_dimension_numbers<[1], [0], [0], [1], [0, 0, 1, 1], [], []>} : vector<8x512xbf16>, vector<512x64xbf16>, vector<8x64xf32> -> vector<8x64xf32>
    %8 = arith.addf %5, %7 : vector<8x64xf32>
    %c0_6 = arith.constant 0 : index
    %c0_7 = arith.constant 0 : index
    %9 = vector.load %arg23[%c0_6, %c0_7] : memref<8x64xf32, #tpu.memory_space<vmem>>, vector<8x64xf32>
    tpu.vector_store %arg23[%c0_6, %c0_7], %8 {strides = array<i32>} : memref<8x64xf32, #tpu.memory_space<vmem>>, vector<8x64xf32>,
    %c2_i32 = arith.constant 2 : i32
    %10 = arith.cmpi eq, %arg0, %c2_i32 : i32
    %11 = arith.extui %10 : i1 to i32
    %c0_i32_8 = arith.constant 0 : i32
    %12 = arith.cmpi ne, %11, %c0_i32_8 : i32
    scf.if %12 {
      %c0_9 = arith.constant 0 : index
      %c0_10 = arith.constant 0 : index
      %13 = vector.load %arg23[%c0_9, %c0_10] : memref<8x64xf32, #tpu.memory_space<vmem>>, vector<8x64xf32>
      %c0_11 = arith.constant 0 : index
      %c0_12 = arith.constant 0 : index
      %14 = vector.load %arg3[%c0_11, %c0_12] : memref<1x64xf32, #tpu.memory_space<vmem>>, vector<1x64xf32>
      %15 = vector.broadcast %14 : vector<1x64xf32> to vector<8x64xf32>
      %16 = arith.addf %13, %15 : vector<8x64xf32>
      %cst_13 = arith.constant 0.000000e+00 : f32
      %17 = vector.broadcast %cst_13 : f32 to vector<8x64xf32>
      %18 = arith.maximumf %16, %17 : vector<8x64xf32>
      %19 = math.absf %16 : vector<8x64xf32>
      %cst_14 = arith.constant 0.000000e+00 : f32
      %20 = vector.broadcast %cst_14 : f32 to vector<8x64xf32>
      %21 = arith.subf %20, %19 : vector<8x64xf32>
      %22 = math.exp %21 : vector<8x64xf32>
      %23 = math.log1p %22 : vector<8x64xf32>
      %24 = arith.addf %18, %23 : vector<8x64xf32>
      %c0_15 = arith.constant 0 : index
      %c0_16 = arith.constant 0 : index
      %25 = vector.load %arg4[%c0_15, %c0_16] : memref<64x64xf32, #tpu.memory_space<vmem>>, vector<64x64xf32>
      %cst_17 = arith.constant dense<0.000000e+00> : vector<8x64xf32>
      %26 = tpu.matmul %24, %25, %cst_17 {dimension_numbers = #tpu.dot_dimension_numbers<[1], [0], [0], [1], [0, 0, 1, 1], [], []>} : vector<8x64xf32>, vector<64x64xf32>, vector<8x64xf32> -> vector<8x64xf32>
      %c0_18 = arith.constant 0 : index
      %c0_19 = arith.constant 0 : index
      %27 = vector.load %arg5[%c0_18, %c0_19] : memref<1x64xf32, #tpu.memory_space<vmem>>, vector<1x64xf32>
      %28 = vector.broadcast %27 : vector<1x64xf32> to vector<8x64xf32>
      %29 = arith.addf %26, %28 : vector<8x64xf32>
      %cst_20 = arith.constant 0.000000e+00 : f32
      %30 = vector.broadcast %cst_20 : f32 to vector<8x64xf32>
      %31 = arith.maximumf %29, %30 : vector<8x64xf32>
      %32 = math.absf %29 : vector<8x64xf32>
      %cst_21 = arith.constant 0.000000e+00 : f32
      %33 = vector.broadcast %cst_21 : f32 to vector<8x64xf32>
      %34 = arith.subf %33, %32 : vector<8x64xf32>
      %35 = math.exp %34 : vector<8x64xf32>
      %36 = math.log1p %35 : vector<8x64xf32>
      %37 = arith.addf %31, %36 : vector<8x64xf32>
      %c0_22 = arith.constant 0 : index
      %c0_23 = arith.constant 0 : index
      %38 = vector.load %arg6[%c0_22, %c0_23] : memref<64x2xf32, #tpu.memory_space<vmem>>, vector<64x2xf32>
      %cst_24 = arith.constant dense<0.000000e+00> : vector<8x2xf32>
      %39 = tpu.matmul %37, %38, %cst_24 {dimension_numbers = #tpu.dot_dimension_numbers<[1], [0], [0], [1], [0, 0, 1, 1], [], []>} : vector<8x64xf32>, vector<64x2xf32>, vector<8x2xf32> -> vector<8x2xf32>
      %c0_25 = arith.constant 0 : index
      %c0_26 = arith.constant 0 : index
      %40 = vector.load %arg7[%c0_25, %c0_26] : memref<1x2xf32, #tpu.memory_space<vmem>>, vector<1x2xf32>
      %41 = vector.broadcast %40 : vector<1x2xf32> to vector<8x2xf32>
      %42 = arith.addf %39, %41 : vector<8x2xf32>
      %cst_27 = arith.constant dense<0.000000e+00> : vector<2xf32>
      %43 = vector.multi_reduction <add>, %42, %cst_27 [0] : vector<8x2xf32> to vector<2xf32>
      %44 = vector.shape_cast %43 : vector<2xf32> to vector<1x2xf32>
      %cst_28 = arith.constant 8.000000e+00 : f32
      %45 = vector.broadcast %cst_28 : f32 to vector<1x2xf32>
      %46 = arith.divf %44, %45 : vector<1x2xf32>
      %47 = vector.broadcast %46 : vector<1x2xf32> to vector<8x2xf32>
      %48 = arith.subf %42, %47 : vector<8x2xf32>
      %49 = arith.mulf %48, %48 : vector<8x2xf32>
      %cst_29 = arith.constant dense<0.000000e+00> : vector<2xf32>
      %50 = vector.multi_reduction <add>, %49, %cst_29 [0] : vector<8x2xf32> to vector<2xf32>
      %51 = vector.shape_cast %50 : vector<2xf32> to vector<1x2xf32>
      %cst_30 = arith.constant 8.000000e+00 : f32
      %52 = vector.broadcast %cst_30 : f32 to vector<1x2xf32>
      %53 = arith.divf %51, %52 : vector<1x2xf32>
      %54 = vector.broadcast %46 : vector<1x2xf32> to vector<8x2xf32>
      %55 = arith.subf %42, %54 : vector<8x2xf32>
      %cst_31 = arith.constant 9.99999974E-6 : f32
      %56 = vector.broadcast %cst_31 : f32 to vector<1x2xf32>
      %57 = arith.addf %53, %56 : vector<1x2xf32>
      %58 = math.rsqrt %57 : vector<1x2xf32>
      %59 = vector.broadcast %58 : vector<1x2xf32> to vector<8x2xf32>
      %60 = arith.mulf %55, %59 : vector<8x2xf32>
      %c0_32 = arith.constant 0 : index
      %c0_33 = arith.constant 0 : index
      %61 = vector.load %arg8[%c0_32, %c0_33] : memref<64x2xf32, #tpu.memory_space<vmem>>, vector<64x2xf32>
      %cst_34 = arith.constant dense<0.000000e+00> : vector<8x2xf32>
      %62 = tpu.matmul %37, %61, %cst_34 {dimension_numbers = #tpu.dot_dimension_numbers<[1], [0], [0], [1], [0, 0, 1, 1], [], []>} : vector<8x64xf32>, vector<64x2xf32>, vector<8x2xf32> -> vector<8x2xf32>
      %c0_35 = arith.constant 0 : index
      %c0_36 = arith.constant 0 : index
      %63 = vector.load %arg9[%c0_35, %c0_36] : memref<1x2xf32, #tpu.memory_space<vmem>>, vector<1x2xf32>
      %64 = vector.broadcast %63 : vector<1x2xf32> to vector<8x2xf32>
      %65 = arith.addf %62, %64 : vector<8x2xf32>
      %cst_37 = arith.constant dense<0.000000e+00> : vector<2xf32>
      %66 = vector.multi_reduction <add>, %65, %cst_37 [0] : vector<8x2xf32> to vector<2xf32>
      %67 = vector.shape_cast %66 : vector<2xf32> to vector<1x2xf32>
      %cst_38 = arith.constant 8.000000e+00 : f32
      %68 = vector.broadcast %cst_38 : f32 to vector<1x2xf32>
      %69 = arith.divf %67, %68 : vector<1x2xf32>
      %70 = vector.broadcast %69 : vector<1x2xf32> to vector<8x2xf32>
      %71 = arith.subf %65, %70 : vector<8x2xf32>
      %72 = arith.mulf %71, %71 : vector<8x2xf32>
      %cst_39 = arith.constant dense<0.000000e+00> : vector<2xf32>
      %73 = vector.multi_reduction <add>, %72, %cst_39 [0] : vector<8x2xf32> to vector<2xf32>
      %74 = vector.shape_cast %73 : vector<2xf32> to vector<1x2xf32>
      %cst_40 = arith.constant 8.000000e+00 : f32
      %75 = vector.broadcast %cst_40 : f32 to vector<1x2xf32>
      %76 = arith.divf %74, %75 : vector<1x2xf32>
      %77 = vector.broadcast %69 : vector<1x2xf32> to vector<8x2xf32>
      %78 = arith.subf %65, %77 : vector<8x2xf32>
      %cst_41 = arith.constant 9.99999974E-6 : f32
      %79 = vector.broadcast %cst_41 : f32 to vector<1x2xf32>
      %80 = arith.addf %76, %79 : vector<1x2xf32>
      %81 = math.rsqrt %80 : vector<1x2xf32>
      %82 = vector.broadcast %81 : vector<1x2xf32> to vector<8x2xf32>
      %83 = arith.mulf %78, %82 : vector<8x2xf32>
      %84 = math.exp %83 : vector<8x2xf32>
      %85 = math.sqrt %84 : vector<8x2xf32>
      %c0_42 = arith.constant 0 : index
      %c0_43 = arith.constant 0 : index
      %86 = vector.load %arg10[%c0_42, %c0_43] : memref<8x2xf32, #tpu.memory_space<vmem>>, vector<8x2xf32>
      %87 = arith.mulf %85, %86 : vector<8x2xf32>
      %88 = arith.addf %60, %87 : vector<8x2xf32>
      %c0_44 = arith.constant 0 : index
      %c0_45 = arith.constant 0 : index
      %89 = vector.load %arg18[%c0_44, %c0_45] : memref<8x2xf32, #tpu.memory_space<vmem>>, vector<8x2xf32>
      tpu.vector_store %arg18[%c0_44, %c0_45], %88 {strides = array<i32>} : memref<8x2xf32, #tpu.memory_space<vmem>>, vector<8x2xf32>,
      %cst_46 = arith.constant dense<0.000000e+00> : vector<2xf32>
      %90 = vector.multi_reduction <add>, %88, %cst_46 [0] : vector<8x2xf32> to vector<2xf32>
      %91 = vector.shape_cast %90 : vector<2xf32> to vector<1x2xf32>
      %cst_47 = arith.constant 8.000000e+00 : f32
      %92 = vector.broadcast %cst_47 : f32 to vector<1x2xf32>
      %93 = arith.divf %91, %92 : vector<1x2xf32>
      %94 = vector.broadcast %93 : vector<1x2xf32> to vector<8x2xf32>
      %95 = arith.subf %88, %94 : vector<8x2xf32>
      %96 = arith.mulf %95, %95 : vector<8x2xf32>
      %cst_48 = arith.constant dense<0.000000e+00> : vector<2xf32>
      %97 = vector.multi_reduction <add>, %96, %cst_48 [0] : vector<8x2xf32> to vector<2xf32>
      %98 = vector.shape_cast %97 : vector<2xf32> to vector<1x2xf32>
      %cst_49 = arith.constant 8.000000e+00 : f32
      %99 = vector.broadcast %cst_49 : f32 to vector<1x2xf32>
      %100 = arith.divf %98, %99 : vector<1x2xf32>
      %101 = vector.broadcast %93 : vector<1x2xf32> to vector<8x2xf32>
      %102 = arith.subf %88, %101 : vector<8x2xf32>
      %cst_50 = arith.constant 9.99999974E-6 : f32
      %103 = vector.broadcast %cst_50 : f32 to vector<1x2xf32>
      %104 = arith.addf %100, %103 : vector<1x2xf32>
      %105 = math.rsqrt %104 : vector<1x2xf32>
      %106 = vector.broadcast %105 : vector<1x2xf32> to vector<8x2xf32>
      %107 = arith.mulf %102, %106 : vector<8x2xf32>
      %c0_51 = arith.constant 0 : index
      %c0_52 = arith.constant 0 : index
      %108 = vector.load %arg11[%c0_51, %c0_52] : memref<8x2xf32, #tpu.memory_space<vmem>>, vector<8x2xf32>
      %cst_53 = arith.constant dense<0.000000e+00> : vector<2xf32>
      %109 = vector.multi_reduction <add>, %108, %cst_53 [0] : vector<8x2xf32> to vector<2xf32>
      %110 = vector.shape_cast %109 : vector<2xf32> to vector<1x2xf32>
      %cst_54 = arith.constant 8.000000e+00 : f32
      %111 = vector.broadcast %cst_54 : f32 to vector<1x2xf32>
      %112 = arith.divf %110, %111 : vector<1x2xf32>
      %113 = vector.broadcast %112 : vector<1x2xf32> to vector<8x2xf32>
      %114 = arith.subf %108, %113 : vector<8x2xf32>
      %115 = arith.mulf %114, %114 : vector<8x2xf32>
      %cst_55 = arith.constant dense<0.000000e+00> : vector<2xf32>
      %116 = vector.multi_reduction <add>, %115, %cst_55 [0] : vector<8x2xf32> to vector<2xf32>
      %117 = vector.shape_cast %116 : vector<2xf32> to vector<1x2xf32>
      %cst_56 = arith.constant 8.000000e+00 : f32
      %118 = vector.broadcast %cst_56 : f32 to vector<1x2xf32>
      %119 = arith.divf %117, %118 : vector<1x2xf32>
      %120 = vector.broadcast %112 : vector<1x2xf32> to vector<8x2xf32>
      %121 = arith.subf %108, %120 : vector<8x2xf32>
      %cst_57 = arith.constant 9.99999974E-6 : f32
      %122 = vector.broadcast %cst_57 : f32 to vector<1x2xf32>
      %123 = arith.addf %119, %122 : vector<1x2xf32>
      %124 = math.rsqrt %123 : vector<1x2xf32>
      %125 = vector.broadcast %124 : vector<1x2xf32> to vector<8x2xf32>
      %126 = arith.mulf %121, %125 : vector<8x2xf32>
      %c0_58 = arith.constant 0 : index
      %c0_59 = arith.constant 0 : index
      %127 = vector.load %arg19[%c0_58, %c0_59] : memref<8x2xf32, #tpu.memory_space<vmem>>, vector<8x2xf32>
      tpu.vector_store %arg19[%c0_58, %c0_59], %107 {strides = array<i32>} : memref<8x2xf32, #tpu.memory_space<vmem>>, vector<8x2xf32>,
      %c0_60 = arith.constant 0 : index
      %c0_61 = arith.constant 0 : index
      %128 = vector.load %arg20[%c0_60, %c0_61] : memref<8x2xf32, #tpu.memory_space<vmem>>, vector<8x2xf32>
      tpu.vector_store %arg20[%c0_60, %c0_61], %126 {strides = array<i32>} : memref<8x2xf32, #tpu.memory_space<vmem>>, vector<8x2xf32>,
      %cst_62 = arith.constant dense<0.000000e+00> : vector<8x8xf32>
      %129 = tpu.matmul %107, %126, %cst_62 {dimension_numbers = #tpu.dot_dimension_numbers<[1], [1], [0], [0], [0, 0, 1, 0], [], []>} : vector<8x2xf32>, vector<8x2xf32>, vector<8x8xf32> -> vector<8x8xf32>
      %cst_63 = arith.constant 1.000000e+00 : f32
      %130 = vector.broadcast %cst_63 : f32 to vector<8x2xf32>
      %131 = arith.mulf %126, %126 : vector<8x2xf32>
      %cst_64 = arith.constant dense<0.000000e+00> : vector<8x8xf32>
      %132 = tpu.matmul %130, %131, %cst_64 {dimension_numbers = #tpu.dot_dimension_numbers<[1], [1], [0], [0], [0, 0, 1, 0], [], []>} : vector<8x2xf32>, vector<8x2xf32>, vector<8x8xf32> -> vector<8x8xf32>
      %133 = arith.mulf %107, %107 : vector<8x2xf32>
      %cst_65 = arith.constant dense<0.000000e+00> : vector<8xf32>
      %134 = vector.multi_reduction <add>, %133, %cst_65 [1] : vector<8x2xf32> to vector<8xf32>
      %135 = vector.shape_cast %134 : vector<8xf32> to vector<8x1xf32>
      %136 = vector.broadcast %135 : vector<8x1xf32> to vector<8x8xf32>
      %137 = arith.addf %136, %132 : vector<8x8xf32>
      %cst_66 = arith.constant 2.000000e+00 : f32
      %138 = vector.broadcast %cst_66 : f32 to vector<8x8xf32>
      %139 = arith.mulf %138, %129 : vector<8x8xf32>
      %140 = arith.subf %137, %139 : vector<8x8xf32>
      %cst_67 = arith.constant 0.000000e+00 : f32
      %141 = vector.broadcast %cst_67 : f32 to vector<8x8xf32>
      %142 = arith.maximumf %140, %141 : vector<8x8xf32>
      %cst_68 = arith.constant -5.000000e-01 : f32
      %143 = vector.broadcast %cst_68 : f32 to vector<8x8xf32>
      %144 = arith.mulf %143, %142 : vector<8x8xf32>
      %cst_69 = arith.constant dense<0xFF800000> : vector<8xf32>
      %145 = vector.multi_reduction <maximumf>, %144, %cst_69 [1] : vector<8x8xf32> to vector<8xf32>
      %146 = vector.shape_cast %145 : vector<8xf32> to vector<8x1xf32>
      %147 = vector.broadcast %146 : vector<8x1xf32> to vector<8x8xf32>
      %148 = arith.subf %144, %147 : vector<8x8xf32>
      %149 = math.exp %148 : vector<8x8xf32>
      %cst_70 = arith.constant dense<0.000000e+00> : vector<8xf32>
      %150 = vector.multi_reduction <add>, %149, %cst_70 [1] : vector<8x8xf32> to vector<8xf32>
      %151 = vector.shape_cast %150 : vector<8xf32> to vector<8x1xf32>
      %152 = vector.broadcast %151 : vector<8x1xf32> to vector<8x8xf32>
      %153 = arith.divf %149, %152 : vector<8x8xf32>
      %c0_71 = arith.constant 0 : index
      %c0_72 = arith.constant 0 : index
      %154 = vector.load %arg21[%c0_71, %c0_72] : memref<8x8xf32, #tpu.memory_space<vmem>>, vector<8x8xf32>
      tpu.vector_store %arg21[%c0_71, %c0_72], %153 {strides = array<i32>} : memref<8x8xf32, #tpu.memory_space<vmem>>, vector<8x8xf32>,
      %c0_73 = arith.constant 0 : index
      %c0_74 = arith.constant 0 : index
      %155 = vector.load %arg12[%c0_73, %c0_74] : memref<2x100xf32, #tpu.memory_space<vmem>>, vector<2x100xf32>
      %cst_75 = arith.constant dense<0.000000e+00> : vector<8x100xf32>
      %156 = tpu.matmul %126, %155, %cst_75 {dimension_numbers = #tpu.dot_dimension_numbers<[1], [0], [0], [1], [0, 0, 1, 1], [], []>} : vector<8x2xf32>, vector<2x100xf32>, vector<8x100xf32> -> vector<8x100xf32>
      %c0_76 = arith.constant 0 : index
      %c0_77 = arith.constant 0 : index
      %157 = vector.load %arg13[%c0_76, %c0_77] : memref<1x100xf32, #tpu.memory_space<vmem>>, vector<1x100xf32>
      %158 = vector.broadcast %157 : vector<1x100xf32> to vector<8x100xf32>
      %159 = arith.addf %156, %158 : vector<8x100xf32>
      %cst_78 = arith.constant 0.000000e+00 : f32
      %160 = vector.broadcast %cst_78 : f32 to vector<8x100xf32>
      %161 = arith.maximumf %159, %160 : vector<8x100xf32>
      %162 = math.absf %159 : vector<8x100xf32>
      %cst_79 = arith.constant 0.000000e+00 : f32
      %163 = vector.broadcast %cst_79 : f32 to vector<8x100xf32>
      %164 = arith.subf %163, %162 : vector<8x100xf32>
      %165 = math.exp %164 : vector<8x100xf32>
      %166 = math.log1p %165 : vector<8x100xf32>
      %167 = arith.addf %161, %166 : vector<8x100xf32>
      %c0_80 = arith.constant 0 : index
      %c0_81 = arith.constant 0 : index
      %168 = vector.load %arg14[%c0_80, %c0_81] : memref<100x100xf32, #tpu.memory_space<vmem>>, vector<100x100xf32>
      %cst_82 = arith.constant dense<0.000000e+00> : vector<8x100xf32>
      %169 = tpu.matmul %167, %168, %cst_82 {dimension_numbers = #tpu.dot_dimension_numbers<[1], [0], [0], [1], [0, 0, 1, 1], [], []>} : vector<8x100xf32>, vector<100x100xf32>, vector<8x100xf32> -> vector<8x100xf32>
      %c0_83 = arith.constant 0 : index
      %c0_84 = arith.constant 0 : index
      %170 = vector.load %arg15[%c0_83, %c0_84] : memref<1x100xf32, #tpu.memory_space<vmem>>, vector<1x100xf32>
      %171 = vector.broadcast %170 : vector<1x100xf32> to vector<8x100xf32>
      %172 = arith.addf %169, %171 : vector<8x100xf32>
      %cst_85 = arith.constant 0.000000e+00 : f32
      %173 = vector.broadcast %cst_85 : f32 to vector<8x100xf32>
      %174 = arith.maximumf %172, %173 : vector<8x100xf32>
      %175 = math.absf %172 : vector<8x100xf32>
      %cst_86 = arith.constant 0.000000e+00 : f32
      %176 = vector.broadcast %cst_86 : f32 to vector<8x100xf32>
      %177 = arith.subf %176, %175 : vector<8x100xf32>
      %178 = math.exp %177 : vector<8x100xf32>
      %179 = math.log1p %178 : vector<8x100xf32>
      %180 = arith.addf %174, %179 : vector<8x100xf32>
      %c0_87 = arith.constant 0 : index
      %c0_88 = arith.constant 0 : index
      %181 = vector.load %arg16[%c0_87, %c0_88] : memref<100x300xf32, #tpu.memory_space<vmem>>, vector<100x300xf32>
      %cst_89 = arith.constant dense<0.000000e+00> : vector<8x300xf32>
      %182 = tpu.matmul %180, %181, %cst_89 {dimension_numbers = #tpu.dot_dimension_numbers<[1], [0], [0], [1], [0, 0, 1, 1], [], []>} : vector<8x100xf32>, vector<100x300xf32>, vector<8x300xf32> -> vector<8x300xf32>
      %c0_90 = arith.constant 0 : index
      %c0_91 = arith.constant 0 : index
      %183 = vector.load %arg17[%c0_90, %c0_91] : memref<1x300xf32, #tpu.memory_space<vmem>>, vector<1x300xf32>
      %184 = vector.broadcast %183 : vector<1x300xf32> to vector<8x300xf32>
      %185 = arith.addf %182, %184 : vector<8x300xf32>
      %186 = arith.truncf %185 : vector<8x300xf32> to vector<8x300xbf16>
      %c0_92 = arith.constant 0 : index
      %c0_93 = arith.constant 0 : index
      %187 = vector.load %arg22[%c0_92, %c0_93] : memref<8x300xbf16, #tpu.memory_space<vmem>>, vector<8x300xbf16>
      tpu.vector_store %arg22[%c0_92, %c0_93], %186 {strides = array<i32>} : memref<8x300xbf16, #tpu.memory_space<vmem>>, vector<8x300xbf16>,
    } else {
    }
    return
  }
  func.func @transform_0(%arg0: i32) -> (i32, i32) {
    %c0_i32 = arith.constant 0 : i32
    %c0_i32_0 = arith.constant 0 : i32
    return %c0_i32, %arg0 : i32, i32
  }
  func.func @transform_1(%arg0: i32) -> (i32, i32) {
    %c0_i32 = arith.constant 0 : i32
    %c0_i32_0 = arith.constant 0 : i32
    return %arg0, %c0_i32 : i32, i32
  }
  func.func @transform_2(%arg0: i32) -> (i32, i32) {
    %c0_i32 = arith.constant 0 : i32
    %c0_i32_0 = arith.constant 0 : i32
    %c0_i32_1 = arith.constant 0 : i32
    return %c0_i32, %c0_i32_0 : i32, i32
  }
  func.func @transform_3(%arg0: i32) -> (i32, i32) {
    %c0_i32 = arith.constant 0 : i32
    %c0_i32_0 = arith.constant 0 : i32
    %c0_i32_1 = arith.constant 0 : i32
    return %c0_i32, %c0_i32_0 : i32, i32
  }
  func.func @transform_4(%arg0: i32) -> (i32, i32) {
    %c0_i32 = arith.constant 0 : i32
    %c0_i32_0 = arith.constant 0 : i32
    %c0_i32_1 = arith.constant 0 : i32
    return %c0_i32, %c0_i32_0 : i32, i32
  }
  func.func @transform_5(%arg0: i32) -> (i32, i32) {
    %c0_i32 = arith.constant 0 : i32
    %c0_i32_0 = arith.constant 0 : i32
    %c0_i32_1 = arith.constant 0 : i32
    return %c0_i32, %c0_i32_0 : i32, i32
  }
  func.func @transform_6(%arg0: i32) -> (i32, i32) {
    %c0_i32 = arith.constant 0 : i32
    %c0_i32_0 = arith.constant 0 : i32
    %c0_i32_1 = arith.constant 0 : i32
    return %c0_i32, %c0_i32_0 : i32, i32
  }
  func.func @transform_7(%arg0: i32) -> (i32, i32) {
    %c0_i32 = arith.constant 0 : i32
    %c0_i32_0 = arith.constant 0 : i32
    %c0_i32_1 = arith.constant 0 : i32
    return %c0_i32, %c0_i32_0 : i32, i32
  }
  func.func @transform_8(%arg0: i32) -> (i32, i32) {
    %c0_i32 = arith.constant 0 : i32
    %c0_i32_0 = arith.constant 0 : i32
    %c0_i32_1 = arith.constant 0 : i32
    return %c0_i32, %c0_i32_0 : i32, i32
  }
  func.func @transform_9(%arg0: i32) -> (i32, i32) {
    %c0_i32 = arith.constant 0 : i32
    %c0_i32_0 = arith.constant 0 : i32
    %c0_i32_1 = arith.constant 0 : i32
    return %c0_i32, %c0_i32_0 : i32, i32
  }
  func.func @transform_10(%arg0: i32) -> (i32, i32) {
    %c0_i32 = arith.constant 0 : i32
    %c0_i32_0 = arith.constant 0 : i32
    %c0_i32_1 = arith.constant 0 : i32
    return %c0_i32, %c0_i32_0 : i32, i32
  }
  func.func @transform_11(%arg0: i32) -> (i32, i32) {
    %c0_i32 = arith.constant 0 : i32
    %c0_i32_0 = arith.constant 0 : i32
    %c0_i32_1 = arith.constant 0 : i32
    return %c0_i32, %c0_i32_0 : i32, i32
  }
  func.func @transform_12(%arg0: i32) -> (i32, i32) {
    %c0_i32 = arith.constant 0 : i32
    %c0_i32_0 = arith.constant 0 : i32
    %c0_i32_1 = arith.constant 0 : i32
    return %c0_i32, %c0_i32_0 : i32, i32
  }
  func.func @transform_13(%arg0: i32) -> (i32, i32) {
    %c0_i32 = arith.constant 0 : i32
    %c0_i32_0 = arith.constant 0 : i32
    %c0_i32_1 = arith.constant 0 : i32
    return %c0_i32, %c0_i32_0 : i32, i32
  }
  func.func @transform_14(%arg0: i32) -> (i32, i32) {
    %c0_i32 = arith.constant 0 : i32
    %c0_i32_0 = arith.constant 0 : i32
    %c0_i32_1 = arith.constant 0 : i32
    return %c0_i32, %c0_i32_0 : i32, i32
  }
  func.func @transform_15(%arg0: i32) -> (i32, i32) {
    %c0_i32 = arith.constant 0 : i32
    %c0_i32_0 = arith.constant 0 : i32
    %c0_i32_1 = arith.constant 0 : i32
    return %c0_i32, %c0_i32_0 : i32, i32
  }
  func.func @transform_16(%arg0: i32) -> (i32, i32) {
    %c0_i32 = arith.constant 0 : i32
    %c0_i32_0 = arith.constant 0 : i32
    %c0_i32_1 = arith.constant 0 : i32
    return %c0_i32, %c0_i32_0 : i32, i32
  }
  func.func @transform_17(%arg0: i32) -> (i32, i32) {
    %c0_i32 = arith.constant 0 : i32
    %c0_i32_0 = arith.constant 0 : i32
    %c0_i32_1 = arith.constant 0 : i32
    return %c0_i32, %c0_i32_0 : i32, i32
  }
  func.func @transform_18(%arg0: i32) -> (i32, i32) {
    %c0_i32 = arith.constant 0 : i32
    %c0_i32_0 = arith.constant 0 : i32
    %c0_i32_1 = arith.constant 0 : i32
    return %c0_i32, %c0_i32_0 : i32, i32
  }
  func.func @transform_19(%arg0: i32) -> (i32, i32) {
    %c0_i32 = arith.constant 0 : i32
    %c0_i32_0 = arith.constant 0 : i32
    %c0_i32_1 = arith.constant 0 : i32
    return %c0_i32, %c0_i32_0 : i32, i32
  }
  func.func @transform_20(%arg0: i32) -> (i32, i32) {
    %c0_i32 = arith.constant 0 : i32
    %c0_i32_0 = arith.constant 0 : i32
    %c0_i32_1 = arith.constant 0 : i32
    return %c0_i32, %c0_i32_0 : i32, i32
  }
  func.func @transform_21(%arg0: i32) -> (i32, i32) {
    %c0_i32 = arith.constant 0 : i32
    %c0_i32_0 = arith.constant 0 : i32
    %c0_i32_1 = arith.constant 0 : i32
    return %c0_i32, %c0_i32_0 : i32, i32
  }
}

</mosaic_0001>

<llo_original>
// kernel: model_forward.3
$region0: #{model_forward.3}
  #allocation0 [shape = 'u32[]', space=smem, size = 0x4, offset = 0x4, fixed_abs, tag = 'smem constant byte address 0x4 - core index']
  #allocation1 [shape = 'u32[72,128]{1,0:T(1,128)}', space=vmem, size = 0x9000, scoped, tag = 'internal scratch']
  #allocation2 [shape = 'f32[8,1]{1,0:T(8,128)}', space=vmem, size = 0x1000, scoped, tag = 'scratch operand']
  #allocation3 [shape = 'f32[8,1]{1,0:T(8,128)}', space=vmem, size = 0x1000, scoped, tag = 'scratch operand']
  #allocation4 [shape = 'f32[8,1]{1,0:T(8,128)}', space=vmem, size = 0x1000, scoped, tag = 'scratch operand']
  #allocation5 [shape = 'f32[8,1]{1,0:T(8,128)}', space=vmem, size = 0x1000, scoped, tag = 'scratch operand']
  %s0 = inlined_call_operand.vmem [shape: f32[8,8], index: 0, kind: input, shape index: {}]
  %s1 = inlined_call_operand.vmem [shape: bf16[8,300], index: 1, kind: input, shape index: {}]
  %s2 = inlined_call_operand.hbm [shape: bf16[300,1536], index: 2, kind: input, shape index: {}]
  %s3 = inlined_call_operand.hbm [shape: f32[8,1536], index: 3, kind: output, shape index: {}]
  %s4 = sld [smem:[#allocation0]]
  $region69: #{model_forward.3} parent=0
    _
  %s6 = ssub.s32 1, %s4
  %s7 = scalar_select 0, %s6, %s4
  $region1: #{model_forward.3} parent=0
    #allocation6 [shape = 'u8[622592]{0}', space=vmem, size = 0x98000, scoped, tag = 'input window, operand 2']
    #allocation7 [shape = 's32[2]{0}', space=sflag, size = 0x8, scoped, tag = 'scoped memory for model_forward.3']
    #allocation8 [shape = 's32[2]{0}', space=sflag, size = 0x8, scoped, tag = 'scoped memory for model_forward.3']
    #allocation9 [shape = 'u8[32768]{0}', space=vmem, size = 0x8000, scoped, tag = 'output window, operand 0']
    %8 = vsyncpa [#allocation7], 0
    %s9 = scalar_lea.sflag [#allocation7], 1
    %10 = vsyncpa %s9, 0
    %11 = vsyncpa [#allocation8], 0
    %s12 = scalar_lea.sflag [#allocation8], 1
    %13 = vsyncpa %s12, 0
    loop: start=0, step=1, limit=11
    $region2: #{model_forward.3} parent=1 // loop_pre_header
      _
    $region3: #{model_forward.3} parent=1 // loop_header
      %s15 = sphi 0, %s19
      %p16 = scmp.ge.s32.totalorder %s15, 11
      %s22 = sphi 0, %s34
      %s23 = sphi 0, %s30
      %s24 = sphi 0, %s22
      %s25 = sphi 0, %s23
      %s26 = sphi 0, %s24
      %s27 = sphi 0, %s25
      %s35 = sphi 0, %s35
      %s37 = sphi 0, %s35
      %s38 = sphi 0, %s37
      %s52 = sphi 0, %s38
      %s56 = sphi 0, %s56
      %s58 = sphi 0, %s56
      %s59 = sphi 0, %s58
      %s73 = sphi 0, %s59
      %s79 = sphi 0, %s81
      %s82 = sphi 0, %s79
      %s83 = sphi 0, %s82
      %s99 = sphi 0, %s83
      %s109 = sphi 0, %s111
      %s112 = sphi 0, %s109
      %s113 = sphi 0, %s112
      %s129 = sphi 0, %s113
    $region4: #{model_forward.3} parent=1 // loop_header_branch
      %18 = sbr.rel (%p16) target = $region8
    $region5: #{model_forward.3} parent=1 // loop_body
      %s20 = ssub.s32 %s15, 1
      %s21 = ssub.s32 %s15, 2
      %s28 = sadd.s32 1, %s23
      %p29 = scmp.ge.s32.totalorder %s28, 3
      %s30 = scalar_select %p29, 0, %s28
      %s31 = sadd.s32 1, %s22
      %s32 = scalar_select %p29, %s31, %s22
      %p33 = scmp.ge.s32.totalorder %s32, 3
      %s34 = scalar_select %p33, 0, %s32
      %s36 = sadd.s32 %s35, 1
      %p39 = scmp.eq.s32.totalorder %s15, 8
      %p40 = scmp.ne.s32.totalorder %s35, %s37
      %p41 = scmp.eq.s32.totalorder %s15, 0
      %p42 = por %p40, %p41
      %p43 = scmp.ne.s32.totalorder %s35, %s37
      %p44 = scmp.eq.s32.totalorder %s20, 8
      %p45 = por %p43, %p44
      %p46 = scmp.ne.s32.totalorder %s37, %s38
      %p47 = scmp.eq.s32.totalorder %s20, 0
      %p48 = por %p46, %p47
      %p49 = scmp.ne.s32.totalorder %s37, %s38
      %p50 = scmp.eq.s32.totalorder %s21, 8
      %p51 = por %p49, %p50
      %p53 = scmp.ne.s32.totalorder %s38, %s52
      %p54 = scmp.eq.s32.totalorder %s21, 0
      %p55 = por %p53, %p54
      %s57 = sadd.s32 %s56, 1
      %p60 = scmp.eq.s32.totalorder %s15, 8
      %p61 = scmp.ne.s32.totalorder %s56, %s58
      %p62 = scmp.eq.s32.totalorder %s15, 0
      %p63 = por %p61, %p62
      %p64 = scmp.ne.s32.totalorder %s56, %s58
      %p65 = scmp.eq.s32.totalorder %s20, 8
      %p66 = por %p64, %p65
      %p67 = scmp.ne.s32.totalorder %s58, %s59
      %p68 = scmp.eq.s32.totalorder %s20, 0
      %p69 = por %p67, %p68
      %p70 = scmp.ne.s32.totalorder %s58, %s59
      %p71 = scmp.eq.s32.totalorder %s21, 8
      %p72 = por %p70, %p71
      %p74 = scmp.ne.s32.totalorder %s59, %s73
      %p75 = scmp.eq.s32.totalorder %s21, 0
      %p76 = por %p74, %p75
      %s77 = ssub.s32 %s23, %s30
      %p78 = scmp.eq.s32.totalorder %s77, 0
      %s80 = sadd.s32 %s79, 1
      %s81 = scalar_select %p78, %s79, %s80
      %p84 = pneg %p78
      %p85 = scmp.eq.s32.totalorder %s15, 8
      %p86 = por %p84, %p85
      %p87 = scmp.ne.s32.totalorder %s79, %s82
      %p88 = scmp.eq.s32.totalorder %s15, 0
      %p89 = por %p87, %p88
      %p90 = scmp.ne.s32.totalorder %s79, %s82
      %p91 = scmp.eq.s32.totalorder %s20, 8
      %p92 = por %p90, %p91
      %p93 = scmp.ne.s32.totalorder %s82, %s83
      %p94 = scmp.eq.s32.totalorder %s20, 0
      %p95 = por %p93, %p94
      %p96 = scmp.ne.s32.totalorder %s82, %s83
      %p97 = scmp.eq.s32.totalorder %s21, 8
      %p98 = por %p96, %p97
      %p100 = scmp.ne.s32.totalorder %s83, %s99
      %p101 = scmp.eq.s32.totalorder %s21, 0
      %p102 = por %p100, %p101
      %p103 = scmp.eq.s32.totalorder %s22, 2
      %s104 = scalar_select %p103, %s23, 0
      %p105 = scmp.eq.s32.totalorder %s34, 2
      %s106 = scalar_select %p105, %s30, 0
      %s107 = ssub.s32 %s104, %s106
      %p108 = scmp.eq.s32.totalorder %s107, 0
      %s110 = sadd.s32 %s109, 1
      %s111 = scalar_select %p108, %s109, %s110
      %p114 = pneg %p108
      %p115 = scmp.eq.s32.totalorder %s15, 8
      %p116 = por %p114, %p115
      %p117 = scmp.ne.s32.totalorder %s109, %s112
      %p118 = scmp.eq.s32.totalorder %s15, 0
      %p119 = por %p117, %p118
      %p120 = scmp.ne.s32.totalorder %s109, %s112
      %p121 = scmp.eq.s32.totalorder %s20, 8
      %p122 = por %p120, %p121
      %p123 = scmp.ne.s32.totalorder %s112, %s113
      %p124 = scmp.eq.s32.totalorder %s20, 0
      %p125 = por %p123, %p124
      %p126 = scmp.ne.s32.totalorder %s112, %s113
      %p127 = scmp.eq.s32.totalorder %s21, 8
      %p128 = por %p126, %p127
      %p130 = scmp.ne.s32.totalorder %s113, %s129
      %p131 = scmp.eq.s32.totalorder %s21, 0
      %p132 = por %p130, %p131
      %p133 = scmp.le.s32.totalorder 1, %s15
      %p134 = scmp.lt.s32.totalorder %s15, 10
      %p135 = pnand %p133, %p134
      %p136 = pneg %p135
      // Predicated region
      $region9: #{model_forward.3} parent=5 // pred_check
        _
      $region10: #{model_forward.3} parent=5 // pred_check_branch
        %138 = sbr.rel (%p135) target = $region12
      $region11: #{model_forward.3} parent=5 // pred_region
        %s139 = ssub.s32 %s15, 1
        // Predicated region
        $region13: #{model_forward.3} parent=11 // pred_check
          %p140 = pneg %p48
        $region14: #{model_forward.3} parent=11 // pred_check_branch
          %142 = sbr.rel (%p140) target = $region16
        $region15: #{model_forward.3} parent=11 // pred_region
          _
        $region16: #{model_forward.3} parent=11 // pred_fallthru
          _
        // Predicated region
        $region17: #{model_forward.3} parent=11 // pred_check
          %p143 = pneg %p69
        $region18: #{model_forward.3} parent=11 // pred_check_branch
          %145 = sbr.rel (%p143) target = $region20
        $region19: #{model_forward.3} parent=11 // pred_region
          _
        $region20: #{model_forward.3} parent=11 // pred_fallthru
          _
      $region12: #{model_forward.3} parent=5 // pred_fallthru
        _
      %p146 = scmp.lt.s32.totalorder %s15, 9
      // Predicated region
      $region21: #{model_forward.3} parent=5 // pred_check
        %p147 = pneg %p146
      $region22: #{model_forward.3} parent=5 // pred_check_branch
        %149 = sbr.rel (%p147) target = $region24
      $region23: #{model_forward.3} parent=5 // pred_region
        // Predicated region
        $region25: #{model_forward.3} parent=23 // pred_check
          %p150 = pneg %p89
        $region26: #{model_forward.3} parent=23 // pred_check_branch
          %152 = sbr.rel (%p150) target = $region28
        $region27: #{model_forward.3} parent=23 // pred_region
          %s153 = sand.u32 %s79, 1
          %s154 = scalar_lea.sflag [#allocation7], %s153
          %s155 = sand.u32 %s79, 1
          %s156 = smul.addr %s155, 608
          %s157 = scalar_lea.vmem [#allocation6], %s156
          %s158 = smul.u32 4, %s23
          %160 = vsyncadd %s154, 0
          %s161 = smul.addr %s158, 4
          %s162 = scalar_lea.hbm %s2, %s161
          %s163 = sshll.u32 %s162, 4
          %s164 = int_to_ptr.hbm [resolvable:$true] %s163
          %s165 = sshll.u32 %s157, 4
          %s166 = int_to_ptr.vmem [resolvable:$true] %s165
          %171 = dma.hbm_to_vmem [thread:$0]  %s164, 9728, %s166, %s154, 768, 256, 16
        $region28: #{model_forward.3} parent=23 // pred_fallthru
          _
      $region24: #{model_forward.3} parent=5 // pred_fallthru
        _
      %p172 = scmp.le.s32.totalorder 1, %s15
      %p173 = scmp.lt.s32.totalorder %s15, 10
      %p174 = pnand %p172, %p173
      %p175 = pneg %p174
      // Predicated region
      $region29: #{model_forward.3} parent=5 // pred_check
        _
      $region30: #{model_forward.3} parent=5 // pred_check_branch
        %177 = sbr.rel (%p174) target = $region32
      $region31: #{model_forward.3} parent=5 // pred_region
        %s178 = ssub.s32 %s15, 1
        %s179 = sand.u32 %s82, 1
        %s180 = scalar_lea.sflag [#allocation7], %s179
        %s181 = sand.u32 %s82, 1
        %s182 = smul.addr %s181, 608
        %s183 = scalar_lea.vmem [#allocation6], %s182
        // Predicated region
        $region33: #{model_forward.3} parent=31 // pred_check
          %p184 = pneg %p95
        $region34: #{model_forward.3} parent=31 // pred_check_branch
          %186 = sbr.rel (%p184) target = $region36
        $region35: #{model_forward.3} parent=31 // pred_region
          %188 = dma.done %s180, 9728
        $region36: #{model_forward.3} parent=31 // pred_fallthru
          _
        %p189 = pneg %p48
        %p190 = pneg %p45
        %p191 = pneg %p69
        %p192 = pneg %p66
        %s193 = sand.u32 %s82, 1
        %s194 = scalar_lea.sflag [#allocation7], %s193
        %s195 = sand.u32 %s82, 1
        %s196 = smul.addr %s195, 608
        %s197 = scalar_lea.vmem [#allocation6], %s196
        %p198 = pneg %p95
        %p199 = pneg %p92
        %p200 = pneg %p125
        %p201 = pneg %p122
        %s202 = sand.u32 %s112, 1
        %s203 = scalar_lea.sflag [#allocation8], %s202
        %s204 = sand.u32 %s112, 1
        %s205 = smul.addr %s204, 32
        %s206 = scalar_lea.vmem [#allocation9], %s205
        %s207 = smul.u32 4, %s25
        %p208 = scmp.eq.s32.totalorder %s24, 2
        %s209 = scalar_select %p208, %s25, 0
        %s210 = smul.u32 4, %s209
        %v212 = vld [vmem:[%s1] sm:$0xff]
        %v213 = vld [vmem:[%s1 + $0x8] sm:$0xf]
        %v214 = vld [vmem:[%s183] sm:$0xff]
        %v215 = vld [vmem:[%s183 + $0x8] sm:$0xff]
        %v216 = vld [vmem:[%s183 + $0x10] sm:$0xff]
        %v217 = vld [vmem:[%s183 + $0x18] sm:$0xff]
        %v218 = vld [vmem:[%s183 + $0x20] sm:$0xff]
        %v219 = vld [vmem:[%s183 + $0x28] sm:$0xff]
        %v220 = vld [vmem:[%s183 + $0x30] sm:$0xff]
        %v221 = vld [vmem:[%s183 + $0x38] sm:$0xff]
        %v222 = vld [vmem:[%s183 + $0x40] sm:$0xff]
        %v223 = vld [vmem:[%s183 + $0x48] sm:$0xff]
        %v224 = vld [vmem:[%s183 + $0x50] sm:$0xff]
        %v225 = vld [vmem:[%s183 + $0x58] sm:$0xff]
        %v226 = vld [vmem:[%s183 + $0x60] sm:$0xff]
        %v227 = vld [vmem:[%s183 + $0x68] sm:$0xff]
        %v228 = vld [vmem:[%s183 + $0x70] sm:$0xff]
        %v229 = vld [vmem:[%s183 + $0x78] sm:$0xff]
        %v230 = vld [vmem:[%s183 + $0x80] sm:$0xff]
        %v231 = vld [vmem:[%s183 + $0x88] sm:$0xff]
        %v232 = vld [vmem:[%s183 + $0x90] sm:$0xff]
        %v233 = vld [vmem:[%s183 + $0x98] sm:$0xff]
        %v234 = vld [vmem:[%s183 + $0xa0] sm:$0xff]
        %v235 = vld [vmem:[%s183 + $0xa8] sm:$0xff]
        %v236 = vld [vmem:[%s183 + $0xb0] sm:$0xff]
        %v237 = vld [vmem:[%s183 + $0xb8] sm:$0xff]
        %v238 = vld [vmem:[%s183 + $0xc0] sm:$0xff]
        %v239 = vld [vmem:[%s183 + $0xc8] sm:$0xff]
        %v240 = vld [vmem:[%s183 + $0xd0] sm:$0xff]
        %v241 = vld [vmem:[%s183 + $0xd8] sm:$0xff]
        %v242 = vld [vmem:[%s183 + $0xe0] sm:$0xff]
        %v243 = vld [vmem:[%s183 + $0xe8] sm:$0xff]
        %v244 = vld [vmem:[%s183 + $0xf0] sm:$0xff]
        %v245 = vld [vmem:[%s183 + $0xf8] sm:$0xff]
        %v246 = vld [vmem:[%s183 + $0x100] sm:$0xff]
        %v247 = vld [vmem:[%s183 + $0x108] sm:$0xff]
        %v248 = vld [vmem:[%s183 + $0x110] sm:$0xff]
        %v249 = vld [vmem:[%s183 + $0x118] sm:$0xff]
        %v250 = vld [vmem:[%s183 + $0x120] sm:$0xff]
        %v251 = vld [vmem:[%s183 + $0x128] sm:$0xff]
        %v252 = vld [vmem:[%s183 + $0x130] sm:$0xff]
        %v253 = vld [vmem:[%s183 + $0x138] sm:$0xff]
        %v254 = vld [vmem:[%s183 + $0x140] sm:$0xff]
        %v255 = vld [vmem:[%s183 + $0x148] sm:$0xff]
        %v256 = vld [vmem:[%s183 + $0x150] sm:$0xff]
        %v257 = vld [vmem:[%s183 + $0x158] sm:$0xff]
        %v258 = vld [vmem:[%s183 + $0x160] sm:$0xff]
        %v259 = vld [vmem:[%s183 + $0x168] sm:$0xff]
        %v260 = vld [vmem:[%s183 + $0x170] sm:$0xff]
        %v261 = vld [vmem:[%s183 + $0x178] sm:$0xff]
        %v262 = vld [vmem:[%s183 + $0x180] sm:$0xff]
        %v263 = vld [vmem:[%s183 + $0x188] sm:$0xff]
        %v264 = vld [vmem:[%s183 + $0x190] sm:$0xff]
        %v265 = vld [vmem:[%s183 + $0x198] sm:$0xff]
        %v266 = vld [vmem:[%s183 + $0x1a0] sm:$0xff]
        %v267 = vld [vmem:[%s183 + $0x1a8] sm:$0xff]
        %v268 = vld [vmem:[%s183 + $0x1b0] sm:$0xff]
        %v269 = vld [vmem:[%s183 + $0x1b8] sm:$0xff]
        %v270 = vld [vmem:[%s183 + $0x1c0] sm:$0xff]
        %v271 = vld [vmem:[%s183 + $0x1c8] sm:$0xff]
        %v272 = vld [vmem:[%s183 + $0x1d0] sm:$0xff]
        %v273 = vld [vmem:[%s183 + $0x1d8] sm:$0xff]
        %v274 = vld [vmem:[%s183 + $0x1e0] sm:$0xff]
        %v275 = vld [vmem:[%s183 + $0x1e8] sm:$0xff]
        %v276 = vld [vmem:[%s183 + $0x1f0] sm:$0xff]
        %v277 = vld [vmem:[%s183 + $0x1f8] sm:$0xff]
        %v278 = vld [vmem:[%s183 + $0x200] sm:$0xff]
        %v279 = vld [vmem:[%s183 + $0x208] sm:$0xff]
        %v280 = vld [vmem:[%s183 + $0x210] sm:$0xff]
        %v281 = vld [vmem:[%s183 + $0x218] sm:$0xff]
        %v282 = vld [vmem:[%s183 + $0x220] sm:$0xff]
        %v283 = vld [vmem:[%s183 + $0x228] sm:$0xff]
        %v284 = vld [vmem:[%s183 + $0x230] sm:$0xff]
        %v285 = vld [vmem:[%s183 + $0x238] sm:$0xff]
        %v286 = vld [vmem:[%s183 + $0x240] sm:$0xff]
        %v287 = vld [vmem:[%s183 + $0x248] sm:$0xff]
        %v288 = vld [vmem:[%s183 + $0x250] sm:$0x33]
        %v289 = vld [vmem:[%s183 + $0x258] sm:$0x33]
        %v292 = vunpack.c.l.b16 %v212
        %v293 = vunpack.c.h.b16 %v212
        %v294 = vunpack.c.l.b16 %v213
        %v295 = vpack.c.b16 %v292, %v292
        %v296 = vpack.c.b16 %v293, %v293
        %v297 = vpack.c.b16 %v294, %v294
        %v376 = vunpack.c.l.b16 %v214
        %v377 = vunpack.c.h.b16 %v214
        %v378 = vunpack.c.l.b16 %v215
        %v379 = vunpack.c.h.b16 %v215
        %v380 = vunpack.c.l.b16 %v216
        %v381 = vunpack.c.h.b16 %v216
        %v382 = vunpack.c.l.b16 %v217
        %v383 = vunpack.c.h.b16 %v217
        %v384 = vunpack.c.l.b16 %v218
        %v385 = vunpack.c.h.b16 %v218
        %v386 = vunpack.c.l.b16 %v219
        %v387 = vunpack.c.h.b16 %v219
        %v388 = vunpack.c.l.b16 %v220
        %v389 = vunpack.c.h.b16 %v220
        %v390 = vunpack.c.l.b16 %v221
        %v391 = vunpack.c.h.b16 %v221
        %v392 = vunpack.c.l.b16 %v222
        %v393 = vunpack.c.h.b16 %v222
        %v394 = vunpack.c.l.b16 %v223
        %v395 = vunpack.c.h.b16 %v223
        %v396 = vunpack.c.l.b16 %v224
        %v397 = vunpack.c.h.b16 %v224
        %v398 = vunpack.c.l.b16 %v225
        %v399 = vunpack.c.h.b16 %v225
        %v400 = vunpack.c.l.b16 %v226
        %v401 = vunpack.c.h.b16 %v226
        %v402 = vunpack.c.l.b16 %v227
        %v403 = vunpack.c.h.b16 %v227
        %v404 = vunpack.c.l.b16 %v228
        %v405 = vunpack.c.h.b16 %v228
        %v406 = vunpack.c.l.b16 %v229
        %v407 = vunpack.c.h.b16 %v229
        %v408 = vunpack.c.l.b16 %v230
        %v409 = vunpack.c.h.b16 %v230
        %v410 = vunpack.c.l.b16 %v231
        %v411 = vunpack.c.h.b16 %v231
        %v412 = vunpack.c.l.b16 %v232
        %v413 = vunpack.c.h.b16 %v232
        %v414 = vunpack.c.l.b16 %v233
        %v415 = vunpack.c.h.b16 %v233
        %v416 = vunpack.c.l.b16 %v234
        %v417 = vunpack.c.h.b16 %v234
        %v418 = vunpack.c.l.b16 %v235
        %v419 = vunpack.c.h.b16 %v235
        %v420 = vunpack.c.l.b16 %v236
        %v421 = vunpack.c.h.b16 %v236
        %v422 = vunpack.c.l.b16 %v237
        %v423 = vunpack.c.h.b16 %v237
        %v424 = vunpack.c.l.b16 %v238
        %v425 = vunpack.c.h.b16 %v238
        %v426 = vunpack.c.l.b16 %v239
        %v427 = vunpack.c.h.b16 %v239
        %v428 = vunpack.c.l.b16 %v240
        %v429 = vunpack.c.h.b16 %v240
        %v430 = vunpack.c.l.b16 %v241
        %v431 = vunpack.c.h.b16 %v241
        %v432 = vunpack.c.l.b16 %v242
        %v433 = vunpack.c.h.b16 %v242
        %v434 = vunpack.c.l.b16 %v243
        %v435 = vunpack.c.h.b16 %v243
        %v436 = vunpack.c.l.b16 %v244
        %v437 = vunpack.c.h.b16 %v244
        %v438 = vunpack.c.l.b16 %v245
        %v439 = vunpack.c.h.b16 %v245
        %v440 = vunpack.c.l.b16 %v246
        %v441 = vunpack.c.h.b16 %v246
        %v442 = vunpack.c.l.b16 %v247
        %v443 = vunpack.c.h.b16 %v247
        %v444 = vunpack.c.l.b16 %v248
        %v445 = vunpack.c.h.b16 %v248
        %v446 = vunpack.c.l.b16 %v249
        %v447 = vunpack.c.h.b16 %v249
        %v448 = vunpack.c.l.b16 %v250
        %v449 = vunpack.c.h.b16 %v250
        %v450 = vunpack.c.l.b16 %v251
        %v451 = vunpack.c.h.b16 %v251
        %v452 = vunpack.c.l.b16 %v252
        %v453 = vunpack.c.h.b16 %v252
        %v454 = vunpack.c.l.b16 %v253
        %v455 = vunpack.c.h.b16 %v253
        %v456 = vunpack.c.l.b16 %v254
        %v457 = vunpack.c.h.b16 %v254
        %v458 = vunpack.c.l.b16 %v255
        %v459 = vunpack.c.h.b16 %v255
        %v460 = vunpack.c.l.b16 %v256
        %v461 = vunpack.c.h.b16 %v256
        %v462 = vunpack.c.l.b16 %v257
        %v463 = vunpack.c.h.b16 %v257
        %v464 = vunpack.c.l.b16 %v258
        %v465 = vunpack.c.h.b16 %v258
        %v466 = vunpack.c.l.b16 %v259
        %v467 = vunpack.c.h.b16 %v259
        %v468 = vunpack.c.l.b16 %v260
        %v469 = vunpack.c.h.b16 %v260
        %v470 = vunpack.c.l.b16 %v261
        %v471 = vunpack.c.h.b16 %v261
        %v472 = vunpack.c.l.b16 %v262
        %v473 = vunpack.c.h.b16 %v262
        %v474 = vunpack.c.l.b16 %v263
        %v475 = vunpack.c.h.b16 %v263
        %v476 = vunpack.c.l.b16 %v264
        %v477 = vunpack.c.h.b16 %v264
        %v478 = vunpack.c.l.b16 %v265
        %v479 = vunpack.c.h.b16 %v265
        %v480 = vunpack.c.l.b16 %v266
        %v481 = vunpack.c.h.b16 %v266
        %v482 = vunpack.c.l.b16 %v267
        %v483 = vunpack.c.h.b16 %v267
        %v484 = vunpack.c.l.b16 %v268
        %v485 = vunpack.c.h.b16 %v268
        %v486 = vunpack.c.l.b16 %v269
        %v487 = vunpack.c.h.b16 %v269
        %v488 = vunpack.c.l.b16 %v270
        %v489 = vunpack.c.h.b16 %v270
        %v490 = vunpack.c.l.b16 %v271
        %v491 = vunpack.c.h.b16 %v271
        %v492 = vunpack.c.l.b16 %v272
        %v493 = vunpack.c.h.b16 %v272
        %v494 = vunpack.c.l.b16 %v273
        %v495 = vunpack.c.h.b16 %v273
        %v496 = vunpack.c.l.b16 %v274
        %v497 = vunpack.c.h.b16 %v274
        %v498 = vunpack.c.l.b16 %v275
        %v499 = vunpack.c.h.b16 %v275
        %v500 = vunpack.c.l.b16 %v276
        %v501 = vunpack.c.h.b16 %v276
        %v502 = vunpack.c.l.b16 %v277
        %v503 = vunpack.c.h.b16 %v277
        %v504 = vunpack.c.l.b16 %v278
        %v505 = vunpack.c.h.b16 %v278
        %v506 = vunpack.c.l.b16 %v279
        %v507 = vunpack.c.h.b16 %v279
        %v508 = vunpack.c.l.b16 %v280
        %v509 = vunpack.c.h.b16 %v280
        %v510 = vunpack.c.l.b16 %v281
        %v511 = vunpack.c.h.b16 %v281
        %v512 = vunpack.c.l.b16 %v282
        %v513 = vunpack.c.h.b16 %v282
        %v514 = vunpack.c.l.b16 %v283
        %v515 = vunpack.c.h.b16 %v283
        %v516 = vunpack.c.l.b16 %v284
        %v517 = vunpack.c.h.b16 %v284
        %v518 = vunpack.c.l.b16 %v285
        %v519 = vunpack.c.h.b16 %v285
        %v520 = vunpack.c.l.b16 %v286
        %v521 = vunpack.c.h.b16 %v286
        %v522 = vunpack.c.l.b16 %v287
        %v523 = vunpack.c.h.b16 %v287
        %v524 = vunpack.c.l.b16 %v288
        %v525 = vunpack.c.h.b16 %v288
        %v526 = vunpack.c.l.b16 %v289
        %v527 = vunpack.c.h.b16 %v289
        %v528 = vpack.c.b16 %v380, %v376
        %v529 = vpack.c.b16 %v381, %v377
        %v530 = vpack.c.b16 %v382, %v378
        %v531 = vpack.c.b16 %v383, %v379
        %v532 = vpack.c.b16 %v388, %v384
        %v533 = vpack.c.b16 %v389, %v385
        %v534 = vpack.c.b16 %v390, %v386
        %v535 = vpack.c.b16 %v391, %v387
        %v536 = vpack.c.b16 %v396, %v392
        %v537 = vpack.c.b16 %v397, %v393
        %v538 = vpack.c.b16 %v398, %v394
        %v539 = vpack.c.b16 %v399, %v395
        %v540 = vpack.c.b16 %v404, %v400
        %v541 = vpack.c.b16 %v405, %v401
        %v542 = vpack.c.b16 %v406, %v402
        %v543 = vpack.c.b16 %v407, %v403
        %v544 = vpack.c.b16 %v412, %v408
        %v545 = vpack.c.b16 %v413, %v409
        %v546 = vpack.c.b16 %v414, %v410
        %v547 = vpack.c.b16 %v415, %v411
        %v548 = vpack.c.b16 %v420, %v416
        %v549 = vpack.c.b16 %v421, %v417
        %v550 = vpack.c.b16 %v422, %v418
        %v551 = vpack.c.b16 %v423, %v419
        %v552 = vpack.c.b16 %v428, %v424
        %v553 = vpack.c.b16 %v429, %v425
        %v554 = vpack.c.b16 %v430, %v426
        %v555 = vpack.c.b16 %v431, %v427
        %v556 = vpack.c.b16 %v436, %v432
        %v557 = vpack.c.b16 %v437, %v433
        %v558 = vpack.c.b16 %v438, %v434
        %v559 = vpack.c.b16 %v439, %v435
        %v560 = vpack.c.b16 %v444, %v440
        %v561 = vpack.c.b16 %v445, %v441
        %v562 = vpack.c.b16 %v446, %v442
        %v563 = vpack.c.b16 %v447, %v443
        %v564 = vpack.c.b16 %v452, %v448
        %v565 = vpack.c.b16 %v453, %v449
        %v566 = vpack.c.b16 %v454, %v450
        %v567 = vpack.c.b16 %v455, %v451
        %v568 = vpack.c.b16 %v460, %v456
        %v569 = vpack.c.b16 %v461, %v457
        %v570 = vpack.c.b16 %v462, %v458
        %v571 = vpack.c.b16 %v463, %v459
        %v572 = vpack.c.b16 %v468, %v464
        %v573 = vpack.c.b16 %v469, %v465
        %v574 = vpack.c.b16 %v470, %v466
        %v575 = vpack.c.b16 %v471, %v467
        %v576 = vpack.c.b16 %v476, %v472
        %v577 = vpack.c.b16 %v477, %v473
        %v578 = vpack.c.b16 %v478, %v474
        %v579 = vpack.c.b16 %v479, %v475
        %v580 = vpack.c.b16 %v484, %v480
        %v581 = vpack.c.b16 %v485, %v481
        %v582 = vpack.c.b16 %v486, %v482
        %v583 = vpack.c.b16 %v487, %v483
        %v584 = vpack.c.b16 %v492, %v488
        %v585 = vpack.c.b16 %v493, %v489
        %v586 = vpack.c.b16 %v494, %v490
        %v587 = vpack.c.b16 %v495, %v491
        %v588 = vpack.c.b16 %v500, %v496
        %v589 = vpack.c.b16 %v501, %v497
        %v590 = vpack.c.b16 %v502, %v498
        %v591 = vpack.c.b16 %v503, %v499
        %v592 = vpack.c.b16 %v508, %v504
        %v593 = vpack.c.b16 %v509, %v505
        %v594 = vpack.c.b16 %v510, %v506
        %v595 = vpack.c.b16 %v511, %v507
        %v596 = vpack.c.b16 %v516, %v512
        %v597 = vpack.c.b16 %v517, %v513
        %v598 = vpack.c.b16 %v518, %v514
        %v599 = vpack.c.b16 %v519, %v515
        %v600 = vpack.c.b16 %v524, %v520
        %v601 = vpack.c.b16 %v525, %v521
        %v602 = vpack.c.b16 %v526, %v522
        %v603 = vpack.c.b16 %v527, %v523
        %vm676 = vcmask 359424
        %v678 = vsel %vm676, %v297, 0
        %vm680 = vcmask 1045504
        %v682 = vsel %vm680, %v600, 0
        %v685 = vsel %vm680, %v601, 0
        %v688 = vsel %vm680, %v602, 0
        %v691 = vsel %vm680, %v603, 0
        %693 = vmatpush.bf16.msra.mxu0 %v556
        %694 = vmatpush.bf16.msra.mxu0 %v552
        %695 = vmatpush.bf16.msra.mxu0 %v548
        %696 = vmatpush.bf16.msra.mxu0 %v544
        %697 = vmatpush.bf16.msra.mxu0 %v540
        %698 = vmatpush.bf16.msra.mxu0 %v536
        %699 = vmatpush.bf16.msra.mxu0 %v532
        %700 = vmatpush.bf16.msra.mxu0 %v528
        %701 = vmatmul.bf16.gmra.mxu0 %v295
        %v702 = vpop.f32.mrf.mxu0
        %v703 = vadd.f32 0.0, %v702
        %v704 = vpop.f32.mrf.mxu0
        %705 = vdwg.mxu0
        %706 = vmatpush.bf16.msra.mxu0 %v588
        %707 = vmatpush.bf16.msra.mxu0 %v584
        %708 = vmatpush.bf16.msra.mxu0 %v580
        %709 = vmatpush.bf16.msra.mxu0 %v576
        %710 = vmatpush.bf16.msra.mxu0 %v572
        %711 = vmatpush.bf16.msra.mxu0 %v568
        %712 = vmatpush.bf16.msra.mxu0 %v564
        %713 = vmatpush.bf16.msra.mxu0 %v560
        %714 = vmatmul.bf16.gmra.mxu0 %v296
        %v715 = vpop.f32.mrf.mxu0
        %v716 = vadd.f32 %v703, %v715
        %v717 = vpop.f32.mrf.mxu0
        %718 = vdwg.mxu0
        %719 = vmatpush.bf16.msra.mxu0 0
        %720 = vmatpush.bf16.msra.mxu0 0
        %721 = vmatpush.bf16.msra.mxu0 0
        %722 = vmatpush.bf16.msra.mxu0 0
        %723 = vmatpush.bf16.msra.mxu0 0
        %724 = vmatpush.bf16.msra.mxu0 %v682
        %725 = vmatpush.bf16.msra.mxu0 %v596
        %726 = vmatpush.bf16.msra.mxu0 %v592
        %727 = vmatmul.bf16.gmra.mxu0 %v678
        %v728 = vpop.f32.mrf.mxu0
        %v729 = vadd.f32 %v716, %v728
        %v730 = vpop.f32.mrf.mxu0
        %731 = vdwg.mxu0
        %732 = vmatpush.bf16.msra.mxu0 %v557
        %733 = vmatpush.bf16.msra.mxu0 %v553
        %734 = vmatpush.bf16.msra.mxu0 %v549
        %735 = vmatpush.bf16.msra.mxu0 %v545
        %736 = vmatpush.bf16.msra.mxu0 %v541
        %737 = vmatpush.bf16.msra.mxu0 %v537
        %738 = vmatpush.bf16.msra.mxu0 %v533
        %739 = vmatpush.bf16.msra.mxu0 %v529
        %740 = vmatmul.bf16.gmra.mxu0 %v295
        %v741 = vpop.f32.mrf.mxu0
        %v742 = vadd.f32 0.0, %v741
        %v743 = vpop.f32.mrf.mxu0
        %744 = vdwg.mxu0
        %745 = vmatpush.bf16.msra.mxu0 %v589
        %746 = vmatpush.bf16.msra.mxu0 %v585
        %747 = vmatpush.bf16.msra.mxu0 %v581
        %748 = vmatpush.bf16.msra.mxu0 %v577
        %749 = vmatpush.bf16.msra.mxu0 %v573
        %750 = vmatpush.bf16.msra.mxu0 %v569
        %751 = vmatpush.bf16.msra.mxu0 %v565
        %752 = vmatpush.bf16.msra.mxu0 %v561
        %753 = vmatmul.bf16.gmra.mxu0 %v296
        %v754 = vpop.f32.mrf.mxu0
        %v755 = vadd.f32 %v742, %v754
        %v756 = vpop.f32.mrf.mxu0
        %757 = vdwg.mxu0
        %758 = vmatpush.bf16.msra.mxu0 0
        %759 = vmatpush.bf16.msra.mxu0 0
        %760 = vmatpush.bf16.msra.mxu0 0
        %761 = vmatpush.bf16.msra.mxu0 0
        %762 = vmatpush.bf16.msra.mxu0 0
        %763 = vmatpush.bf16.msra.mxu0 %v685
        %764 = vmatpush.bf16.msra.mxu0 %v597
        %765 = vmatpush.bf16.msra.mxu0 %v593
        %766 = vmatmul.bf16.gmra.mxu0 %v678
        %v767 = vpop.f32.mrf.mxu0
        %v768 = vadd.f32 %v755, %v767
        %v769 = vpop.f32.mrf.mxu0
        %770 = vdwg.mxu0
        %771 = vmatpush.bf16.msra.mxu0 %v558
        %772 = vmatpush.bf16.msra.mxu0 %v554
        %773 = vmatpush.bf16.msra.mxu0 %v550
        %774 = vmatpush.bf16.msra.mxu0 %v546
        %775 = vmatpush.bf16.msra.mxu0 %v542
        %776 = vmatpush.bf16.msra.mxu0 %v538
        %777 = vmatpush.bf16.msra.mxu0 %v534
        %778 = vmatpush.bf16.msra.mxu0 %v530
        %779 = vmatmul.bf16.gmra.mxu0 %v295
        %v780 = vpop.f32.mrf.mxu0
        %v781 = vadd.f32 0.0, %v780
        %v782 = vpop.f32.mrf.mxu0
        %783 = vdwg.mxu0
        %784 = vmatpush.bf16.msra.mxu0 %v590
        %785 = vmatpush.bf16.msra.mxu0 %v586
        %786 = vmatpush.bf16.msra.mxu0 %v582
        %787 = vmatpush.bf16.msra.mxu0 %v578
        %788 = vmatpush.bf16.msra.mxu0 %v574
        %789 = vmatpush.bf16.msra.mxu0 %v570
        %790 = vmatpush.bf16.msra.mxu0 %v566
        %791 = vmatpush.bf16.msra.mxu0 %v562
        %792 = vmatmul.bf16.gmra.mxu0 %v296
        %v793 = vpop.f32.mrf.mxu0
        %v794 = vadd.f32 %v781, %v793
        %v795 = vpop.f32.mrf.mxu0
        %796 = vdwg.mxu0
        %797 = vmatpush.bf16.msra.mxu0 0
        %798 = vmatpush.bf16.msra.mxu0 0
        %799 = vmatpush.bf16.msra.mxu0 0
        %800 = vmatpush.bf16.msra.mxu0 0
        %801 = vmatpush.bf16.msra.mxu0 0
        %802 = vmatpush.bf16.msra.mxu0 %v688
        %803 = vmatpush.bf16.msra.mxu0 %v598
        %804 = vmatpush.bf16.msra.mxu0 %v594
        %805 = vmatmul.bf16.gmra.mxu0 %v678
        %v806 = vpop.f32.mrf.mxu0
        %v807 = vadd.f32 %v794, %v806
        %v808 = vpop.f32.mrf.mxu0
        %809 = vdwg.mxu0
        %810 = vmatpush.bf16.msra.mxu0 %v559
        %811 = vmatpush.bf16.msra.mxu0 %v555
        %812 = vmatpush.bf16.msra.mxu0 %v551
        %813 = vmatpush.bf16.msra.mxu0 %v547
        %814 = vmatpush.bf16.msra.mxu0 %v543
        %815 = vmatpush.bf16.msra.mxu0 %v539
        %816 = vmatpush.bf16.msra.mxu0 %v535
        %817 = vmatpush.bf16.msra.mxu0 %v531
        %818 = vmatmul.bf16.gmra.mxu0 %v295
        %v819 = vpop.f32.mrf.mxu0
        %v820 = vadd.f32 0.0, %v819
        %v821 = vpop.f32.mrf.mxu0
        %822 = vdwg.mxu0
        %823 = vmatpush.bf16.msra.mxu0 %v591
        %824 = vmatpush.bf16.msra.mxu0 %v587
        %825 = vmatpush.bf16.msra.mxu0 %v583
        %826 = vmatpush.bf16.msra.mxu0 %v579
        %827 = vmatpush.bf16.msra.mxu0 %v575
        %828 = vmatpush.bf16.msra.mxu0 %v571
        %829 = vmatpush.bf16.msra.mxu0 %v567
        %830 = vmatpush.bf16.msra.mxu0 %v563
        %831 = vmatmul.bf16.gmra.mxu0 %v296
        %v832 = vpop.f32.mrf.mxu0
        %v833 = vadd.f32 %v820, %v832
        %v834 = vpop.f32.mrf.mxu0
        %835 = vdwg.mxu0
        %836 = vmatpush.bf16.msra.mxu0 0
        %837 = vmatpush.bf16.msra.mxu0 0
        %838 = vmatpush.bf16.msra.mxu0 0
        %839 = vmatpush.bf16.msra.mxu0 0
        %840 = vmatpush.bf16.msra.mxu0 0
        %841 = vmatpush.bf16.msra.mxu0 %v691
        %842 = vmatpush.bf16.msra.mxu0 %v599
        %843 = vmatpush.bf16.msra.mxu0 %v595
        %844 = vmatmul.bf16.gmra.mxu0 %v678
        %v845 = vpop.f32.mrf.mxu0
        %v846 = vadd.f32 %v833, %v845
        %v847 = vpop.f32.mrf.mxu0
        %848 = vdwg.mxu0
        %p849 = scmp.eq.s32.totalorder %s24, 0
        %p850 = scmp.eq.s32.totalorder %s25, 0
        %p851 = pnand %p849, %p850
        %p852 = pneg %p851
        // Predicated region
        $region37: #{model_forward.3} parent=31 // pred_check
          _
        $region38: #{model_forward.3} parent=31 // pred_check_branch
          %854 = sbr.rel (%p851) target = $region40
        $region39: #{model_forward.3} parent=31 // pred_region
          %vm855 = vcmask 7168
          %856 = vst.msk [vmem:[#allocation2] sm:$0xff] %vm855, 0.0
          %857 = vst.msk [vmem:[#allocation3] sm:$0xff] %vm855, 0.0
          %858 = vst.msk [vmem:[#allocation4] sm:$0xff] %vm855, -inf
        $region40: #{model_forward.3} parent=31 // pred_fallthru
          _
        // Predicated region
        $region41: #{model_forward.3} parent=31 // pred_check
          %p859 = pneg %p849
        $region42: #{model_forward.3} parent=31 // pred_check_branch
          %861 = sbr.rel (%p859) target = $region44
        $region43: #{model_forward.3} parent=31 // pred_region
          %v862 = vld [vmem:[#allocation2] sm:$0xff]
          %v863 = vadd.f32 %v729, %v768
          %v864 = vadd.f32 %v863, %v807
          %v865 = vadd.f32 %v864, %v846
          %866 = vadd.xlane.f32.xlu0 %v865
          %v867 = vpop.xlane.xlu0 %866
          %v868 = vadd.f32 %v862, %v867
          %vm869 = vcmask 7168
          %870 = vst.msk [vmem:[#allocation2] sm:$0xff] %vm869, %v868
          %v871 = vld [vmem:[#allocation3] sm:$0xff]
          %v872 = vmul.f32 %v729, %v729
          %v873 = vmul.f32 %v768, %v768
          %v874 = vmul.f32 %v807, %v807
          %v875 = vmul.f32 %v846, %v846
          %v876 = vadd.f32 %v872, %v873
          %v877 = vadd.f32 %v876, %v874
          %v878 = vadd.f32 %v877, %v875
          %879 = vadd.xlane.f32.xlu0 %v878
          %v880 = vpop.xlane.xlu0 %879
          %v881 = vadd.f32 %v871, %v880
          %882 = vst.msk [vmem:[#allocation3] sm:$0xff] %vm869, %v881
          %v883 = vld [vmem:[#allocation4] sm:$0xff]
          %v884 = vmax.f32 %v729, %v768
          %v885 = vmax.f32 %v807, %v846
          %v886 = vmax.f32 %v884, %v885
          %887 = vmax.xlane.f32.xlu0 %v886
          %v888 = vpop.xlane.xlu0 %887
          %v889 = vmax.f32 %v883, %v888
          %890 = vst.msk [vmem:[#allocation4] sm:$0xff] %vm869, %v889
        $region44: #{model_forward.3} parent=31 // pred_fallthru
          _
        %p891 = scmp.eq.s32.totalorder %s24, 1
        %p892 = pnand %p891, %p850
        %p893 = pneg %p892
        // Predicated region
        $region45: #{model_forward.3} parent=31 // pred_check
          _
        $region46: #{model_forward.3} parent=31 // pred_check_branch
          %895 = sbr.rel (%p892) target = $region48
        $region47: #{model_forward.3} parent=31 // pred_region
          %vm896 = vcmask 7168
          %897 = vst.msk [vmem:[#allocation5] sm:$0xff] %vm896, 0.0
        $region48: #{model_forward.3} parent=31 // pred_fallthru
          _
        // Predicated region
        $region49: #{model_forward.3} parent=31 // pred_check
          %p898 = pneg %p891
        $region50: #{model_forward.3} parent=31 // pred_check_branch
          %900 = sbr.rel (%p898) target = $region52
        $region51: #{model_forward.3} parent=31 // pred_region
          %v901 = vld [vmem:[#allocation5] sm:$0xff]
          %v902 = vld [vmem:[#allocation2] sm:$0xff]
          %v903 = vmul.f32 %v902, 0.0006510417
          %v904 = vld [vmem:[#allocation3] sm:$0xff]
          %v905 = vmul.f32 %v904, 0.0006510417
          %v906 = vmul.f32 %v903, %v903
          %v907 = vsub.f32 %v905, %v906
          %v908 = vadd.f32 %v907, 1e-05
          %v909 = vrsqrt.pop %v908
          %v910 = vmul.f32 %v909, %v908
          %v911 = vmul.f32 %v910, %v909
          %v912 = vmul.f32 0.5, %v911
          %v913 = vsub.f32 1.5, %v912
          %v914 = vmul.f32 %v909, %v913
          %vm915 = vweird.f32 %v908
          %vm916 = vweird.f32 %v909
          %vm917 = vmor %vm915, %vm916
          %v918 = vsel %vm917, %v909, %v914
          %v919 = vld [vmem:[#allocation4] sm:$0xff]
          %v920 = vsub.f32 %v919, %v903
          %v921 = vmul.f32 %v920, %v918
          %923 = vset.pattern.permute.xlu0 0
          %924 = vperm.xlu0 %923, %v903
          %v925 = vpop.permute.xlu0 %924
          %v927 = vsub.f32 %v729, %v925
          %v928 = vsub.f32 %v768, %v925
          %v929 = vsub.f32 %v807, %v925
          %v930 = vsub.f32 %v846, %v925
          %932 = vset.pattern.permute.xlu0 0
          %933 = vperm.xlu0 %932, %v918
          %v934 = vpop.permute.xlu0 %933
          %v936 = vmul.f32 %v927, %v934
          %v937 = vmul.f32 %v928, %v934
          %v938 = vmul.f32 %v929, %v934
          %v939 = vmul.f32 %v930, %v934
          %941 = vset.pattern.permute.xlu0 0
          %942 = vperm.xlu0 %941, %v921
          %v943 = vpop.permute.xlu0 %942
          %v945 = vsub.f32 %v936, %v943
          %v946 = vsub.f32 %v937, %v943
          %v947 = vsub.f32 %v938, %v943
          %v948 = vsub.f32 %v939, %v943
          %v949 = vmul.f32 %v945, 1.442695
          %v950 = vpow.pop %v949
          %v951 = vmul.f32 %v946, 1.442695
          %v952 = vpow.pop %v951
          %v953 = vmul.f32 %v947, 1.442695
          %v954 = vpow.pop %v953
          %v955 = vmul.f32 %v948, 1.442695
          %v956 = vpow.pop %v955
          %v957 = vadd.f32 %v950, %v952
          %v958 = vadd.f32 %v957, %v954
          %v959 = vadd.f32 %v958, %v956
          %960 = vadd.xlane.f32.xlu0 %v959
          %v961 = vpop.xlane.xlu0 %960
          %v962 = vadd.f32 %v901, %v961
          %vm963 = vcmask 7168
          %964 = vst.msk [vmem:[#allocation5] sm:$0xff] %vm963, %v962
        $region52: #{model_forward.3} parent=31 // pred_fallthru
          _
        %p965 = scmp.eq.s32.totalorder %s24, 2
        // Predicated region
        $region53: #{model_forward.3} parent=31 // pred_check
          %p966 = pneg %p965
        $region54: #{model_forward.3} parent=31 // pred_check_branch
          %968 = sbr.rel (%p966) target = $region56
        $region55: #{model_forward.3} parent=31 // pred_region
          %v969 = vld [vmem:[#allocation2] sm:$0xff]
          %v970 = vmul.f32 %v969, 0.0006510417
          %v971 = vld [vmem:[#allocation3] sm:$0xff]
          %v972 = vmul.f32 %v971, 0.0006510417
          %v973 = vmul.f32 %v970, %v970
          %v974 = vsub.f32 %v972, %v973
          %v975 = vadd.f32 %v974, 1e-05
          %v976 = vrsqrt.pop %v975
          %v977 = vmul.f32 %v976, %v975
          %v978 = vmul.f32 %v977, %v976
          %v979 = vmul.f32 0.5, %v978
          %v980 = vsub.f32 1.5, %v979
          %v981 = vmul.f32 %v976, %v980
          %vm982 = vweird.f32 %v975
          %vm983 = vweird.f32 %v976
          %vm984 = vmor %vm982, %vm983
          %v985 = vsel %vm984, %v976, %v981
          %v986 = vld [vmem:[#allocation4] sm:$0xff]
          %v987 = vsub.f32 %v986, %v970
          %v988 = vmul.f32 %v987, %v985
          %990 = vset.pattern.permute.xlu0 0
          %991 = vperm.xlu0 %990, %v970
          %v992 = vpop.permute.xlu0 %991
          %v994 = vsub.f32 %v729, %v992
          %v995 = vsub.f32 %v768, %v992
          %v996 = vsub.f32 %v807, %v992
          %v997 = vsub.f32 %v846, %v992
          %999 = vset.pattern.permute.xlu0 0
          %1000 = vperm.xlu0 %999, %v985
          %v1001 = vpop.permute.xlu0 %1000
          %v1003 = vmul.f32 %v994, %v1001
          %v1004 = vmul.f32 %v995, %v1001
          %v1005 = vmul.f32 %v996, %v1001
          %v1006 = vmul.f32 %v997, %v1001
          %1008 = vset.pattern.permute.xlu0 0
          %1009 = vperm.xlu0 %1008, %v988
          %v1010 = vpop.permute.xlu0 %1009
          %v1012 = vsub.f32 %v1003, %v1010
          %v1013 = vsub.f32 %v1004, %v1010
          %v1014 = vsub.f32 %v1005, %v1010
          %v1015 = vsub.f32 %v1006, %v1010
          %v1016 = vmul.f32 %v1012, 1.442695
          %v1017 = vpow.pop %v1016
          %v1018 = vmul.f32 %v1013, 1.442695
          %v1019 = vpow.pop %v1018
          %v1020 = vmul.f32 %v1014, 1.442695
          %v1021 = vpow.pop %v1020
          %v1022 = vmul.f32 %v1015, 1.442695
          %v1023 = vpow.pop %v1022
          %v1024 = vld [vmem:[#allocation5] sm:$0xff]
          %v1025 = vrcp.pop %v1024
          %v1026 = vmul.f32 %v1024, %v1025
          %v1027 = vsub.f32 1.0, %v1026
          %v1028 = vmul.f32 %v1025, %v1027
          %v1029 = vadd.f32 %v1025, %v1028
          %vm1030 = vweird.f32 %v1024
          %vm1031 = vweird.f32 %v1025
          %vm1032 = vmor %vm1030, %vm1031
          %v1033 = vsel %vm1032, %v1025, %v1029
          %v1034 = vand.u32 2147483647, %v1024
          %vm1035 = vcmp.eq.f32.partialorder %v1034, 8.507059e+37
          %v1036 = vand.u32 %v1024, 2147483648
          %v1037 = vor.u32 1.1754944e-38, %v1036
          %v1038 = vsel %vm1035, %v1037, %v1033
          %v1039 = vmul.f32 1.0, %v1038
          %1041 = vset.pattern.permute.xlu0 0
          %1042 = vperm.xlu0 %1041, %v1039
          %v1043 = vpop.permute.xlu0 %1042
          %v1045 = vmul.f32 %v1017, %v1043
          %v1046 = vmul.f32 %v1019, %v1043
          %v1047 = vmul.f32 %v1021, %v1043
          %v1048 = vmul.f32 %v1023, %v1043
          %v1049 = vld [vmem:[%s0] sm:$0xff]
          %vm1050 = vcmask 64512
          %v1052 = vsel %vm1050, %v1049, 0
          %1054 = vmatpush.msra.mxu0 0.0
          %1055 = vmatpush.msra.mxu0 0.0
          %1056 = vmatpush.msra.mxu0 0.0
          %1057 = vmatpush.msra.mxu0 0.0
          %1058 = vmatpush.msra.mxu0 0.0
          %1059 = vmatpush.msra.mxu0 0.0
          %1060 = vmatpush.msra.mxu0 0.0
          %1061 = vmatpush.msra.mxu0 0.0
          %1062 = vmatpush.msra.mxu0 0.0
          %1063 = vmatpush.msra.mxu0 0.0
          %1064 = vmatpush.msra.mxu0 0.0
          %1065 = vmatpush.msra.mxu0 0.0
          %1066 = vmatpush.msra.mxu0 0.0
          %1067 = vmatpush.msra.mxu0 0.0
          %1068 = vmatpush.msra.mxu0 0.0
          %1069 = vmatpush.msra.mxu0 %v1045
          %1070 = vmatmul.f32.gmra.mxu0 %v1052
          %v1071 = vpop.f32.mrf.mxu0
          %v1072 = vadd.f32 0.0, %v1071
          %1073 = vdwg.mxu0
          %1074 = vmatpush.msra.mxu0 0.0
          %1075 = vmatpush.msra.mxu0 0.0
          %1076 = vmatpush.msra.mxu0 0.0
          %1077 = vmatpush.msra.mxu0 0.0
          %1078 = vmatpush.msra.mxu0 0.0
          %1079 = vmatpush.msra.mxu0 0.0
          %1080 = vmatpush.msra.mxu0 0.0
          %1081 = vmatpush.msra.mxu0 0.0
          %1082 = vmatpush.msra.mxu0 0.0
          %1083 = vmatpush.msra.mxu0 0.0
          %1084 = vmatpush.msra.mxu0 0.0
          %1085 = vmatpush.msra.mxu0 0.0
          %1086 = vmatpush.msra.mxu0 0.0
          %1087 = vmatpush.msra.mxu0 0.0
          %1088 = vmatpush.msra.mxu0 0.0
          %1089 = vmatpush.msra.mxu0 %v1046
          %1090 = vmatmul.f32.gmra.mxu0 %v1052
          %v1091 = vpop.f32.mrf.mxu0
          %v1092 = vadd.f32 0.0, %v1091
          %1093 = vdwg.mxu0
          %1094 = vmatpush.msra.mxu0 0.0
          %1095 = vmatpush.msra.mxu0 0.0
          %1096 = vmatpush.msra.mxu0 0.0
          %1097 = vmatpush.msra.mxu0 0.0
          %1098 = vmatpush.msra.mxu0 0.0
          %1099 = vmatpush.msra.mxu0 0.0
          %1100 = vmatpush.msra.mxu0 0.0
          %1101 = vmatpush.msra.mxu0 0.0
          %1102 = vmatpush.msra.mxu0 0.0
          %1103 = vmatpush.msra.mxu0 0.0
          %1104 = vmatpush.msra.mxu0 0.0
          %1105 = vmatpush.msra.mxu0 0.0
          %1106 = vmatpush.msra.mxu0 0.0
          %1107 = vmatpush.msra.mxu0 0.0
          %1108 = vmatpush.msra.mxu0 0.0
          %1109 = vmatpush.msra.mxu0 %v1047
          %1110 = vmatmul.f32.gmra.mxu0 %v1052
          %v1111 = vpop.f32.mrf.mxu0
          %v1112 = vadd.f32 0.0, %v1111
          %1113 = vdwg.mxu0
          %1114 = vmatpush.msra.mxu0 0.0
          %1115 = vmatpush.msra.mxu0 0.0
          %1116 = vmatpush.msra.mxu0 0.0
          %1117 = vmatpush.msra.mxu0 0.0
          %1118 = vmatpush.msra.mxu0 0.0
          %1119 = vmatpush.msra.mxu0 0.0
          %1120 = vmatpush.msra.mxu0 0.0
          %1121 = vmatpush.msra.mxu0 0.0
          %1122 = vmatpush.msra.mxu0 0.0
          %1123 = vmatpush.msra.mxu0 0.0
          %1124 = vmatpush.msra.mxu0 0.0
          %1125 = vmatpush.msra.mxu0 0.0
          %1126 = vmatpush.msra.mxu0 0.0
          %1127 = vmatpush.msra.mxu0 0.0
          %1128 = vmatpush.msra.mxu0 0.0
          %1129 = vmatpush.msra.mxu0 %v1048
          %1130 = vmatmul.f32.gmra.mxu0 %v1052
          %v1131 = vpop.f32.mrf.mxu0
          %v1132 = vadd.f32 0.0, %v1131
          %1133 = vdwg.mxu0
          %1134 = vst [vmem:[%s206] sm:$0xff] %v1072
          %1135 = vst [vmem:[%s206 + $0x8] sm:$0xff] %v1092
          %1136 = vst [vmem:[%s206 + $0x10] sm:$0xff] %v1112
          %1137 = vst [vmem:[%s206 + $0x18] sm:$0xff] %v1132
        $region56: #{model_forward.3} parent=31 // pred_fallthru
          _
        %s1138 = sand.u32 %s112, 1
        %s1139 = scalar_lea.sflag [#allocation8], %s1138
        %s1140 = sand.u32 %s112, 1
        %s1141 = smul.addr %s1140, 32
        %s1142 = scalar_lea.vmem [#allocation9], %s1141
        // Predicated region
        $region57: #{model_forward.3} parent=31 // pred_check
          %p1143 = pneg %p122
        $region58: #{model_forward.3} parent=31 // pred_check_branch
          %1145 = sbr.rel (%p1143) target = $region60
        $region59: #{model_forward.3} parent=31 // pred_region
          %p1146 = scmp.eq.s32.totalorder %s24, 2
          %s1147 = scalar_select %p1146, %s25, 0
          %s1148 = smul.u32 4, %s1147
          %1150 = vsyncadd %s1139, 0
          %s1151 = smul.addr %s1148, 8
          %s1152 = scalar_lea.hbm %s3, %s1151
          %s1154 = sshll.u32 %s1142, 4
          %s1155 = int_to_ptr.vmem [resolvable:$true] %s1154
          %s1156 = sshll.u32 %s1152, 4
          %s1157 = int_to_ptr.hbm [resolvable:$true] %s1156
          %1159 = dma.vmem_to_hbm [thread:$0]  %s1155, 512, %s1157, %s1139
        $region60: #{model_forward.3} parent=31 // pred_fallthru
          _
      $region32: #{model_forward.3} parent=5 // pred_fallthru
        _
      %p1160 = scmp.le.s32.totalorder 2, %s15
      // Predicated region
      $region61: #{model_forward.3} parent=5 // pred_check
        %p1161 = pneg %p1160
      $region62: #{model_forward.3} parent=5 // pred_check_branch
        %1163 = sbr.rel (%p1161) target = $region64
      $region63: #{model_forward.3} parent=5 // pred_region
        %s1164 = ssub.s32 %s15, 2
        // Predicated region
        $region65: #{model_forward.3} parent=63 // pred_check
          %p1165 = pneg %p128
        $region66: #{model_forward.3} parent=63 // pred_check_branch
          %1167 = sbr.rel (%p1165) target = $region68
        $region67: #{model_forward.3} parent=63 // pred_region
          %s1168 = sand.u32 %s113, 1
          %s1169 = scalar_lea.sflag [#allocation8], %s1168
          %s1170 = sand.u32 %s113, 1
          %s1171 = smul.addr %s1170, 32
          %s1172 = scalar_lea.vmem [#allocation9], %s1171
          %1174 = dma.done %s1169, 512
        $region68: #{model_forward.3} parent=63 // pred_fallthru
          _
      $region64: #{model_forward.3} parent=5 // pred_fallthru
        _
    $region6: #{model_forward.3} parent=1 // loop_footer
      %s19 = sadd.s32 1, %s15
    $region7: #{model_forward.3} parent=1 // loop_footer_branch
      %14 = sbr.rel target = $region3
    $region8: #{model_forward.3} parent=1 // loop_exit
      _
    %1175 = vsyncpa [#allocation7], 1
    %s1176 = scalar_lea.sflag [#allocation7], 1
    %1177 = vsyncpa %s1176, 1
    %1178 = vsyncpa [#allocation8], 1
    %s1179 = scalar_lea.sflag [#allocation8], 1
    %1180 = vsyncpa %s1179, 1

// kernel: model_forward.2
$region0: #{model_forward.2}
  #allocation0 [shape = 'u32[]', space=smem, size = 0x4, offset = 0x4, fixed_abs, tag = 'smem constant byte address 0x4 - core index']
  #allocation1 [shape = 'u32[72,128]{1,0:T(1,128)}', space=vmem, size = 0x9000, scoped, tag = 'internal scratch']
  #allocation2 [shape = 'f32[8,64]{1,0:T(8,128)}', space=vmem, size = 0x1000, scoped, tag = 'scratch operand']
  %s0 = inlined_call_operand.vmem [shape: f32[8,1536], index: 0, kind: input, shape index: {}]
  %s1 = inlined_call_operand.vmem [shape: bf16[1536,64], index: 1, kind: input, shape index: {}]
  %s2 = inlined_call_operand.vmem [shape: f32[1,64], index: 2, kind: input, shape index: {}]
  %s3 = inlined_call_operand.vmem [shape: f32[64,64], index: 3, kind: input, shape index: {}]
  %s4 = inlined_call_operand.vmem [shape: f32[1,64], index: 4, kind: input, shape index: {}]
  %s5 = inlined_call_operand.vmem [shape: f32[64,2], index: 5, kind: input, shape index: {}]
  %s6 = inlined_call_operand.vmem [shape: f32[1,2], index: 6, kind: input, shape index: {}]
  %s7 = inlined_call_operand.vmem [shape: f32[64,2], index: 7, kind: input, shape index: {}]
  %s8 = inlined_call_operand.vmem [shape: f32[1,2], index: 8, kind: input, shape index: {}]
  %s9 = inlined_call_operand.vmem [shape: f32[8,2], index: 9, kind: input, shape index: {}]
  %s10 = inlined_call_operand.vmem [shape: f32[8,2], index: 10, kind: input, shape index: {}]
  %s11 = inlined_call_operand.vmem [shape: f32[2,100], index: 11, kind: input, shape index: {}]
  %s12 = inlined_call_operand.vmem [shape: f32[1,100], index: 12, kind: input, shape index: {}]
  %s13 = inlined_call_operand.vmem [shape: f32[100,100], index: 13, kind: input, shape index: {}]
  %s14 = inlined_call_operand.vmem [shape: f32[1,100], index: 14, kind: input, shape index: {}]
  %s15 = inlined_call_operand.vmem [shape: f32[100,300], index: 15, kind: input, shape index: {}]
  %s16 = inlined_call_operand.vmem [shape: f32[1,300], index: 16, kind: input, shape index: {}]
  %s17 = inlined_call_operand.vmem [shape: f32[8,2], index: 17, kind: output, shape index: {0}]
  %s18 = inlined_call_operand.vmem [shape: f32[8,2], index: 18, kind: output, shape index: {1}]
  %s19 = inlined_call_operand.vmem [shape: f32[8,2], index: 19, kind: output, shape index: {2}]
  %s20 = inlined_call_operand.vmem [shape: f32[8,8], index: 20, kind: output, shape index: {3}]
  %s21 = inlined_call_operand.vmem [shape: bf16[8,300], index: 21, kind: output, shape index: {4}]
  %22 = xla_tuple %s17, %s18, %s19, %s20, %s21
  %s23 = sld [smem:[#allocation0]]
  $region141: #{model_forward.2} parent=0
    _
  %s25 = ssub.s32 1, %s23
  %s26 = scalar_select 0, %s25, %s23
  loop: start=0, step=1, limit=5
  $region2: #{model_forward.2} parent=0 // loop_pre_header
    _
  $region3: #{model_forward.2} parent=0 // loop_header
    %s28 = sphi 0, %s32
    %p29 = scmp.ge.s32.totalorder %s28, 5
    %s38 = sphi 0, %s40
    %s41 = sphi 0, %s38
    %s42 = sphi 0, %s41
    %s58 = sphi 0, %s42
    %s64 = sphi 0, %s66
    %s67 = sphi 0, %s64
    %s68 = sphi 0, %s67
    %s84 = sphi 0, %s68
    %s88 = sphi 0, %s88
    %s90 = sphi 0, %s88
    %s91 = sphi 0, %s90
    %s105 = sphi 0, %s91
    %s109 = sphi 0, %s109
    %s111 = sphi 0, %s109
    %s112 = sphi 0, %s111
    %s126 = sphi 0, %s112
    %s130 = sphi 0, %s130
    %s132 = sphi 0, %s130
    %s133 = sphi 0, %s132
    %s147 = sphi 0, %s133
    %s151 = sphi 0, %s151
    %s153 = sphi 0, %s151
    %s154 = sphi 0, %s153
    %s168 = sphi 0, %s154
    %s172 = sphi 0, %s172
    %s174 = sphi 0, %s172
    %s175 = sphi 0, %s174
    %s189 = sphi 0, %s175
    %s193 = sphi 0, %s193
    %s195 = sphi 0, %s193
    %s196 = sphi 0, %s195
    %s210 = sphi 0, %s196
    %s214 = sphi 0, %s214
    %s216 = sphi 0, %s214
    %s217 = sphi 0, %s216
    %s231 = sphi 0, %s217
    %s235 = sphi 0, %s235
    %s237 = sphi 0, %s235
    %s238 = sphi 0, %s237
    %s252 = sphi 0, %s238
    %s256 = sphi 0, %s256
    %s258 = sphi 0, %s256
    %s259 = sphi 0, %s258
    %s273 = sphi 0, %s259
    %s277 = sphi 0, %s277
    %s279 = sphi 0, %s277
    %s280 = sphi 0, %s279
    %s294 = sphi 0, %s280
    %s298 = sphi 0, %s298
    %s300 = sphi 0, %s298
    %s301 = sphi 0, %s300
    %s315 = sphi 0, %s301
    %s319 = sphi 0, %s319
    %s321 = sphi 0, %s319
    %s322 = sphi 0, %s321
    %s336 = sphi 0, %s322
    %s340 = sphi 0, %s340
    %s342 = sphi 0, %s340
    %s343 = sphi 0, %s342
    %s357 = sphi 0, %s343
    %s361 = sphi 0, %s361
    %s363 = sphi 0, %s361
    %s364 = sphi 0, %s363
    %s378 = sphi 0, %s364
    %s382 = sphi 0, %s382
    %s384 = sphi 0, %s382
    %s385 = sphi 0, %s384
    %s399 = sphi 0, %s385
    %s403 = sphi 0, %s403
    %s405 = sphi 0, %s403
    %s406 = sphi 0, %s405
    %s420 = sphi 0, %s406
    %s424 = sphi 0, %s424
    %s426 = sphi 0, %s424
    %s427 = sphi 0, %s426
    %s441 = sphi 0, %s427
    %s445 = sphi 0, %s445
    %s447 = sphi 0, %s445
    %s448 = sphi 0, %s447
    %s462 = sphi 0, %s448
    %s466 = sphi 0, %s466
    %s468 = sphi 0, %s466
    %s469 = sphi 0, %s468
    %s483 = sphi 0, %s469
    %s487 = sphi 0, %s487
    %s489 = sphi 0, %s487
    %s490 = sphi 0, %s489
    %s504 = sphi 0, %s490
  $region4: #{model_forward.2} parent=0 // loop_header_branch
    %31 = sbr.rel (%p29) target = $region8
  $region5: #{model_forward.2} parent=0 // loop_body
    %s33 = ssub.s32 %s28, 1
    %s34 = ssub.s32 %s28, 2
    %s35 = sadd.s32 %s28, 1
    %s36 = ssub.s32 %s28, %s35
    %p37 = scmp.eq.s32.totalorder %s36, 0
    %s39 = sadd.s32 %s38, 1
    %s40 = scalar_select %p37, %s38, %s39
    %p43 = pneg %p37
    %p44 = scmp.eq.s32.totalorder %s28, 2
    %p45 = por %p43, %p44
    %p46 = scmp.ne.s32.totalorder %s38, %s41
    %p47 = scmp.eq.s32.totalorder %s28, 0
    %p48 = por %p46, %p47
    %p49 = scmp.ne.s32.totalorder %s38, %s41
    %p50 = scmp.eq.s32.totalorder %s33, 2
    %p51 = por %p49, %p50
    %p52 = scmp.ne.s32.totalorder %s41, %s42
    %p53 = scmp.eq.s32.totalorder %s33, 0
    %p54 = por %p52, %p53
    %p55 = scmp.ne.s32.totalorder %s41, %s42
    %p56 = scmp.eq.s32.totalorder %s34, 2
    %p57 = por %p55, %p56
    %p59 = scmp.ne.s32.totalorder %s42, %s58
    %p60 = scmp.eq.s32.totalorder %s34, 0
    %p61 = por %p59, %p60
    %s62 = ssub.s32 %s28, %s35
    %p63 = scmp.eq.s32.totalorder %s62, 0
    %s65 = sadd.s32 %s64, 1
    %s66 = scalar_select %p63, %s64, %s65
    %p69 = pneg %p63
    %p70 = scmp.eq.s32.totalorder %s28, 2
    %p71 = por %p69, %p70
    %p72 = scmp.ne.s32.totalorder %s64, %s67
    %p73 = scmp.eq.s32.totalorder %s28, 0
    %p74 = por %p72, %p73
    %p75 = scmp.ne.s32.totalorder %s64, %s67
    %p76 = scmp.eq.s32.totalorder %s33, 2
    %p77 = por %p75, %p76
    %p78 = scmp.ne.s32.totalorder %s67, %s68
    %p79 = scmp.eq.s32.totalorder %s33, 0
    %p80 = por %p78, %p79
    %p81 = scmp.ne.s32.totalorder %s67, %s68
    %p82 = scmp.eq.s32.totalorder %s34, 2
    %p83 = por %p81, %p82
    %p85 = scmp.ne.s32.totalorder %s68, %s84
    %p86 = scmp.eq.s32.totalorder %s34, 0
    %p87 = por %p85, %p86
    %s89 = sadd.s32 %s88, 1
    %p92 = scmp.eq.s32.totalorder %s28, 2
    %p93 = scmp.ne.s32.totalorder %s88, %s90
    %p94 = scmp.eq.s32.totalorder %s28, 0
    %p95 = por %p93, %p94
    %p96 = scmp.ne.s32.totalorder %s88, %s90
    %p97 = scmp.eq.s32.totalorder %s33, 2
    %p98 = por %p96, %p97
    %p99 = scmp.ne.s32.totalorder %s90, %s91
    %p100 = scmp.eq.s32.totalorder %s33, 0
    %p101 = por %p99, %p100
    %p102 = scmp.ne.s32.totalorder %s90, %s91
    %p103 = scmp.eq.s32.totalorder %s34, 2
    %p104 = por %p102, %p103
    %p106 = scmp.ne.s32.totalorder %s91, %s105
    %p107 = scmp.eq.s32.totalorder %s34, 0
    %p108 = por %p106, %p107
    %s110 = sadd.s32 %s109, 1
    %p113 = scmp.eq.s32.totalorder %s28, 2
    %p114 = scmp.ne.s32.totalorder %s109, %s111
    %p115 = scmp.eq.s32.totalorder %s28, 0
    %p116 = por %p114, %p115
    %p117 = scmp.ne.s32.totalorder %s109, %s111
    %p118 = scmp.eq.s32.totalorder %s33, 2
    %p119 = por %p117, %p118
    %p120 = scmp.ne.s32.totalorder %s111, %s112
    %p121 = scmp.eq.s32.totalorder %s33, 0
    %p122 = por %p120, %p121
    %p123 = scmp.ne.s32.totalorder %s111, %s112
    %p124 = scmp.eq.s32.totalorder %s34, 2
    %p125 = por %p123, %p124
    %p127 = scmp.ne.s32.totalorder %s112, %s126
    %p128 = scmp.eq.s32.totalorder %s34, 0
    %p129 = por %p127, %p128
    %s131 = sadd.s32 %s130, 1
    %p134 = scmp.eq.s32.totalorder %s28, 2
    %p135 = scmp.ne.s32.totalorder %s130, %s132
    %p136 = scmp.eq.s32.totalorder %s28, 0
    %p137 = por %p135, %p136
    %p138 = scmp.ne.s32.totalorder %s130, %s132
    %p139 = scmp.eq.s32.totalorder %s33, 2
    %p140 = por %p138, %p139
    %p141 = scmp.ne.s32.totalorder %s132, %s133
    %p142 = scmp.eq.s32.totalorder %s33, 0
    %p143 = por %p141, %p142
    %p144 = scmp.ne.s32.totalorder %s132, %s133
    %p145 = scmp.eq.s32.totalorder %s34, 2
    %p146 = por %p144, %p145
    %p148 = scmp.ne.s32.totalorder %s133, %s147
    %p149 = scmp.eq.s32.totalorder %s34, 0
    %p150 = por %p148, %p149
    %s152 = sadd.s32 %s151, 1
    %p155 = scmp.eq.s32.totalorder %s28, 2
    %p156 = scmp.ne.s32.totalorder %s151, %s153
    %p157 = scmp.eq.s32.totalorder %s28, 0
    %p158 = por %p156, %p157
    %p159 = scmp.ne.s32.totalorder %s151, %s153
    %p160 = scmp.eq.s32.totalorder %s33, 2
    %p161 = por %p159, %p160
    %p162 = scmp.ne.s32.totalorder %s153, %s154
    %p163 = scmp.eq.s32.totalorder %s33, 0
    %p164 = por %p162, %p163
    %p165 = scmp.ne.s32.totalorder %s153, %s154
    %p166 = scmp.eq.s32.totalorder %s34, 2
    %p167 = por %p165, %p166
    %p169 = scmp.ne.s32.totalorder %s154, %s168
    %p170 = scmp.eq.s32.totalorder %s34, 0
    %p171 = por %p169, %p170
    %s173 = sadd.s32 %s172, 1
    %p176 = scmp.eq.s32.totalorder %s28, 2
    %p177 = scmp.ne.s32.totalorder %s172, %s174
    %p178 = scmp.eq.s32.totalorder %s28, 0
    %p179 = por %p177, %p178
    %p180 = scmp.ne.s32.totalorder %s172, %s174
    %p181 = scmp.eq.s32.totalorder %s33, 2
    %p182 = por %p180, %p181
    %p183 = scmp.ne.s32.totalorder %s174, %s175
    %p184 = scmp.eq.s32.totalorder %s33, 0
    %p185 = por %p183, %p184
    %p186 = scmp.ne.s32.totalorder %s174, %s175
    %p187 = scmp.eq.s32.totalorder %s34, 2
    %p188 = por %p186, %p187
    %p190 = scmp.ne.s32.totalorder %s175, %s189
    %p191 = scmp.eq.s32.totalorder %s34, 0
    %p192 = por %p190, %p191
    %s194 = sadd.s32 %s193, 1
    %p197 = scmp.eq.s32.totalorder %s28, 2
    %p198 = scmp.ne.s32.totalorder %s193, %s195
    %p199 = scmp.eq.s32.totalorder %s28, 0
    %p200 = por %p198, %p199
    %p201 = scmp.ne.s32.totalorder %s193, %s195
    %p202 = scmp.eq.s32.totalorder %s33, 2
    %p203 = por %p201, %p202
    %p204 = scmp.ne.s32.totalorder %s195, %s196
    %p205 = scmp.eq.s32.totalorder %s33, 0
    %p206 = por %p204, %p205
    %p207 = scmp.ne.s32.totalorder %s195, %s196
    %p208 = scmp.eq.s32.totalorder %s34, 2
    %p209 = por %p207, %p208
    %p211 = scmp.ne.s32.totalorder %s196, %s210
    %p212 = scmp.eq.s32.totalorder %s34, 0
    %p213 = por %p211, %p212
    %s215 = sadd.s32 %s214, 1
    %p218 = scmp.eq.s32.totalorder %s28, 2
    %p219 = scmp.ne.s32.totalorder %s214, %s216
    %p220 = scmp.eq.s32.totalorder %s28, 0
    %p221 = por %p219, %p220
    %p222 = scmp.ne.s32.totalorder %s214, %s216
    %p223 = scmp.eq.s32.totalorder %s33, 2
    %p224 = por %p222, %p223
    %p225 = scmp.ne.s32.totalorder %s216, %s217
    %p226 = scmp.eq.s32.totalorder %s33, 0
    %p227 = por %p225, %p226
    %p228 = scmp.ne.s32.totalorder %s216, %s217
    %p229 = scmp.eq.s32.totalorder %s34, 2
    %p230 = por %p228, %p229
    %p232 = scmp.ne.s32.totalorder %s217, %s231
    %p233 = scmp.eq.s32.totalorder %s34, 0
    %p234 = por %p232, %p233
    %s236 = sadd.s32 %s235, 1
    %p239 = scmp.eq.s32.totalorder %s28, 2
    %p240 = scmp.ne.s32.totalorder %s235, %s237
    %p241 = scmp.eq.s32.totalorder %s28, 0
    %p242 = por %p240, %p241
    %p243 = scmp.ne.s32.totalorder %s235, %s237
    %p244 = scmp.eq.s32.totalorder %s33, 2
    %p245 = por %p243, %p244
    %p246 = scmp.ne.s32.totalorder %s237, %s238
    %p247 = scmp.eq.s32.totalorder %s33, 0
    %p248 = por %p246, %p247
    %p249 = scmp.ne.s32.totalorder %s237, %s238
    %p250 = scmp.eq.s32.totalorder %s34, 2
    %p251 = por %p249, %p250
    %p253 = scmp.ne.s32.totalorder %s238, %s252
    %p254 = scmp.eq.s32.totalorder %s34, 0
    %p255 = por %p253, %p254
    %s257 = sadd.s32 %s256, 1
    %p260 = scmp.eq.s32.totalorder %s28, 2
    %p261 = scmp.ne.s32.totalorder %s256, %s258
    %p262 = scmp.eq.s32.totalorder %s28, 0
    %p263 = por %p261, %p262
    %p264 = scmp.ne.s32.totalorder %s256, %s258
    %p265 = scmp.eq.s32.totalorder %s33, 2
    %p266 = por %p264, %p265
    %p267 = scmp.ne.s32.totalorder %s258, %s259
    %p268 = scmp.eq.s32.totalorder %s33, 0
    %p269 = por %p267, %p268
    %p270 = scmp.ne.s32.totalorder %s258, %s259
    %p271 = scmp.eq.s32.totalorder %s34, 2
    %p272 = por %p270, %p271
    %p274 = scmp.ne.s32.totalorder %s259, %s273
    %p275 = scmp.eq.s32.totalorder %s34, 0
    %p276 = por %p274, %p275
    %s278 = sadd.s32 %s277, 1
    %p281 = scmp.eq.s32.totalorder %s28, 2
    %p282 = scmp.ne.s32.totalorder %s277, %s279
    %p283 = scmp.eq.s32.totalorder %s28, 0
    %p284 = por %p282, %p283
    %p285 = scmp.ne.s32.totalorder %s277, %s279
    %p286 = scmp.eq.s32.totalorder %s33, 2
    %p287 = por %p285, %p286
    %p288 = scmp.ne.s32.totalorder %s279, %s280
    %p289 = scmp.eq.s32.totalorder %s33, 0
    %p290 = por %p288, %p289
    %p291 = scmp.ne.s32.totalorder %s279, %s280
    %p292 = scmp.eq.s32.totalorder %s34, 2
    %p293 = por %p291, %p292
    %p295 = scmp.ne.s32.totalorder %s280, %s294
    %p296 = scmp.eq.s32.totalorder %s34, 0
    %p297 = por %p295, %p296
    %s299 = sadd.s32 %s298, 1
    %p302 = scmp.eq.s32.totalorder %s28, 2
    %p303 = scmp.ne.s32.totalorder %s298, %s300
    %p304 = scmp.eq.s32.totalorder %s28, 0
    %p305 = por %p303, %p304
    %p306 = scmp.ne.s32.totalorder %s298, %s300
    %p307 = scmp.eq.s32.totalorder %s33, 2
    %p308 = por %p306, %p307
    %p309 = scmp.ne.s32.totalorder %s300, %s301
    %p310 = scmp.eq.s32.totalorder %s33, 0
    %p311 = por %p309, %p310
    %p312 = scmp.ne.s32.totalorder %s300, %s301
    %p313 = scmp.eq.s32.totalorder %s34, 2
    %p314 = por %p312, %p313
    %p316 = scmp.ne.s32.totalorder %s301, %s315
    %p317 = scmp.eq.s32.totalorder %s34, 0
    %p318 = por %p316, %p317
    %s320 = sadd.s32 %s319, 1
    %p323 = scmp.eq.s32.totalorder %s28, 2
    %p324 = scmp.ne.s32.totalorder %s319, %s321
    %p325 = scmp.eq.s32.totalorder %s28, 0
    %p326 = por %p324, %p325
    %p327 = scmp.ne.s32.totalorder %s319, %s321
    %p328 = scmp.eq.s32.totalorder %s33, 2
    %p329 = por %p327, %p328
    %p330 = scmp.ne.s32.totalorder %s321, %s322
    %p331 = scmp.eq.s32.totalorder %s33, 0
    %p332 = por %p330, %p331
    %p333 = scmp.ne.s32.totalorder %s321, %s322
    %p334 = scmp.eq.s32.totalorder %s34, 2
    %p335 = por %p333, %p334
    %p337 = scmp.ne.s32.totalorder %s322, %s336
    %p338 = scmp.eq.s32.totalorder %s34, 0
    %p339 = por %p337, %p338
    %s341 = sadd.s32 %s340, 1
    %p344 = scmp.eq.s32.totalorder %s28, 2
    %p345 = scmp.ne.s32.totalorder %s340, %s342
    %p346 = scmp.eq.s32.totalorder %s28, 0
    %p347 = por %p345, %p346
    %p348 = scmp.ne.s32.totalorder %s340, %s342
    %p349 = scmp.eq.s32.totalorder %s33, 2
    %p350 = por %p348, %p349
    %p351 = scmp.ne.s32.totalorder %s342, %s343
    %p352 = scmp.eq.s32.totalorder %s33, 0
    %p353 = por %p351, %p352
    %p354 = scmp.ne.s32.totalorder %s342, %s343
    %p355 = scmp.eq.s32.totalorder %s34, 2
    %p356 = por %p354, %p355
    %p358 = scmp.ne.s32.totalorder %s343, %s357
    %p359 = scmp.eq.s32.totalorder %s34, 0
    %p360 = por %p358, %p359
    %s362 = sadd.s32 %s361, 1
    %p365 = scmp.eq.s32.totalorder %s28, 2
    %p366 = scmp.ne.s32.totalorder %s361, %s363
    %p367 = scmp.eq.s32.totalorder %s28, 0
    %p368 = por %p366, %p367
    %p369 = scmp.ne.s32.totalorder %s361, %s363
    %p370 = scmp.eq.s32.totalorder %s33, 2
    %p371 = por %p369, %p370
    %p372 = scmp.ne.s32.totalorder %s363, %s364
    %p373 = scmp.eq.s32.totalorder %s33, 0
    %p374 = por %p372, %p373
    %p375 = scmp.ne.s32.totalorder %s363, %s364
    %p376 = scmp.eq.s32.totalorder %s34, 2
    %p377 = por %p375, %p376
    %p379 = scmp.ne.s32.totalorder %s364, %s378
    %p380 = scmp.eq.s32.totalorder %s34, 0
    %p381 = por %p379, %p380
    %s383 = sadd.s32 %s382, 1
    %p386 = scmp.eq.s32.totalorder %s28, 2
    %p387 = scmp.ne.s32.totalorder %s382, %s384
    %p388 = scmp.eq.s32.totalorder %s28, 0
    %p389 = por %p387, %p388
    %p390 = scmp.ne.s32.totalorder %s382, %s384
    %p391 = scmp.eq.s32.totalorder %s33, 2
    %p392 = por %p390, %p391
    %p393 = scmp.ne.s32.totalorder %s384, %s385
    %p394 = scmp.eq.s32.totalorder %s33, 0
    %p395 = por %p393, %p394
    %p396 = scmp.ne.s32.totalorder %s384, %s385
    %p397 = scmp.eq.s32.totalorder %s34, 2
    %p398 = por %p396, %p397
    %p400 = scmp.ne.s32.totalorder %s385, %s399
    %p401 = scmp.eq.s32.totalorder %s34, 0
    %p402 = por %p400, %p401
    %s404 = sadd.s32 %s403, 1
    %p407 = scmp.eq.s32.totalorder %s28, 2
    %p408 = scmp.ne.s32.totalorder %s403, %s405
    %p409 = scmp.eq.s32.totalorder %s28, 0
    %p410 = por %p408, %p409
    %p411 = scmp.ne.s32.totalorder %s403, %s405
    %p412 = scmp.eq.s32.totalorder %s33, 2
    %p413 = por %p411, %p412
    %p414 = scmp.ne.s32.totalorder %s405, %s406
    %p415 = scmp.eq.s32.totalorder %s33, 0
    %p416 = por %p414, %p415
    %p417 = scmp.ne.s32.totalorder %s405, %s406
    %p418 = scmp.eq.s32.totalorder %s34, 2
    %p419 = por %p417, %p418
    %p421 = scmp.ne.s32.totalorder %s406, %s420
    %p422 = scmp.eq.s32.totalorder %s34, 0
    %p423 = por %p421, %p422
    %s425 = sadd.s32 %s424, 1
    %p428 = scmp.eq.s32.totalorder %s28, 2
    %p429 = scmp.ne.s32.totalorder %s424, %s426
    %p430 = scmp.eq.s32.totalorder %s28, 0
    %p431 = por %p429, %p430
    %p432 = scmp.ne.s32.totalorder %s424, %s426
    %p433 = scmp.eq.s32.totalorder %s33, 2
    %p434 = por %p432, %p433
    %p435 = scmp.ne.s32.totalorder %s426, %s427
    %p436 = scmp.eq.s32.totalorder %s33, 0
    %p437 = por %p435, %p436
    %p438 = scmp.ne.s32.totalorder %s426, %s427
    %p439 = scmp.eq.s32.totalorder %s34, 2
    %p440 = por %p438, %p439
    %p442 = scmp.ne.s32.totalorder %s427, %s441
    %p443 = scmp.eq.s32.totalorder %s34, 0
    %p444 = por %p442, %p443
    %s446 = sadd.s32 %s445, 1
    %p449 = scmp.eq.s32.totalorder %s28, 2
    %p450 = scmp.ne.s32.totalorder %s445, %s447
    %p451 = scmp.eq.s32.totalorder %s28, 0
    %p452 = por %p450, %p451
    %p453 = scmp.ne.s32.totalorder %s445, %s447
    %p454 = scmp.eq.s32.totalorder %s33, 2
    %p455 = por %p453, %p454
    %p456 = scmp.ne.s32.totalorder %s447, %s448
    %p457 = scmp.eq.s32.totalorder %s33, 0
    %p458 = por %p456, %p457
    %p459 = scmp.ne.s32.totalorder %s447, %s448
    %p460 = scmp.eq.s32.totalorder %s34, 2
    %p461 = por %p459, %p460
    %p463 = scmp.ne.s32.totalorder %s448, %s462
    %p464 = scmp.eq.s32.totalorder %s34, 0
    %p465 = por %p463, %p464
    %s467 = sadd.s32 %s466, 1
    %p470 = scmp.eq.s32.totalorder %s28, 2
    %p471 = scmp.ne.s32.totalorder %s466, %s468
    %p472 = scmp.eq.s32.totalorder %s28, 0
    %p473 = por %p471, %p472
    %p474 = scmp.ne.s32.totalorder %s466, %s468
    %p475 = scmp.eq.s32.totalorder %s33, 2
    %p476 = por %p474, %p475
    %p477 = scmp.ne.s32.totalorder %s468, %s469
    %p478 = scmp.eq.s32.totalorder %s33, 0
    %p479 = por %p477, %p478
    %p480 = scmp.ne.s32.totalorder %s468, %s469
    %p481 = scmp.eq.s32.totalorder %s34, 2
    %p482 = por %p480, %p481
    %p484 = scmp.ne.s32.totalorder %s469, %s483
    %p485 = scmp.eq.s32.totalorder %s34, 0
    %p486 = por %p484, %p485
    %s488 = sadd.s32 %s487, 1
    %p491 = scmp.eq.s32.totalorder %s28, 2
    %p492 = scmp.ne.s32.totalorder %s487, %s489
    %p493 = scmp.eq.s32.totalorder %s28, 0
    %p494 = por %p492, %p493
    %p495 = scmp.ne.s32.totalorder %s487, %s489
    %p496 = scmp.eq.s32.totalorder %s33, 2
    %p497 = por %p495, %p496
    %p498 = scmp.ne.s32.totalorder %s489, %s490
    %p499 = scmp.eq.s32.totalorder %s33, 0
    %p500 = por %p498, %p499
    %p501 = scmp.ne.s32.totalorder %s489, %s490
    %p502 = scmp.eq.s32.totalorder %s34, 2
    %p503 = por %p501, %p502
    %p505 = scmp.ne.s32.totalorder %s490, %s504
    %p506 = scmp.eq.s32.totalorder %s34, 0
    %p507 = por %p505, %p506
    %p508 = scmp.le.s32.totalorder 1, %s28
    %p509 = scmp.lt.s32.totalorder %s28, 4
    %p510 = pnand %p508, %p509
    %p511 = pneg %p510
    // Predicated region
    $region9: #{model_forward.2} parent=5 // pred_check
      _
    $region10: #{model_forward.2} parent=5 // pred_check_branch
      %513 = sbr.rel (%p510) target = $region12
    $region11: #{model_forward.2} parent=5 // pred_region
      %s514 = ssub.s32 %s28, 1
      // Predicated region
      $region13: #{model_forward.2} parent=11 // pred_check
        %p515 = pneg %p101
      $region14: #{model_forward.2} parent=11 // pred_check_branch
        %517 = sbr.rel (%p515) target = $region16
      $region15: #{model_forward.2} parent=11 // pred_region
        _
      $region16: #{model_forward.2} parent=11 // pred_fallthru
        _
      // Predicated region
      $region17: #{model_forward.2} parent=11 // pred_check
        %p518 = pneg %p122
      $region18: #{model_forward.2} parent=11 // pred_check_branch
        %520 = sbr.rel (%p518) target = $region20
      $region19: #{model_forward.2} parent=11 // pred_region
        _
      $region20: #{model_forward.2} parent=11 // pred_fallthru
        _
      // Predicated region
      $region21: #{model_forward.2} parent=11 // pred_check
        %p521 = pneg %p143
      $region22: #{model_forward.2} parent=11 // pred_check_branch
        %523 = sbr.rel (%p521) target = $region24
      $region23: #{model_forward.2} parent=11 // pred_region
        _
      $region24: #{model_forward.2} parent=11 // pred_fallthru
        _
      // Predicated region
      $region25: #{model_forward.2} parent=11 // pred_check
        %p524 = pneg %p164
      $region26: #{model_forward.2} parent=11 // pred_check_branch
        %526 = sbr.rel (%p524) target = $region28
      $region27: #{model_forward.2} parent=11 // pred_region
        _
      $region28: #{model_forward.2} parent=11 // pred_fallthru
        _
      // Predicated region
      $region29: #{model_forward.2} parent=11 // pred_check
        %p527 = pneg %p185
      $region30: #{model_forward.2} parent=11 // pred_check_branch
        %529 = sbr.rel (%p527) target = $region32
      $region31: #{model_forward.2} parent=11 // pred_region
        _
      $region32: #{model_forward.2} parent=11 // pred_fallthru
        _
      // Predicated region
      $region33: #{model_forward.2} parent=11 // pred_check
        %p530 = pneg %p206
      $region34: #{model_forward.2} parent=11 // pred_check_branch
        %532 = sbr.rel (%p530) target = $region36
      $region35: #{model_forward.2} parent=11 // pred_region
        _
      $region36: #{model_forward.2} parent=11 // pred_fallthru
        _
      // Predicated region
      $region37: #{model_forward.2} parent=11 // pred_check
        %p533 = pneg %p227
      $region38: #{model_forward.2} parent=11 // pred_check_branch
        %535 = sbr.rel (%p533) target = $region40
      $region39: #{model_forward.2} parent=11 // pred_region
        _
      $region40: #{model_forward.2} parent=11 // pred_fallthru
        _
      // Predicated region
      $region41: #{model_forward.2} parent=11 // pred_check
        %p536 = pneg %p248
      $region42: #{model_forward.2} parent=11 // pred_check_branch
        %538 = sbr.rel (%p536) target = $region44
      $region43: #{model_forward.2} parent=11 // pred_region
        _
      $region44: #{model_forward.2} parent=11 // pred_fallthru
        _
      // Predicated region
      $region45: #{model_forward.2} parent=11 // pred_check
        %p539 = pneg %p269
      $region46: #{model_forward.2} parent=11 // pred_check_branch
        %541 = sbr.rel (%p539) target = $region48
      $region47: #{model_forward.2} parent=11 // pred_region
        _
      $region48: #{model_forward.2} parent=11 // pred_fallthru
        _
      // Predicated region
      $region49: #{model_forward.2} parent=11 // pred_check
        %p542 = pneg %p290
      $region50: #{model_forward.2} parent=11 // pred_check_branch
        %544 = sbr.rel (%p542) target = $region52
      $region51: #{model_forward.2} parent=11 // pred_region
        _
      $region52: #{model_forward.2} parent=11 // pred_fallthru
        _
      // Predicated region
      $region53: #{model_forward.2} parent=11 // pred_check
        %p545 = pneg %p311
      $region54: #{model_forward.2} parent=11 // pred_check_branch
        %547 = sbr.rel (%p545) target = $region56
      $region55: #{model_forward.2} parent=11 // pred_region
        _
      $region56: #{model_forward.2} parent=11 // pred_fallthru
        _
      // Predicated region
      $region57: #{model_forward.2} parent=11 // pred_check
        %p548 = pneg %p332
      $region58: #{model_forward.2} parent=11 // pred_check_branch
        %550 = sbr.rel (%p548) target = $region60
      $region59: #{model_forward.2} parent=11 // pred_region
        _
      $region60: #{model_forward.2} parent=11 // pred_fallthru
        _
      // Predicated region
      $region61: #{model_forward.2} parent=11 // pred_check
        %p551 = pneg %p353
      $region62: #{model_forward.2} parent=11 // pred_check_branch
        %553 = sbr.rel (%p551) target = $region64
      $region63: #{model_forward.2} parent=11 // pred_region
        _
      $region64: #{model_forward.2} parent=11 // pred_fallthru
        _
      // Predicated region
      $region65: #{model_forward.2} parent=11 // pred_check
        %p554 = pneg %p374
      $region66: #{model_forward.2} parent=11 // pred_check_branch
        %556 = sbr.rel (%p554) target = $region68
      $region67: #{model_forward.2} parent=11 // pred_region
        _
      $region68: #{model_forward.2} parent=11 // pred_fallthru
        _
      // Predicated region
      $region69: #{model_forward.2} parent=11 // pred_check
        %p557 = pneg %p395
      $region70: #{model_forward.2} parent=11 // pred_check_branch
        %559 = sbr.rel (%p557) target = $region72
      $region71: #{model_forward.2} parent=11 // pred_region
        _
      $region72: #{model_forward.2} parent=11 // pred_fallthru
        _
    $region12: #{model_forward.2} parent=5 // pred_fallthru
      _
    %p560 = scmp.lt.s32.totalorder %s28, 3
    // Predicated region
    $region73: #{model_forward.2} parent=5 // pred_check
      %p561 = pneg %p560
    $region74: #{model_forward.2} parent=5 // pred_check_branch
      %563 = sbr.rel (%p561) target = $region76
    $region75: #{model_forward.2} parent=5 // pred_region
      // Predicated region
      $region77: #{model_forward.2} parent=75 // pred_check
        %p564 = pneg %p48
      $region78: #{model_forward.2} parent=75 // pred_check_branch
        %566 = sbr.rel (%p564) target = $region80
      $region79: #{model_forward.2} parent=75 // pred_region
        %s567 = smul.u32 4, %s28
        %p568 = scmp.lt.s32.totalorder %s567, 11
        %s569 = scalar_select %p568, %s567, 11
        %s570 = smul.addr %s569, 8
        %s571 = scalar_lea.vmem %s0, %s570
        %s572 = smul.u32 4, %s28
      $region80: #{model_forward.2} parent=75 // pred_fallthru
        _
      // Predicated region
      $region81: #{model_forward.2} parent=75 // pred_check
        %p573 = pneg %p74
      $region82: #{model_forward.2} parent=75 // pred_check_branch
        %575 = sbr.rel (%p573) target = $region84
      $region83: #{model_forward.2} parent=75 // pred_region
        %s576 = smul.u32 64, %s28
        %p577 = scmp.lt.s32.totalorder %s576, 191
        %s578 = scalar_select %p577, %s576, 191
        %s579 = smul.addr %s578, 4
        %s580 = scalar_lea.vmem %s1, %s579
        %s581 = smul.u32 64, %s28
      $region84: #{model_forward.2} parent=75 // pred_fallthru
        _
    $region76: #{model_forward.2} parent=5 // pred_fallthru
      _
    %p582 = scmp.le.s32.totalorder 1, %s28
    %p583 = scmp.lt.s32.totalorder %s28, 4
    %p584 = pnand %p582, %p583
    %p585 = pneg %p584
    // Predicated region
    $region85: #{model_forward.2} parent=5 // pred_check
      _
    $region86: #{model_forward.2} parent=5 // pred_check_branch
      %587 = sbr.rel (%p584) target = $region88
    $region87: #{model_forward.2} parent=5 // pred_region
      %s588 = ssub.s32 %s28, 1
      %s589 = smul.u32 4, %s33
      %p590 = scmp.lt.s32.totalorder %s589, 11
      %s591 = scalar_select %p590, %s589, 11
      %s592 = smul.addr %s591, 8
      %s593 = scalar_lea.vmem %s0, %s592
      %p594 = pneg %p54
      %p595 = pneg %p51
      %s596 = smul.u32 64, %s33
      %p597 = scmp.lt.s32.totalorder %s596, 191
      %s598 = scalar_select %p597, %s596, 191
      %s599 = smul.addr %s598, 4
      %s600 = scalar_lea.vmem %s1, %s599
      %p601 = pneg %p80
      %p602 = pneg %p77
      %p603 = pneg %p101
      %p604 = pneg %p98
      %p605 = pneg %p122
      %p606 = pneg %p119
      %p607 = pneg %p143
      %p608 = pneg %p140
      %p609 = pneg %p164
      %p610 = pneg %p161
      %p611 = pneg %p185
      %p612 = pneg %p182
      %p613 = pneg %p206
      %p614 = pneg %p203
      %p615 = pneg %p227
      %p616 = pneg %p224
      %p617 = pneg %p248
      %p618 = pneg %p245
      %p619 = pneg %p269
      %p620 = pneg %p266
      %p621 = pneg %p290
      %p622 = pneg %p287
      %p623 = pneg %p311
      %p624 = pneg %p308
      %p625 = pneg %p332
      %p626 = pneg %p329
      %p627 = pneg %p353
      %p628 = pneg %p350
      %p629 = pneg %p374
      %p630 = pneg %p371
      %p631 = pneg %p395
      %p632 = pneg %p392
      %p633 = pneg %p416
      %p634 = pneg %p413
      %p635 = pneg %p437
      %p636 = pneg %p434
      %p637 = pneg %p458
      %p638 = pneg %p455
      %p639 = pneg %p479
      %p640 = pneg %p476
      %p641 = pneg %p500
      %p642 = pneg %p497
      %s643 = smul.u32 4, %s33
      %p644 = scmp.lt.s32.totalorder %s643, 11
      %s645 = scalar_select %p644, %s643, 11
      %s646 = smul.addr %s645, 8
      %s647 = scalar_lea.vmem %s0, %s646
      %s648 = smul.u32 4, %s33
      %s649 = smul.u32 64, %s33
      %p650 = scmp.lt.s32.totalorder %s649, 191
      %s651 = scalar_select %p650, %s649, 191
      %s652 = smul.addr %s651, 4
      %s653 = scalar_lea.vmem %s1, %s652
      %s654 = smul.u32 64, %s33
      %p655 = scmp.eq.s32.totalorder %s33, 0
      // Predicated region
      $region89: #{model_forward.2} parent=87 // pred_check
        %p656 = pneg %p655
      $region90: #{model_forward.2} parent=87 // pred_check_branch
        %658 = sbr.rel (%p656) target = $region92
      $region91: #{model_forward.2} parent=87 // pred_region
        %vm659 = vcmask 523264
        %660 = vst.msk [vmem:[#allocation2] sm:$0xff] %vm659, 0.0
      $region92: #{model_forward.2} parent=87 // pred_fallthru
        _
      %v661 = vld [vmem:[%s647] sm:$0xff]
      %v662 = vld [vmem:[%s647 + $0x8] sm:$0xff]
      %v663 = vld [vmem:[%s647 + $0x10] sm:$0xff]
      %v664 = vld [vmem:[%s647 + $0x18] sm:$0xff]
      %v665 = vpack.c.bf16 %v661, %v661
      %v666 = vpack.c.bf16 %v662, %v662
      %v667 = vpack.c.bf16 %v663, %v663
      %v668 = vpack.c.bf16 %v664, %v664
      %v669 = vld [vmem:[#allocation2] sm:$0xff]
      %v670 = vld [vmem:[%s653] sm:$0xf]
      %v671 = vld [vmem:[%s653 + $0x4] sm:$0xf]
      %v672 = vld [vmem:[%s653 + $0x8] sm:$0xf]
      %v673 = vld [vmem:[%s653 + $0xc] sm:$0xf]
      %v674 = vld [vmem:[%s653 + $0x10] sm:$0xf]
      %v675 = vld [vmem:[%s653 + $0x14] sm:$0xf]
      %v676 = vld [vmem:[%s653 + $0x18] sm:$0xf]
      %v677 = vld [vmem:[%s653 + $0x1c] sm:$0xf]
      %v678 = vld [vmem:[%s653 + $0x20] sm:$0xf]
      %v679 = vld [vmem:[%s653 + $0x24] sm:$0xf]
      %v680 = vld [vmem:[%s653 + $0x28] sm:$0xf]
      %v681 = vld [vmem:[%s653 + $0x2c] sm:$0xf]
      %v682 = vld [vmem:[%s653 + $0x30] sm:$0xf]
      %v683 = vld [vmem:[%s653 + $0x34] sm:$0xf]
      %v684 = vld [vmem:[%s653 + $0x38] sm:$0xf]
      %v685 = vld [vmem:[%s653 + $0x3c] sm:$0xf]
      %v686 = vld [vmem:[%s653 + $0x40] sm:$0xf]
      %v687 = vld [vmem:[%s653 + $0x44] sm:$0xf]
      %v688 = vld [vmem:[%s653 + $0x48] sm:$0xf]
      %v689 = vld [vmem:[%s653 + $0x4c] sm:$0xf]
      %v690 = vld [vmem:[%s653 + $0x50] sm:$0xf]
      %v691 = vld [vmem:[%s653 + $0x54] sm:$0xf]
      %v692 = vld [vmem:[%s653 + $0x58] sm:$0xf]
      %v693 = vld [vmem:[%s653 + $0x5c] sm:$0xf]
      %v694 = vld [vmem:[%s653 + $0x60] sm:$0xf]
      %v695 = vld [vmem:[%s653 + $0x64] sm:$0xf]
      %v696 = vld [vmem:[%s653 + $0x68] sm:$0xf]
      %v697 = vld [vmem:[%s653 + $0x6c] sm:$0xf]
      %v698 = vld [vmem:[%s653 + $0x70] sm:$0xf]
      %v699 = vld [vmem:[%s653 + $0x74] sm:$0xf]
      %v700 = vld [vmem:[%s653 + $0x78] sm:$0xf]
      %v701 = vld [vmem:[%s653 + $0x7c] sm:$0xf]
      %v702 = vld [vmem:[%s653 + $0x80] sm:$0xf]
      %v703 = vld [vmem:[%s653 + $0x84] sm:$0xf]
      %v704 = vld [vmem:[%s653 + $0x88] sm:$0xf]
      %v705 = vld [vmem:[%s653 + $0x8c] sm:$0xf]
      %v706 = vld [vmem:[%s653 + $0x90] sm:$0xf]
      %v707 = vld [vmem:[%s653 + $0x94] sm:$0xf]
      %v708 = vld [vmem:[%s653 + $0x98] sm:$0xf]
      %v709 = vld [vmem:[%s653 + $0x9c] sm:$0xf]
      %v710 = vld [vmem:[%s653 + $0xa0] sm:$0xf]
      %v711 = vld [vmem:[%s653 + $0xa4] sm:$0xf]
      %v712 = vld [vmem:[%s653 + $0xa8] sm:$0xf]
      %v713 = vld [vmem:[%s653 + $0xac] sm:$0xf]
      %v714 = vld [vmem:[%s653 + $0xb0] sm:$0xf]
      %v715 = vld [vmem:[%s653 + $0xb4] sm:$0xf]
      %v716 = vld [vmem:[%s653 + $0xb8] sm:$0xf]
      %v717 = vld [vmem:[%s653 + $0xbc] sm:$0xf]
      %v718 = vld [vmem:[%s653 + $0xc0] sm:$0xf]
      %v719 = vld [vmem:[%s653 + $0xc4] sm:$0xf]
      %v720 = vld [vmem:[%s653 + $0xc8] sm:$0xf]
      %v721 = vld [vmem:[%s653 + $0xcc] sm:$0xf]
      %v722 = vld [vmem:[%s653 + $0xd0] sm:$0xf]
      %v723 = vld [vmem:[%s653 + $0xd4] sm:$0xf]
      %v724 = vld [vmem:[%s653 + $0xd8] sm:$0xf]
      %v725 = vld [vmem:[%s653 + $0xdc] sm:$0xf]
      %v726 = vld [vmem:[%s653 + $0xe0] sm:$0xf]
      %v727 = vld [vmem:[%s653 + $0xe4] sm:$0xf]
      %v728 = vld [vmem:[%s653 + $0xe8] sm:$0xf]
      %v729 = vld [vmem:[%s653 + $0xec] sm:$0xf]
      %v730 = vld [vmem:[%s653 + $0xf0] sm:$0xf]
      %v731 = vld [vmem:[%s653 + $0xf4] sm:$0xf]
      %v732 = vld [vmem:[%s653 + $0xf8] sm:$0xf]
      %v733 = vld [vmem:[%s653 + $0xfc] sm:$0xf]
      %v798 = vunpack.c.l.b16 %v670
      %v799 = vunpack.c.l.b16 %v671
      %v800 = vunpack.c.l.b16 %v672
      %v801 = vunpack.c.l.b16 %v673
      %v802 = vunpack.c.l.b16 %v674
      %v803 = vunpack.c.l.b16 %v675
      %v804 = vunpack.c.l.b16 %v676
      %v805 = vunpack.c.l.b16 %v677
      %v806 = vunpack.c.l.b16 %v678
      %v807 = vunpack.c.l.b16 %v679
      %v808 = vunpack.c.l.b16 %v680
      %v809 = vunpack.c.l.b16 %v681
      %v810 = vunpack.c.l.b16 %v682
      %v811 = vunpack.c.l.b16 %v683
      %v812 = vunpack.c.l.b16 %v684
      %v813 = vunpack.c.l.b16 %v685
      %v814 = vunpack.c.l.b16 %v686
      %v815 = vunpack.c.l.b16 %v687
      %v816 = vunpack.c.l.b16 %v688
      %v817 = vunpack.c.l.b16 %v689
      %v818 = vunpack.c.l.b16 %v690
      %v819 = vunpack.c.l.b16 %v691
      %v820 = vunpack.c.l.b16 %v692
      %v821 = vunpack.c.l.b16 %v693
      %v822 = vunpack.c.l.b16 %v694
      %v823 = vunpack.c.l.b16 %v695
      %v824 = vunpack.c.l.b16 %v696
      %v825 = vunpack.c.l.b16 %v697
      %v826 = vunpack.c.l.b16 %v698
      %v827 = vunpack.c.l.b16 %v699
      %v828 = vunpack.c.l.b16 %v700
      %v829 = vunpack.c.l.b16 %v701
      %v830 = vunpack.c.l.b16 %v702
      %v831 = vunpack.c.l.b16 %v703
      %v832 = vunpack.c.l.b16 %v704
      %v833 = vunpack.c.l.b16 %v705
      %v834 = vunpack.c.l.b16 %v706
      %v835 = vunpack.c.l.b16 %v707
      %v836 = vunpack.c.l.b16 %v708
      %v837 = vunpack.c.l.b16 %v709
      %v838 = vunpack.c.l.b16 %v710
      %v839 = vunpack.c.l.b16 %v711
      %v840 = vunpack.c.l.b16 %v712
      %v841 = vunpack.c.l.b16 %v713
      %v842 = vunpack.c.l.b16 %v714
      %v843 = vunpack.c.l.b16 %v715
      %v844 = vunpack.c.l.b16 %v716
      %v845 = vunpack.c.l.b16 %v717
      %v846 = vunpack.c.l.b16 %v718
      %v847 = vunpack.c.l.b16 %v719
      %v848 = vunpack.c.l.b16 %v720
      %v849 = vunpack.c.l.b16 %v721
      %v850 = vunpack.c.l.b16 %v722
      %v851 = vunpack.c.l.b16 %v723
      %v852 = vunpack.c.l.b16 %v724
      %v853 = vunpack.c.l.b16 %v725
      %v854 = vunpack.c.l.b16 %v726
      %v855 = vunpack.c.l.b16 %v727
      %v856 = vunpack.c.l.b16 %v728
      %v857 = vunpack.c.l.b16 %v729
      %v858 = vunpack.c.l.b16 %v730
      %v859 = vunpack.c.l.b16 %v731
      %v860 = vunpack.c.l.b16 %v732
      %v861 = vunpack.c.l.b16 %v733
      %v862 = vpack.c.b16 %v799, %v798
      %v863 = vpack.c.b16 %v801, %v800
      %v864 = vpack.c.b16 %v803, %v802
      %v865 = vpack.c.b16 %v805, %v804
      %v866 = vpack.c.b16 %v807, %v806
      %v867 = vpack.c.b16 %v809, %v808
      %v868 = vpack.c.b16 %v811, %v810
      %v869 = vpack.c.b16 %v813, %v812
      %v870 = vpack.c.b16 %v815, %v814
      %v871 = vpack.c.b16 %v817, %v816
      %v872 = vpack.c.b16 %v819, %v818
      %v873 = vpack.c.b16 %v821, %v820
      %v874 = vpack.c.b16 %v823, %v822
      %v875 = vpack.c.b16 %v825, %v824
      %v876 = vpack.c.b16 %v827, %v826
      %v877 = vpack.c.b16 %v829, %v828
      %v878 = vpack.c.b16 %v831, %v830
      %v879 = vpack.c.b16 %v833, %v832
      %v880 = vpack.c.b16 %v835, %v834
      %v881 = vpack.c.b16 %v837, %v836
      %v882 = vpack.c.b16 %v839, %v838
      %v883 = vpack.c.b16 %v841, %v840
      %v884 = vpack.c.b16 %v843, %v842
      %v885 = vpack.c.b16 %v845, %v844
      %v886 = vpack.c.b16 %v847, %v846
      %v887 = vpack.c.b16 %v849, %v848
      %v888 = vpack.c.b16 %v851, %v850
      %v889 = vpack.c.b16 %v853, %v852
      %v890 = vpack.c.b16 %v855, %v854
      %v891 = vpack.c.b16 %v857, %v856
      %v892 = vpack.c.b16 %v859, %v858
      %v893 = vpack.c.b16 %v861, %v860
      %926 = vmatpush.bf16.msra.mxu0 %v869
      %927 = vmatpush.bf16.msra.mxu0 %v868
      %928 = vmatpush.bf16.msra.mxu0 %v867
      %929 = vmatpush.bf16.msra.mxu0 %v866
      %930 = vmatpush.bf16.msra.mxu0 %v865
      %931 = vmatpush.bf16.msra.mxu0 %v864
      %932 = vmatpush.bf16.msra.mxu0 %v863
      %933 = vmatpush.bf16.msra.mxu0 %v862
      %934 = vmatmul.bf16.gmra.mxu0 %v665
      %v935 = vpop.f32.mrf.mxu0
      %v936 = vadd.f32 0.0, %v935
      %v937 = vpop.f32.mrf.mxu0
      %938 = vdwg.mxu0
      %939 = vmatpush.bf16.msra.mxu0 %v877
      %940 = vmatpush.bf16.msra.mxu0 %v876
      %941 = vmatpush.bf16.msra.mxu0 %v875
      %942 = vmatpush.bf16.msra.mxu0 %v874
      %943 = vmatpush.bf16.msra.mxu0 %v873
      %944 = vmatpush.bf16.msra.mxu0 %v872
      %945 = vmatpush.bf16.msra.mxu0 %v871
      %946 = vmatpush.bf16.msra.mxu0 %v870
      %947 = vmatmul.bf16.gmra.mxu0 %v666
      %v948 = vpop.f32.mrf.mxu0
      %v949 = vadd.f32 %v936, %v948
      %v950 = vpop.f32.mrf.mxu0
      %951 = vdwg.mxu0
      %952 = vmatpush.bf16.msra.mxu0 %v885
      %953 = vmatpush.bf16.msra.mxu0 %v884
      %954 = vmatpush.bf16.msra.mxu0 %v883
      %955 = vmatpush.bf16.msra.mxu0 %v882
      %956 = vmatpush.bf16.msra.mxu0 %v881
      %957 = vmatpush.bf16.msra.mxu0 %v880
      %958 = vmatpush.bf16.msra.mxu0 %v879
      %959 = vmatpush.bf16.msra.mxu0 %v878
      %960 = vmatmul.bf16.gmra.mxu0 %v667
      %v961 = vpop.f32.mrf.mxu0
      %v962 = vadd.f32 %v949, %v961
      %v963 = vpop.f32.mrf.mxu0
      %964 = vdwg.mxu0
      %965 = vmatpush.bf16.msra.mxu0 %v893
      %966 = vmatpush.bf16.msra.mxu0 %v892
      %967 = vmatpush.bf16.msra.mxu0 %v891
      %968 = vmatpush.bf16.msra.mxu0 %v890
      %969 = vmatpush.bf16.msra.mxu0 %v889
      %970 = vmatpush.bf16.msra.mxu0 %v888
      %971 = vmatpush.bf16.msra.mxu0 %v887
      %972 = vmatpush.bf16.msra.mxu0 %v886
      %973 = vmatmul.bf16.gmra.mxu0 %v668
      %v974 = vpop.f32.mrf.mxu0
      %v975 = vadd.f32 %v962, %v974
      %v976 = vpop.f32.mrf.mxu0
      %977 = vdwg.mxu0
      %v978 = vadd.f32 %v669, %v975
      %vm979 = vcmask 523264
      %980 = vst.msk [vmem:[#allocation2] sm:$0xff] %vm979, %v978
      %p981 = scmp.eq.s32.totalorder %s33, 2
      // Predicated region
      $region93: #{model_forward.2} parent=87 // pred_check
        %p982 = pneg %p981
      $region94: #{model_forward.2} parent=87 // pred_check_branch
        %984 = sbr.rel (%p982) target = $region96
      $region95: #{model_forward.2} parent=87 // pred_region
        %v985 = vld [vmem:[#allocation2] sm:$0xff]
        %v986 = vld [vmem:[%s2] sm:$0x1]
        %v988 = vperm.slane %v986, 0
        %v990 = vadd.f32 %v985, %v988
        %v991 = vmax.f32 %v990, 0.0
        %v992 = vand.u32 2147483647, %v990
        %v993 = vsub.f32 0.0, %v992
        %v994 = vmul.f32 %v993, 1.442695
        %v995 = vpow.pop %v994
        %v996 = vadd.f32 %v995, 1.0
        %v997 = vlog2.pop %v996
        %v998 = vmul.f32 %v997, 0.6931472
        %v999 = vmul.f32 -0.5, %v995
        %v1000 = vadd.f32 %v999, 1.0
        %v1001 = vmul.f32 %v1000, %v995
        %v1002 = vand.u32 2147483647, %v995
        %vm1003 = vcmp.lt.f32.partialorder %v1002, 0.0004427343
        %v1004 = vsel %vm1003, %v1001, %v998
        %v1005 = vadd.f32 %v991, %v1004
        %v1006 = vld [vmem:[%s3] sm:$0xff]
        %v1007 = vld [vmem:[%s3 + $0x8] sm:$0xff]
        %v1008 = vld [vmem:[%s3 + $0x10] sm:$0xff]
        %v1009 = vld [vmem:[%s3 + $0x18] sm:$0xff]
        %v1010 = vld [vmem:[%s3 + $0x20] sm:$0xff]
        %v1011 = vld [vmem:[%s3 + $0x28] sm:$0xff]
        %v1012 = vld [vmem:[%s3 + $0x30] sm:$0xff]
        %v1013 = vld [vmem:[%s3 + $0x38] sm:$0xff]
        %v1014 = vld [vmem:[%s4] sm:$0x1]
        %v1016 = vperm.slane %v1014, 0
        %v1019 = vsel %vm979, %v1005, 0
        %1021 = vmatpush.msra.mxu0 0.0
        %1022 = vmatpush.msra.mxu0 0.0
        %1023 = vmatpush.msra.mxu0 0.0
        %1024 = vmatpush.msra.mxu0 0.0
        %1025 = vmatpush.msra.mxu0 0.0
        %1026 = vmatpush.msra.mxu0 0.0
        %1027 = vmatpush.msra.mxu0 0.0
        %1028 = vmatpush.msra.mxu0 0.0
        %1029 = vmatpush.msra.mxu0 %v1013
        %1030 = vmatpush.msra.mxu0 %v1012
        %1031 = vmatpush.msra.mxu0 %v1011
        %1032 = vmatpush.msra.mxu0 %v1010
        %1033 = vmatpush.msra.mxu0 %v1009
        %1034 = vmatpush.msra.mxu0 %v1008
        %1035 = vmatpush.msra.mxu0 %v1007
        %1036 = vmatpush.msra.mxu0 %v1006
        %1037 = vmatmul.f32.gmra.mxu0 %v1019
        %v1038 = vpop.f32.mrf.mxu0
        %v1039 = vadd.f32 %v1016, %v1038
        %1040 = vdwg.mxu0
        %v1041 = vmax.f32 %v1039, 0.0
        %v1042 = vand.u32 2147483647, %v1039
        %v1043 = vsub.f32 0.0, %v1042
        %v1044 = vmul.f32 %v1043, 1.442695
        %v1045 = vpow.pop %v1044
        %v1046 = vadd.f32 %v1045, 1.0
        %v1047 = vlog2.pop %v1046
        %v1048 = vmul.f32 %v1047, 0.6931472
        %v1049 = vmul.f32 -0.5, %v1045
        %v1050 = vadd.f32 %v1049, 1.0
        %v1051 = vmul.f32 %v1050, %v1045
        %v1052 = vand.u32 2147483647, %v1045
        %vm1053 = vcmp.lt.f32.partialorder %v1052, 0.0004427343
        %v1054 = vsel %vm1053, %v1051, %v1048
        %v1055 = vadd.f32 %v1041, %v1054
        %v1056 = vld [vmem:[%s5] sm:$0xff]
        %v1057 = vld [vmem:[%s5 + $0x8] sm:$0xff]
        %v1058 = vld [vmem:[%s5 + $0x10] sm:$0xff]
        %v1059 = vld [vmem:[%s5 + $0x18] sm:$0xff]
        %v1060 = vld [vmem:[%s5 + $0x20] sm:$0xff]
        %v1061 = vld [vmem:[%s5 + $0x28] sm:$0xff]
        %v1062 = vld [vmem:[%s5 + $0x30] sm:$0xff]
        %v1063 = vld [vmem:[%s5 + $0x38] sm:$0xff]
        %v1064 = vld [vmem:[%s6] sm:$0x1]
        %v1066 = vperm.slane %v1064, 0
        %v1069 = vsel %vm979, %v1055, 0
        %1071 = vmatpush.msra.mxu0 0.0
        %1072 = vmatpush.msra.mxu0 0.0
        %1073 = vmatpush.msra.mxu0 0.0
        %1074 = vmatpush.msra.mxu0 0.0
        %1075 = vmatpush.msra.mxu0 0.0
        %1076 = vmatpush.msra.mxu0 0.0
        %1077 = vmatpush.msra.mxu0 0.0
        %1078 = vmatpush.msra.mxu0 0.0
        %1079 = vmatpush.msra.mxu0 %v1063
        %1080 = vmatpush.msra.mxu0 %v1062
        %1081 = vmatpush.msra.mxu0 %v1061
        %1082 = vmatpush.msra.mxu0 %v1060
        %1083 = vmatpush.msra.mxu0 %v1059
        %1084 = vmatpush.msra.mxu0 %v1058
        %1085 = vmatpush.msra.mxu0 %v1057
        %1086 = vmatpush.msra.mxu0 %v1056
        %1087 = vmatmul.f32.gmra.mxu0 %v1069
        %v1088 = vpop.f32.mrf.mxu0
        %v1089 = vadd.f32 %v1066, %v1088
        %1090 = vdwg.mxu0
        %vm1091 = vcmask 15360
        %v1092 = vsel %vm1091, %v1089, 0.0
        %v1093 = vrot.slane %v1092, 4
        %v1094 = vadd.f32 %v1092, %v1093
        %v1095 = vrot.slane %v1094, 2
        %v1096 = vadd.f32 %v1094, %v1095
        %v1097 = vrot.slane %v1096, 1
        %v1098 = vadd.f32 %v1096, %v1097
        %v1099 = vrcp.pop 8.0
        %v1100 = vmul.f32 8.0, %v1099
        %v1101 = vsub.f32 1.0, %v1100
        %v1102 = vmul.f32 %v1099, %v1101
        %v1103 = vadd.f32 %v1099, %v1102
        %vm1104 = vweird.f32 %v1099
        %v1105 = vsel %vm1104, %v1099, %v1103
        %v1106 = vmul.f32 %v1098, %v1105
        %v1107 = vsub.f32 %v1089, %v1106
        %v1108 = vmul.f32 %v1107, %v1107
        %v1109 = vsel %vm1091, %v1108, 0.0
        %v1110 = vrot.slane %v1109, 4
        %v1111 = vadd.f32 %v1109, %v1110
        %v1112 = vrot.slane %v1111, 2
        %v1113 = vadd.f32 %v1111, %v1112
        %v1114 = vrot.slane %v1113, 1
        %v1115 = vadd.f32 %v1113, %v1114
        %v1116 = vmul.f32 %v1115, %v1105
        %v1117 = vadd.f32 %v1116, 1e-05
        %v1118 = vrsqrt.pop %v1117
        %v1119 = vmul.f32 %v1118, %v1117
        %v1120 = vmul.f32 %v1119, %v1118
        %v1121 = vmul.f32 0.5, %v1120
        %v1122 = vsub.f32 1.5, %v1121
        %v1123 = vmul.f32 %v1118, %v1122
        %vm1124 = vweird.f32 %v1117
        %vm1125 = vweird.f32 %v1118
        %vm1126 = vmor %vm1124, %vm1125
        %v1127 = vsel %vm1126, %v1118, %v1123
        %v1128 = vmul.f32 %v1107, %v1127
        %v1129 = vld [vmem:[%s7] sm:$0xff]
        %v1130 = vld [vmem:[%s7 + $0x8] sm:$0xff]
        %v1131 = vld [vmem:[%s7 + $0x10] sm:$0xff]
        %v1132 = vld [vmem:[%s7 + $0x18] sm:$0xff]
        %v1133 = vld [vmem:[%s7 + $0x20] sm:$0xff]
        %v1134 = vld [vmem:[%s7 + $0x28] sm:$0xff]
        %v1135 = vld [vmem:[%s7 + $0x30] sm:$0xff]
        %v1136 = vld [vmem:[%s7 + $0x38] sm:$0xff]
        %v1137 = vld [vmem:[%s8] sm:$0x1]
        %v1139 = vperm.slane %v1137, 0
        %1141 = vmatpush.msra.mxu0 0.0
        %1142 = vmatpush.msra.mxu0 0.0
        %1143 = vmatpush.msra.mxu0 0.0
        %1144 = vmatpush.msra.mxu0 0.0
        %1145 = vmatpush.msra.mxu0 0.0
        %1146 = vmatpush.msra.mxu0 0.0
        %1147 = vmatpush.msra.mxu0 0.0
        %1148 = vmatpush.msra.mxu0 0.0
        %1149 = vmatpush.msra.mxu0 %v1136
        %1150 = vmatpush.msra.mxu0 %v1135
        %1151 = vmatpush.msra.mxu0 %v1134
        %1152 = vmatpush.msra.mxu0 %v1133
        %1153 = vmatpush.msra.mxu0 %v1132
        %1154 = vmatpush.msra.mxu0 %v1131
        %1155 = vmatpush.msra.mxu0 %v1130
        %1156 = vmatpush.msra.mxu0 %v1129
        %1157 = vmatmul.f32.gmra.mxu0 %v1069
        %v1158 = vpop.f32.mrf.mxu0
        %v1159 = vadd.f32 %v1139, %v1158
        %1160 = vdwg.mxu0
        %v1161 = vsel %vm1091, %v1159, 0.0
        %v1162 = vrot.slane %v1161, 4
        %v1163 = vadd.f32 %v1161, %v1162
        %v1164 = vrot.slane %v1163, 2
        %v1165 = vadd.f32 %v1163, %v1164
        %v1166 = vrot.slane %v1165, 1
        %v1167 = vadd.f32 %v1165, %v1166
        %v1168 = vmul.f32 %v1167, %v1105
        %v1169 = vsub.f32 %v1159, %v1168
        %v1170 = vmul.f32 %v1169, %v1169
        %v1171 = vsel %vm1091, %v1170, 0.0
        %v1172 = vrot.slane %v1171, 4
        %v1173 = vadd.f32 %v1171, %v1172
        %v1174 = vrot.slane %v1173, 2
        %v1175 = vadd.f32 %v1173, %v1174
        %v1176 = vrot.slane %v1175, 1
        %v1177 = vadd.f32 %v1175, %v1176
        %v1178 = vmul.f32 %v1177, %v1105
        %v1179 = vadd.f32 %v1178, 1e-05
        %v1180 = vrsqrt.pop %v1179
        %v1181 = vmul.f32 %v1180, %v1179
        %v1182 = vmul.f32 %v1181, %v1180
        %v1183 = vmul.f32 0.5, %v1182
        %v1184 = vsub.f32 1.5, %v1183
        %v1185 = vmul.f32 %v1180, %v1184
        %vm1186 = vweird.f32 %v1179
        %vm1187 = vweird.f32 %v1180
        %vm1188 = vmor %vm1186, %vm1187
        %v1189 = vsel %vm1188, %v1180, %v1185
        %v1190 = vmul.f32 %v1169, %v1189
        %v1191 = vmul.f32 %v1190, 1.442695
        %v1192 = vpow.pop %v1191
        %v1193 = vrsqrt.pop %v1192
        %v1194 = vmul.f32 %v1193, %v1192
        %v1195 = vmul.f32 %v1194, %v1193
        %v1196 = vmul.f32 0.5, %v1195
        %v1197 = vsub.f32 1.5, %v1196
        %v1198 = vmul.f32 %v1193, %v1197
        %v1199 = vmul.f32 %v1192, %v1198
        %vm1200 = vcmp.eq.f32.partialorder %v1192, inf
        %v1201 = vsel %vm1200, %v1192, %v1199
        %vm1202 = vcmp.eq.f32.partialorder %v1192, 0.0
        %v1203 = vand.u32 %v1192, 2147483648
        %v1204 = vsel %vm1202, %v1203, %v1201
        %v1205 = vld [vmem:[%s9] sm:$0xff]
        %v1206 = vmul.f32 %v1204, %v1205
        %v1207 = vadd.f32 %v1128, %v1206
        %1208 = vst.msk [vmem:[%s17] sm:$0xff] %vm1091, %v1207
        %v1209 = vsel %vm1091, %v1207, 0.0
        %v1210 = vrot.slane %v1209, 4
        %v1211 = vadd.f32 %v1209, %v1210
        %v1212 = vrot.slane %v1211, 2
        %v1213 = vadd.f32 %v1211, %v1212
        %v1214 = vrot.slane %v1213, 1
        %v1215 = vadd.f32 %v1213, %v1214
        %v1216 = vmul.f32 %v1215, %v1105
        %v1217 = vsub.f32 %v1207, %v1216
        %v1218 = vmul.f32 %v1217, %v1217
        %v1219 = vsel %vm1091, %v1218, 0.0
        %v1220 = vrot.slane %v1219, 4
        %v1221 = vadd.f32 %v1219, %v1220
        %v1222 = vrot.slane %v1221, 2
        %v1223 = vadd.f32 %v1221, %v1222
        %v1224 = vrot.slane %v1223, 1
        %v1225 = vadd.f32 %v1223, %v1224
        %v1226 = vmul.f32 %v1225, %v1105
        %v1227 = vadd.f32 %v1226, 1e-05
        %v1228 = vrsqrt.pop %v1227
        %v1229 = vmul.f32 %v1228, %v1227
        %v1230 = vmul.f32 %v1229, %v1228
        %v1231 = vmul.f32 0.5, %v1230
        %v1232 = vsub.f32 1.5, %v1231
        %v1233 = vmul.f32 %v1228, %v1232
        %vm1234 = vweird.f32 %v1227
        %vm1235 = vweird.f32 %v1228
        %vm1236 = vmor %vm1234, %vm1235
        %v1237 = vsel %vm1236, %v1228, %v1233
        %v1238 = vmul.f32 %v1217, %v1237
        %v1239 = vld [vmem:[%s10] sm:$0xff]
        %v1240 = vsel %vm1091, %v1239, 0.0
        %v1241 = vrot.slane %v1240, 4
        %v1242 = vadd.f32 %v1240, %v1241
        %v1243 = vrot.slane %v1242, 2
        %v1244 = vadd.f32 %v1242, %v1243
        %v1245 = vrot.slane %v1244, 1
        %v1246 = vadd.f32 %v1244, %v1245
        %v1247 = vmul.f32 %v1246, %v1105
        %v1248 = vsub.f32 %v1239, %v1247
        %v1249 = vmul.f32 %v1248, %v1248
        %v1250 = vsel %vm1091, %v1249, 0.0
        %v1251 = vrot.slane %v1250, 4
        %v1252 = vadd.f32 %v1250, %v1251
        %v1253 = vrot.slane %v1252, 2
        %v1254 = vadd.f32 %v1252, %v1253
        %v1255 = vrot.slane %v1254, 1
        %v1256 = vadd.f32 %v1254, %v1255
        %v1257 = vmul.f32 %v1256, %v1105
        %v1258 = vadd.f32 %v1257, 1e-05
        %v1259 = vrsqrt.pop %v1258
        %v1260 = vmul.f32 %v1259, %v1258
        %v1261 = vmul.f32 %v1260, %v1259
        %v1262 = vmul.f32 0.5, %v1261
        %v1263 = vsub.f32 1.5, %v1262
        %v1264 = vmul.f32 %v1259, %v1263
        %vm1265 = vweird.f32 %v1258
        %vm1266 = vweird.f32 %v1259
        %vm1267 = vmor %vm1265, %vm1266
        %v1268 = vsel %vm1267, %v1259, %v1264
        %v1269 = vmul.f32 %v1248, %v1268
        %1270 = vst.msk [vmem:[%s18] sm:$0xff] %vm1091, %v1238
        %1271 = vst.msk [vmem:[%s19] sm:$0xff] %vm1091, %v1269
        %v1273 = vsel %vm1091, %v1238, 0
        %v1276 = vsel %vm1091, %v1269, 0
        %1278 = vmatpush.xpose.msra.mxu0 0.0
        %1279 = vmatpush.xpose.msra.mxu0 0.0
        %1280 = vmatpush.xpose.msra.mxu0 0.0
        %1281 = vmatpush.xpose.msra.mxu0 0.0
        %1282 = vmatpush.xpose.msra.mxu0 0.0
        %1283 = vmatpush.xpose.msra.mxu0 0.0
        %1284 = vmatpush.xpose.msra.mxu0 0.0
        %1285 = vmatpush.xpose.msra.mxu0 0.0
        %1286 = vmatpush.xpose.msra.mxu0 0.0
        %1287 = vmatpush.xpose.msra.mxu0 0.0
        %1288 = vmatpush.xpose.msra.mxu0 0.0
        %1289 = vmatpush.xpose.msra.mxu0 0.0
        %1290 = vmatpush.xpose.msra.mxu0 0.0
        %1291 = vmatpush.xpose.msra.mxu0 0.0
        %1292 = vmatpush.xpose.msra.mxu0 0.0
        %1293 = vmatpush.xpose.msra.mxu0 %v1276
        %1294 = vmatmul.f32.gmra.mxu0 %v1273
        %v1295 = vpop.f32.mrf.mxu0
        %v1296 = vadd.f32 0.0, %v1295
        %1297 = vdwg.mxu0
        %v1298 = vmul.f32 %v1269, %v1269
        %v1300 = vsel %vm1091, 1.0, 0
        %v1303 = vsel %vm1091, %v1298, 0
        %1305 = vmatpush.xpose.msra.mxu0 0.0
        %1306 = vmatpush.xpose.msra.mxu0 0.0
        %1307 = vmatpush.xpose.msra.mxu0 0.0
        %1308 = vmatpush.xpose.msra.mxu0 0.0
        %1309 = vmatpush.xpose.msra.mxu0 0.0
        %1310 = vmatpush.xpose.msra.mxu0 0.0
        %1311 = vmatpush.xpose.msra.mxu0 0.0
        %1312 = vmatpush.xpose.msra.mxu0 0.0
        %1313 = vmatpush.xpose.msra.mxu0 0.0
        %1314 = vmatpush.xpose.msra.mxu0 0.0
        %1315 = vmatpush.xpose.msra.mxu0 0.0
        %1316 = vmatpush.xpose.msra.mxu0 0.0
        %1317 = vmatpush.xpose.msra.mxu0 0.0
        %1318 = vmatpush.xpose.msra.mxu0 0.0
        %1319 = vmatpush.xpose.msra.mxu0 0.0
        %1320 = vmatpush.xpose.msra.mxu0 %v1303
        %1321 = vmatmul.f32.gmra.mxu0 %v1300
        %v1322 = vpop.f32.mrf.mxu0
        %v1323 = vadd.f32 0.0, %v1322
        %1324 = vdwg.mxu0
        %v1325 = vmul.f32 %v1238, %v1238
        %v1326 = vsel %vm1091, %v1325, 0.0
        %1327 = vadd.xlane.f32.xlu0 %v1326
        %v1328 = vpop.xlane.xlu0 %1327
        %v1329 = vadd.f32 %v1328, %v1323
        %v1330 = vmul.f32 %v1296, 2.0
        %v1331 = vsub.f32 %v1329, %v1330
        %v1332 = vmax.f32 %v1331, 0.0
        %v1333 = vmul.f32 %v1332, -0.5
        %vm1334 = vcmask 64512
        %v1335 = vsel %vm1334, %v1333, -inf
        %1336 = vmax.xlane.f32.xlu0 %v1335
        %v1337 = vpop.xlane.xlu0 %1336
        %v1338 = vsub.f32 %v1333, %v1337
        %v1339 = vmul.f32 %v1338, 1.442695
        %v1340 = vpow.pop %v1339
        %v1341 = vsel %vm1334, %v1340, 0.0
        %1342 = vadd.xlane.f32.xlu0 %v1341
        %v1343 = vpop.xlane.xlu0 %1342
        %v1344 = vrcp.pop %v1343
        %v1345 = vmul.f32 %v1343, %v1344
        %v1346 = vsub.f32 1.0, %v1345
        %v1347 = vmul.f32 %v1344, %v1346
        %v1348 = vadd.f32 %v1344, %v1347
        %vm1349 = vweird.f32 %v1343
        %vm1350 = vweird.f32 %v1344
        %vm1351 = vmor %vm1349, %vm1350
        %v1352 = vsel %vm1351, %v1344, %v1348
        %v1353 = vand.u32 2147483647, %v1343
        %vm1354 = vcmp.eq.f32.partialorder %v1353, 8.507059e+37
        %v1355 = vand.u32 %v1343, 2147483648
        %v1356 = vor.u32 1.1754944e-38, %v1355
        %v1357 = vsel %vm1354, %v1356, %v1352
        %v1358 = vmul.f32 %v1340, %v1357
        %1359 = vst.msk [vmem:[%s20] sm:$0xff] %vm1334, %v1358
        %v1360 = vld [vmem:[%s11] sm:$0x3]
        %v1361 = vld [vmem:[%s12] sm:$0x1]
        %v1363 = vperm.slane %v1361, 0
        %vm1365 = vcmask 1041408
        %v1367 = vsel %vm1365, %v1360, 0
        %1369 = vmatpush.msra.mxu0 0.0
        %1370 = vmatpush.msra.mxu0 0.0
        %1371 = vmatpush.msra.mxu0 0.0
        %1372 = vmatpush.msra.mxu0 0.0
        %1373 = vmatpush.msra.mxu0 0.0
        %1374 = vmatpush.msra.mxu0 0.0
        %1375 = vmatpush.msra.mxu0 0.0
        %1376 = vmatpush.msra.mxu0 0.0
        %1377 = vmatpush.msra.mxu0 0.0
        %1378 = vmatpush.msra.mxu0 0.0
        %1379 = vmatpush.msra.mxu0 0.0
        %1380 = vmatpush.msra.mxu0 0.0
        %1381 = vmatpush.msra.mxu0 0.0
        %1382 = vmatpush.msra.mxu0 0.0
        %1383 = vmatpush.msra.mxu0 0.0
        %1384 = vmatpush.msra.mxu0 %v1367
        %1385 = vmatmul.f32.gmra.mxu0 %v1276
        %v1386 = vpop.f32.mrf.mxu0
        %v1387 = vadd.f32 %v1363, %v1386
        %1388 = vdwg.mxu0
        %v1389 = vmax.f32 %v1387, 0.0
        %v1390 = vand.u32 2147483647, %v1387
        %v1391 = vsub.f32 0.0, %v1390
        %v1392 = vmul.f32 %v1391, 1.442695
        %v1393 = vpow.pop %v1392
        %v1394 = vadd.f32 %v1393, 1.0
        %v1395 = vlog2.pop %v1394
        %v1396 = vmul.f32 %v1395, 0.6931472
        %v1397 = vmul.f32 -0.5, %v1393
        %v1398 = vadd.f32 %v1397, 1.0
        %v1399 = vmul.f32 %v1398, %v1393
        %v1400 = vand.u32 2147483647, %v1393
        %vm1401 = vcmp.lt.f32.partialorder %v1400, 0.0004427343
        %v1402 = vsel %vm1401, %v1399, %v1396
        %v1403 = vadd.f32 %v1389, %v1402
        %v1404 = vld [vmem:[%s13] sm:$0xff]
        %v1405 = vld [vmem:[%s13 + $0x8] sm:$0xff]
        %v1406 = vld [vmem:[%s13 + $0x10] sm:$0xff]
        %v1407 = vld [vmem:[%s13 + $0x18] sm:$0xff]
        %v1408 = vld [vmem:[%s13 + $0x20] sm:$0xff]
        %v1409 = vld [vmem:[%s13 + $0x28] sm:$0xff]
        %v1410 = vld [vmem:[%s13 + $0x30] sm:$0xff]
        %v1411 = vld [vmem:[%s13 + $0x38] sm:$0xff]
        %v1412 = vld [vmem:[%s13 + $0x40] sm:$0xff]
        %v1413 = vld [vmem:[%s13 + $0x48] sm:$0xff]
        %v1414 = vld [vmem:[%s13 + $0x50] sm:$0xff]
        %v1415 = vld [vmem:[%s13 + $0x58] sm:$0xff]
        %v1416 = vld [vmem:[%s13 + $0x60] sm:$0xf]
        %v1417 = vld [vmem:[%s14] sm:$0x1]
        %v1419 = vperm.slane %v1417, 0
        %vm1421 = vcmask 818176
        %v1423 = vsel %vm1421, %v1403, 0
        %vm1425 = vcmask 1043456
        %v1427 = vsel %vm1425, %v1416, 0
        %1429 = vmatpush.msra.mxu0 0.0
        %1430 = vmatpush.msra.mxu0 0.0
        %1431 = vmatpush.msra.mxu0 0.0
        %1432 = vmatpush.msra.mxu0 %v1427
        %1433 = vmatpush.msra.mxu0 %v1415
        %1434 = vmatpush.msra.mxu0 %v1414
        %1435 = vmatpush.msra.mxu0 %v1413
        %1436 = vmatpush.msra.mxu0 %v1412
        %1437 = vmatpush.msra.mxu0 %v1411
        %1438 = vmatpush.msra.mxu0 %v1410
        %1439 = vmatpush.msra.mxu0 %v1409
        %1440 = vmatpush.msra.mxu0 %v1408
        %1441 = vmatpush.msra.mxu0 %v1407
        %1442 = vmatpush.msra.mxu0 %v1406
        %1443 = vmatpush.msra.mxu0 %v1405
        %1444 = vmatpush.msra.mxu0 %v1404
        %1445 = vmatmul.f32.gmra.mxu0 %v1423
        %v1446 = vpop.f32.mrf.mxu0
        %v1447 = vadd.f32 %v1419, %v1446
        %1448 = vdwg.mxu0
        %v1449 = vmax.f32 %v1447, 0.0
        %v1450 = vand.u32 2147483647, %v1447
        %v1451 = vsub.f32 0.0, %v1450
        %v1452 = vmul.f32 %v1451, 1.442695
        %v1453 = vpow.pop %v1452
        %v1454 = vadd.f32 %v1453, 1.0
        %v1455 = vlog2.pop %v1454
        %v1456 = vmul.f32 %v1455, 0.6931472
        %v1457 = vmul.f32 -0.5, %v1453
        %v1458 = vadd.f32 %v1457, 1.0
        %v1459 = vmul.f32 %v1458, %v1453
        %v1460 = vand.u32 2147483647, %v1453
        %vm1461 = vcmp.lt.f32.partialorder %v1460, 0.0004427343
        %v1462 = vsel %vm1461, %v1459, %v1456
        %v1463 = vadd.f32 %v1449, %v1462
        %v1464 = vld [vmem:[%s15] sm:$0xff]
        %v1465 = vld [vmem:[%s15 + $0x8] sm:$0xff]
        %v1466 = vld [vmem:[%s15 + $0x10] sm:$0xff]
        %v1467 = vld [vmem:[%s15 + $0x18] sm:$0xff]
        %v1468 = vld [vmem:[%s15 + $0x20] sm:$0xff]
        %v1469 = vld [vmem:[%s15 + $0x28] sm:$0xff]
        %v1470 = vld [vmem:[%s15 + $0x30] sm:$0xff]
        %v1471 = vld [vmem:[%s15 + $0x38] sm:$0xff]
        %v1472 = vld [vmem:[%s15 + $0x40] sm:$0xff]
        %v1473 = vld [vmem:[%s15 + $0x48] sm:$0xff]
        %v1474 = vld [vmem:[%s15 + $0x50] sm:$0xff]
        %v1475 = vld [vmem:[%s15 + $0x58] sm:$0xff]
        %v1476 = vld [vmem:[%s15 + $0x60] sm:$0xff]
        %v1477 = vld [vmem:[%s15 + $0x68] sm:$0xff]
        %v1478 = vld [vmem:[%s15 + $0x70] sm:$0xff]
        %v1479 = vld [vmem:[%s15 + $0x78] sm:$0xff]
        %v1480 = vld [vmem:[%s15 + $0x80] sm:$0xff]
        %v1481 = vld [vmem:[%s15 + $0x88] sm:$0xff]
        %v1482 = vld [vmem:[%s15 + $0x90] sm:$0xff]
        %v1483 = vld [vmem:[%s15 + $0x98] sm:$0xff]
        %v1484 = vld [vmem:[%s15 + $0xa0] sm:$0xff]
        %v1485 = vld [vmem:[%s15 + $0xa8] sm:$0xff]
        %v1486 = vld [vmem:[%s15 + $0xb0] sm:$0xff]
        %v1487 = vld [vmem:[%s15 + $0xb8] sm:$0xff]
        %v1488 = vld [vmem:[%s15 + $0xc0] sm:$0xff]
        %v1489 = vld [vmem:[%s15 + $0xc8] sm:$0xff]
        %v1490 = vld [vmem:[%s15 + $0xd0] sm:$0xff]
        %v1491 = vld [vmem:[%s15 + $0xd8] sm:$0xff]
        %v1492 = vld [vmem:[%s15 + $0xe0] sm:$0xff]
        %v1493 = vld [vmem:[%s15 + $0xe8] sm:$0xff]
        %v1494 = vld [vmem:[%s15 + $0xf0] sm:$0xff]
        %v1495 = vld [vmem:[%s15 + $0xf8] sm:$0xff]
        %v1496 = vld [vmem:[%s15 + $0x100] sm:$0xff]
        %v1497 = vld [vmem:[%s15 + $0x108] sm:$0xff]
        %v1498 = vld [vmem:[%s15 + $0x110] sm:$0xff]
        %v1499 = vld [vmem:[%s15 + $0x118] sm:$0xff]
        %v1500 = vld [vmem:[%s15 + $0x120] sm:$0xf]
        %v1501 = vld [vmem:[%s15 + $0x128] sm:$0xf]
        %v1502 = vld [vmem:[%s15 + $0x130] sm:$0xf]
        %v1503 = vld [vmem:[%s16] sm:$0x7]
        %v1505 = vperm.slane %v1503, 0
        %v1506 = vperm.slane %v1503, 1
        %v1507 = vperm.slane %v1503, 2
        %v1512 = vsel %vm1421, %v1463, 0
        %v1515 = vsel %vm1425, %v1500, 0
        %v1518 = vsel %vm1425, %v1501, 0
        %v1521 = vsel %vm1425, %v1502, 0
        %1523 = vmatpush.msra.mxu0 0.0
        %1524 = vmatpush.msra.mxu0 0.0
        %1525 = vmatpush.msra.mxu0 0.0
        %1526 = vmatpush.msra.mxu0 %v1515
        %1527 = vmatpush.msra.mxu0 %v1497
        %1528 = vmatpush.msra.mxu0 %v1494
        %1529 = vmatpush.msra.mxu0 %v1491
        %1530 = vmatpush.msra.mxu0 %v1488
        %1531 = vmatpush.msra.mxu0 %v1485
        %1532 = vmatpush.msra.mxu0 %v1482
        %1533 = vmatpush.msra.mxu0 %v1479
        %1534 = vmatpush.msra.mxu0 %v1476
        %1535 = vmatpush.msra.mxu0 %v1473
        %1536 = vmatpush.msra.mxu0 %v1470
        %1537 = vmatpush.msra.mxu0 %v1467
        %1538 = vmatpush.msra.mxu0 %v1464
        %1539 = vmatmul.f32.gmra.mxu0 %v1512
        %v1540 = vpop.f32.mrf.mxu0
        %v1541 = vadd.f32 %v1505, %v1540
        %1542 = vdwg.mxu0
        %1543 = vmatpush.msra.mxu0 0.0
        %1544 = vmatpush.msra.mxu0 0.0
        %1545 = vmatpush.msra.mxu0 0.0
        %1546 = vmatpush.msra.mxu0 %v1518
        %1547 = vmatpush.msra.mxu0 %v1498
        %1548 = vmatpush.msra.mxu0 %v1495
        %1549 = vmatpush.msra.mxu0 %v1492
        %1550 = vmatpush.msra.mxu0 %v1489
        %1551 = vmatpush.msra.mxu0 %v1486
        %1552 = vmatpush.msra.mxu0 %v1483
        %1553 = vmatpush.msra.mxu0 %v1480
        %1554 = vmatpush.msra.mxu0 %v1477
        %1555 = vmatpush.msra.mxu0 %v1474
        %1556 = vmatpush.msra.mxu0 %v1471
        %1557 = vmatpush.msra.mxu0 %v1468
        %1558 = vmatpush.msra.mxu0 %v1465
        %1559 = vmatmul.f32.gmra.mxu0 %v1512
        %v1560 = vpop.f32.mrf.mxu0
        %v1561 = vadd.f32 %v1506, %v1560
        %1562 = vdwg.mxu0
        %1563 = vmatpush.msra.mxu0 0.0
        %1564 = vmatpush.msra.mxu0 0.0
        %1565 = vmatpush.msra.mxu0 0.0
        %1566 = vmatpush.msra.mxu0 %v1521
        %1567 = vmatpush.msra.mxu0 %v1499
        %1568 = vmatpush.msra.mxu0 %v1496
        %1569 = vmatpush.msra.mxu0 %v1493
        %1570 = vmatpush.msra.mxu0 %v1490
        %1571 = vmatpush.msra.mxu0 %v1487
        %1572 = vmatpush.msra.mxu0 %v1484
        %1573 = vmatpush.msra.mxu0 %v1481
        %1574 = vmatpush.msra.mxu0 %v1478
        %1575 = vmatpush.msra.mxu0 %v1475
        %1576 = vmatpush.msra.mxu0 %v1472
        %1577 = vmatpush.msra.mxu0 %v1469
        %1578 = vmatpush.msra.mxu0 %v1466
        %1579 = vmatmul.f32.gmra.mxu0 %v1512
        %v1580 = vpop.f32.mrf.mxu0
        %v1581 = vadd.f32 %v1507, %v1580
        %1582 = vdwg.mxu0
        %v1583 = vpack.c.bf16 %v1561, %v1541
        %v1584 = vpack.c.bf16 %v1581, %v1581
        %1585 = vst [vmem:[%s21] sm:$0xff] %v1583
        %vm1586 = vcmask 355328
        %1587 = vst.msk [vmem:[%s21 + $0x8] sm:$0xf] %vm1586, %v1584
      $region96: #{model_forward.2} parent=87 // pred_fallthru
        _
      // Predicated region
      $region97: #{model_forward.2} parent=87 // pred_check
        %p1588 = pneg %p413
      $region98: #{model_forward.2} parent=87 // pred_check_branch
        %1590 = sbr.rel (%p1588) target = $region100
      $region99: #{model_forward.2} parent=87 // pred_region
        _
      $region100: #{model_forward.2} parent=87 // pred_fallthru
        _
      // Predicated region
      $region101: #{model_forward.2} parent=87 // pred_check
        %p1591 = pneg %p434
      $region102: #{model_forward.2} parent=87 // pred_check_branch
        %1593 = sbr.rel (%p1591) target = $region104
      $region103: #{model_forward.2} parent=87 // pred_region
        _
      $region104: #{model_forward.2} parent=87 // pred_fallthru
        _
      // Predicated region
      $region105: #{model_forward.2} parent=87 // pred_check
        %p1594 = pneg %p455
      $region106: #{model_forward.2} parent=87 // pred_check_branch
        %1596 = sbr.rel (%p1594) target = $region108
      $region107: #{model_forward.2} parent=87 // pred_region
        _
      $region108: #{model_forward.2} parent=87 // pred_fallthru
        _
      // Predicated region
      $region109: #{model_forward.2} parent=87 // pred_check
        %p1597 = pneg %p476
      $region110: #{model_forward.2} parent=87 // pred_check_branch
        %1599 = sbr.rel (%p1597) target = $region112
      $region111: #{model_forward.2} parent=87 // pred_region
        _
      $region112: #{model_forward.2} parent=87 // pred_fallthru
        _
      // Predicated region
      $region113: #{model_forward.2} parent=87 // pred_check
        %p1600 = pneg %p497
      $region114: #{model_forward.2} parent=87 // pred_check_branch
        %1602 = sbr.rel (%p1600) target = $region116
      $region115: #{model_forward.2} parent=87 // pred_region
        _
      $region116: #{model_forward.2} parent=87 // pred_fallthru
        _
      // Predicated region
      $region117: #{model_forward.2} parent=87 // pred_check
        %p1603 = pneg %p413
      $region118: #{model_forward.2} parent=87 // pred_check_branch
        %1605 = sbr.rel (%p1603) target = $region120
      $region119: #{model_forward.2} parent=87 // pred_region
        _
      $region120: #{model_forward.2} parent=87 // pred_fallthru
        _
      // Predicated region
      $region121: #{model_forward.2} parent=87 // pred_check
        %p1606 = pneg %p434
      $region122: #{model_forward.2} parent=87 // pred_check_branch
        %1608 = sbr.rel (%p1606) target = $region124
      $region123: #{model_forward.2} parent=87 // pred_region
        _
      $region124: #{model_forward.2} parent=87 // pred_fallthru
        _
      // Predicated region
      $region125: #{model_forward.2} parent=87 // pred_check
        %p1609 = pneg %p455
      $region126: #{model_forward.2} parent=87 // pred_check_branch
        %1611 = sbr.rel (%p1609) target = $region128
      $region127: #{model_forward.2} parent=87 // pred_region
        _
      $region128: #{model_forward.2} parent=87 // pred_fallthru
        _
      // Predicated region
      $region129: #{model_forward.2} parent=87 // pred_check
        %p1612 = pneg %p476
      $region130: #{model_forward.2} parent=87 // pred_check_branch
        %1614 = sbr.rel (%p1612) target = $region132
      $region131: #{model_forward.2} parent=87 // pred_region
        _
      $region132: #{model_forward.2} parent=87 // pred_fallthru
        _
      // Predicated region
      $region133: #{model_forward.2} parent=87 // pred_check
        %p1615 = pneg %p497
      $region134: #{model_forward.2} parent=87 // pred_check_branch
        %1617 = sbr.rel (%p1615) target = $region136
      $region135: #{model_forward.2} parent=87 // pred_region
        _
      $region136: #{model_forward.2} parent=87 // pred_fallthru
        _
    $region88: #{model_forward.2} parent=5 // pred_fallthru
      _
    %p1618 = scmp.le.s32.totalorder 2, %s28
    // Predicated region
    $region137: #{model_forward.2} parent=5 // pred_check
      %p1619 = pneg %p1618
    $region138: #{model_forward.2} parent=5 // pred_check_branch
      %1621 = sbr.rel (%p1619) target = $region140
    $region139: #{model_forward.2} parent=5 // pred_region
      %s1622 = ssub.s32 %s28, 2
    $region140: #{model_forward.2} parent=5 // pred_fallthru
      _
  $region6: #{model_forward.2} parent=0 // loop_footer
    %s32 = sadd.s32 1, %s28
  $region7: #{model_forward.2} parent=0 // loop_footer_branch
    %27 = sbr.rel target = $region3
  $region8: #{model_forward.2} parent=0 // loop_exit
    _

</llo_original>
